<compile_context>
chip_gen: v5e
topology: v5e:2x2
jax: 0.10.0
libtpu: 0.0.40
codegen_flags: <defaults>
</compile_context>

<pallas_src>
import functools

import jax
import jax.numpy as jnp
from jax import lax
from jax.experimental import pallas as pl
from jax.experimental.pallas import tpu as pltpu


def _sigmoid(x):
    # sigmoid(x) == 0.5 * tanh(x/2) + 0.5 : one EUP tanh + cheap VPU mul/add.
    # Avoids any dependence on how lax.logistic lowers (an exp + f32 divide
    # would put a VALU divide sequence on the serial recurrence chain).
    return 0.5 * jnp.tanh(0.5 * x) + 0.5


# ----------------------------------------------------------------------------
# Fused Pallas kernel: num_layers LSTM layers + final Linear, fully in VMEM.
# ----------------------------------------------------------------------------
def _make_stock_lstm_kernel(num_layers, seq_len, batch):
    """Fused kernel for static (num_layers, seq_len, batch).

    Kernel ref layout (all whole-array VMEM refs, no grid):
      refs[0]                     : x_stack  (S*B, I)  time-major stacked input
      refs[1 + 3l .. 3 + 3l]      : W_ih^T (In,4H), W_hh^T (H,4H), bias (1,4H)
      refs[1 + 3L], refs[2 + 3L]  : fc W^T (H, O), fc bias (1, O)
      refs[3 + 3L]                : out      (B, O)
    """

    def kernel(*refs):
        x_ref = refs[0]
        layer_refs = [refs[1 + 3 * l: 4 + 3 * l] for l in range(num_layers)]
        wfc_ref = refs[1 + 3 * num_layers]
        bfc_ref = refs[2 + 3 * num_layers]
        out_ref = refs[3 + 3 * num_layers]

        S, B = seq_len, batch
        H = layer_refs[0][1].shape[0]          # W_hh^T is (H, 4H)

        # Time-major stacked layer input: rows [t*B:(t+1)*B] hold timestep t.
        x_stack = x_ref[...]                   # (S*B, In)

        outs = []
        for li, (w_ih_ref, w_hh_ref, b_ref) in enumerate(layer_refs):
            w_ih = w_ih_ref[...]               # (In, 4H)
            w_hh = w_hh_ref[...]               # (H, 4H)
            b = b_ref[...]                     # (1, 4H)
            in_feat = w_ih.shape[0]

            # ---- batched input projection, entirely off the recurrent chain.
            if in_feat == 1:
                # Degenerate contraction -> one broadcasted VPU multiply over
                # the whole (S*B, 4H) slab.
                pre_stack = x_stack * w_ih + b
            else:
                # One (S*B, H) @ (H, 4H) MXU matmul instead of S small dots.
                pre_stack = jnp.dot(
                    x_stack, w_ih, preferred_element_type=jnp.float32) + b

            # ---- per-gate lane splits, done ONCE per layer (loop-invariant),
            #      so nothing on the recurrence needs cross-lane extraction.
            #      PyTorch gate order: [i, f, g, o].
            pre_g = [pre_stack[:, g * H:(g + 1) * H] for g in range(4)]
            w_hh_g = [w_hh[:, g * H:(g + 1) * H] for g in range(4)]

            h = jnp.zeros((B, H), jnp.float32)
            c = jnp.zeros((B, H), jnp.float32)
            outs = []
            for t in range(S):
                r0 = t * B
                # Only these four small dots sit on the serial recurrence; each
                # gate result is already aligned to lanes 0..H-1 with c and h.
                i_g = _sigmoid(pre_g[0][r0:r0 + B, :] + jnp.dot(
                    h, w_hh_g[0], preferred_element_type=jnp.float32))
                f_g = _sigmoid(pre_g[1][r0:r0 + B, :] + jnp.dot(
                    h, w_hh_g[1], preferred_element_type=jnp.float32))
                g_g = jnp.tanh(pre_g[2][r0:r0 + B, :] + jnp.dot(
                    h, w_hh_g[2], preferred_element_type=jnp.float32))
                o_g = _sigmoid(pre_g[3][r0:r0 + B, :] + jnp.dot(
                    h, w_hh_g[3], preferred_element_type=jnp.float32))
                c = f_g * c + i_g * g_g
                h = o_g * jnp.tanh(c)
                outs.append(h)

            if li + 1 < num_layers:
                # Re-stack time-major for the next layer's batched projection.
                x_stack = jnp.concatenate(outs, axis=0)   # (S*B, H)

        # Final Linear on the last timestep of the last layer (== out[:, -1, :]).
        h_last = outs[-1]                     # (B, H)
        out_ref[...] = (
            jnp.dot(h_last, wfc_ref[...], preferred_element_type=jnp.float32)
            + bfc_ref[...]
        )

    return kernel


# ----------------------------------------------------------------------------
# Wrapper
# ----------------------------------------------------------------------------
def stock_lstm_forward(x_bsi, params):
    """Forward pass matching StockLSTM.forward (eval mode).

    x_bsi: (batch, seq, input_size) float32 (batch_first, like PyTorch)
    returns (batch, output_size)
    """
    x = x_bsi.astype(jnp.float32)
    B, S, I = x.shape
    layers = params["lstm_layers"]
    out_size = params["fc_wT"].shape[1]

    # Time-major stacking so per-timestep access inside the kernel is a cheap
    # sublane (row) slice: rows [t*B:(t+1)*B] hold x[:, t, :].
    x_stack = jnp.transpose(x, (1, 0, 2)).reshape(S * B, I)

    args = [x_stack]
    for layer in layers:
        args += [layer["w_ihT"], layer["w_hhT"], layer["bias"]]
    args += [params["fc_wT"], params["fc_b"]]

    # Everything (<~100 KB) pinned whole-array in VMEM; no tiling needed on
    # any generation (fits easily even in v7x's 64 MiB per-TC VMEM).
    in_specs = [pl.BlockSpec(memory_space=pltpu.MemorySpace.VMEM)
                for _ in args]
    out_specs = pl.BlockSpec(memory_space=pltpu.MemorySpace.VMEM)

    return pl.pallas_call(
        _make_stock_lstm_kernel(len(layers), S, B),
        out_shape=jax.ShapeDtypeStruct((B, out_size), jnp.float32),
        in_specs=in_specs,
        out_specs=out_specs,
    )(*args)


# ----------------------------------------------------------------------------
# Deterministic parameter construction (PyTorch-style uniform(-1/sqrt(H), 1/sqrt(H)))
# ----------------------------------------------------------------------------
def make_params(key, input_size, hidden_size, num_layers, output_size):
    k = 1.0 / jnp.sqrt(jnp.float32(hidden_size))
    layers = []
    for l in range(num_layers):
        in_feat = input_size if l == 0 else hidden_size
        key, k1, k2, k3, k4 = jax.random.split(key, 5)
        w_ih = jax.random.uniform(k1, (4 * hidden_size, in_feat),
                                  minval=-k, maxval=k, dtype=jnp.float32)
        w_hh = jax.random.uniform(k2, (4 * hidden_size, hidden_size),
                                  minval=-k, maxval=k, dtype=jnp.float32)
        b_ih = jax.random.uniform(k3, (4 * hidden_size,),
                                  minval=-k, maxval=k, dtype=jnp.float32)
        b_hh = jax.random.uniform(k4, (4 * hidden_size,),
                                  minval=-k, maxval=k, dtype=jnp.float32)
        layers.append({
            "w_ihT": w_ih.T,                              # (in_feat, 4H)
            "w_hhT": w_hh.T,                              # (H, 4H)
            "bias": (b_ih + b_hh).reshape(1, 4 * hidden_size),
        })
    key, k5, k6 = jax.random.split(key, 3)
    kf = 1.0 / jnp.sqrt(jnp.float32(hidden_size))
    fc_w = jax.random.uniform(k5, (output_size, hidden_size),
                              minval=-kf, maxval=kf, dtype=jnp.float32)
    fc_b = jax.random.uniform(k6, (output_size,),
                              minval=-kf, maxval=kf, dtype=jnp.float32)
    return {
        "lstm_layers": layers,
        "fc_wT": fc_w.T,                 # (H, O)
        "fc_b": fc_b.reshape(1, output_size),
    }


# ----------------------------------------------------------------------------
# Pure-JAX reference (for correctness check)
# ----------------------------------------------------------------------------
def stock_lstm_reference(x_bsi, params, hidden_size):
    h = jnp.transpose(x_bsi, (1, 0, 2)).astype(jnp.float32)  # (S, B, I)
    B = h.shape[1]
    for layer in params["lstm_layers"]:
        w_ihT, w_hhT, bias = layer["w_ihT"], layer["w_hhT"], layer["bias"]

        def step(carry, x_t):
            h_prev, c_prev = carry
            gates = x_t @ w_ihT + h_prev @ w_hhT + bias
            H = hidden_size
            i = jax.nn.sigmoid(gates[:, 0 * H:1 * H])
            f = jax.nn.sigmoid(gates[:, 1 * H:2 * H])
            g = jnp.tanh(gates[:, 2 * H:3 * H])
            o = jax.nn.sigmoid(gates[:, 3 * H:4 * H])
            c = f * c_prev + i * g
            hh = o * jnp.tanh(c)
            return (hh, c), hh

        init = (jnp.zeros((B, hidden_size), jnp.float32),
                jnp.zeros((B, hidden_size), jnp.float32))
        _, h = lax.scan(step, init, h)
    return h[-1] @ params["fc_wT"] + params["fc_b"]


# ----------------------------------------------------------------------------
# Main
# ----------------------------------------------------------------------------
if __name__ == "__main__":
    INPUT_SIZE = 1
    HIDDEN_SIZE = 32
    NUM_LAYERS = 3
    OUTPUT_SIZE = 1
    BATCH = 2
    SEQ = 8

    key = jax.random.PRNGKey(0)
    key, pkey, xkey = jax.random.split(key, 3)

    params = make_params(pkey, INPUT_SIZE, HIDDEN_SIZE, NUM_LAYERS, OUTPUT_SIZE)
    x = jax.random.normal(xkey, (BATCH, SEQ, INPUT_SIZE), dtype=jnp.float32)

    fwd = jax.jit(functools.partial(stock_lstm_forward, params=params))
    out = jax.block_until_ready(fwd(x))

    ref = stock_lstm_reference(x, params, HIDDEN_SIZE)
    assert out.shape == (BATCH, OUTPUT_SIZE), out.shape
    assert jnp.allclose(out, ref, atol=1e-3, rtol=1e-3), (out, ref)

    print("KERNEL_OK")
</pallas_src>

<mosaic_0001>
module attributes {stable_mosaic.version = 11 : i64} {
  func.func @kernel(%arg0: memref<16x1xf32, #tpu.memory_space<vmem>>, %arg1: memref<1x128xf32, #tpu.memory_space<vmem>>, %arg2: memref<32x128xf32, #tpu.memory_space<vmem>>, %arg3: memref<1x128xf32, #tpu.memory_space<vmem>>, %arg4: memref<32x128xf32, #tpu.memory_space<vmem>>, %arg5: memref<32x128xf32, #tpu.memory_space<vmem>>, %arg6: memref<1x128xf32, #tpu.memory_space<vmem>>, %arg7: memref<32x128xf32, #tpu.memory_space<vmem>>, %arg8: memref<32x128xf32, #tpu.memory_space<vmem>>, %arg9: memref<1x128xf32, #tpu.memory_space<vmem>>, %arg10: memref<32x1xf32, #tpu.memory_space<vmem>>, %arg11: memref<1x1xf32, #tpu.memory_space<vmem>>, %arg12: memref<2x1xf32, #tpu.memory_space<vmem>>) attributes {dimension_semantics = [], scalar_prefetch = 0 : i64, scratch_operands = 0 : i64, tpu.core_type = #tpu.core_type<tc>} {
    %c0 = arith.constant 0 : index
    %c0_0 = arith.constant 0 : index
    %0 = vector.load %arg0[%c0, %c0_0] : memref<16x1xf32, #tpu.memory_space<vmem>>, vector<16x1xf32>
    %c0_1 = arith.constant 0 : index
    %c0_2 = arith.constant 0 : index
    %1 = vector.load %arg1[%c0_1, %c0_2] : memref<1x128xf32, #tpu.memory_space<vmem>>, vector<1x128xf32>
    %c0_3 = arith.constant 0 : index
    %c0_4 = arith.constant 0 : index
    %2 = vector.load %arg2[%c0_3, %c0_4] : memref<32x128xf32, #tpu.memory_space<vmem>>, vector<32x128xf32>
    %c0_5 = arith.constant 0 : index
    %c0_6 = arith.constant 0 : index
    %3 = vector.load %arg3[%c0_5, %c0_6] : memref<1x128xf32, #tpu.memory_space<vmem>>, vector<1x128xf32>
    %4 = vector.broadcast %0 : vector<16x1xf32> to vector<16x128xf32>
    %5 = vector.broadcast %1 : vector<1x128xf32> to vector<16x128xf32>
    %6 = arith.mulf %4, %5 : vector<16x128xf32>
    %7 = vector.broadcast %3 : vector<1x128xf32> to vector<16x128xf32>
    %8 = arith.addf %6, %7 : vector<16x128xf32>
    %9 = vector.extract_strided_slice %8 {offsets = [0, 0], sizes = [16, 32], strides = [1, 1]} : vector<16x128xf32> to vector<16x32xf32>
    %10 = vector.extract_strided_slice %8 {offsets = [0, 32], sizes = [16, 32], strides = [1, 1]} : vector<16x128xf32> to vector<16x32xf32>
    %11 = vector.extract_strided_slice %8 {offsets = [0, 64], sizes = [16, 32], strides = [1, 1]} : vector<16x128xf32> to vector<16x32xf32>
    %12 = vector.extract_strided_slice %8 {offsets = [0, 96], sizes = [16, 32], strides = [1, 1]} : vector<16x128xf32> to vector<16x32xf32>
    %13 = vector.extract_strided_slice %2 {offsets = [0, 0], sizes = [32, 32], strides = [1, 1]} : vector<32x128xf32> to vector<32x32xf32>
    %14 = vector.extract_strided_slice %2 {offsets = [0, 32], sizes = [32, 32], strides = [1, 1]} : vector<32x128xf32> to vector<32x32xf32>
    %15 = vector.extract_strided_slice %2 {offsets = [0, 64], sizes = [32, 32], strides = [1, 1]} : vector<32x128xf32> to vector<32x32xf32>
    %16 = vector.extract_strided_slice %2 {offsets = [0, 96], sizes = [32, 32], strides = [1, 1]} : vector<32x128xf32> to vector<32x32xf32>
    %cst = arith.constant 0.000000e+00 : f32
    %17 = vector.broadcast %cst : f32 to vector<2x32xf32>
    %cst_7 = arith.constant 0.000000e+00 : f32
    %18 = vector.broadcast %cst_7 : f32 to vector<2x32xf32>
    %19 = vector.extract_strided_slice %9 {offsets = [0, 0], sizes = [2, 32], strides = [1, 1]} : vector<16x32xf32> to vector<2x32xf32>
    %cst_8 = arith.constant dense<0.000000e+00> : vector<2x32xf32>
    %20 = tpu.matmul %17, %13, %cst_8 {dimension_numbers = #tpu.dot_dimension_numbers<[1], [0], [0], [1], [0, 0, 1, 1], [], []>} : vector<2x32xf32>, vector<32x32xf32>, vector<2x32xf32> -> vector<2x32xf32>
    %21 = arith.addf %19, %20 : vector<2x32xf32>
    %cst_9 = arith.constant 5.000000e-01 : f32
    %22 = vector.broadcast %cst_9 : f32 to vector<2x32xf32>
    %23 = arith.mulf %22, %21 : vector<2x32xf32>
    %24 = math.tanh %23 : vector<2x32xf32>
    %cst_10 = arith.constant 5.000000e-01 : f32
    %25 = vector.broadcast %cst_10 : f32 to vector<2x32xf32>
    %26 = arith.mulf %25, %24 : vector<2x32xf32>
    %cst_11 = arith.constant 5.000000e-01 : f32
    %27 = vector.broadcast %cst_11 : f32 to vector<2x32xf32>
    %28 = arith.addf %26, %27 : vector<2x32xf32>
    %29 = vector.extract_strided_slice %10 {offsets = [0, 0], sizes = [2, 32], strides = [1, 1]} : vector<16x32xf32> to vector<2x32xf32>
    %cst_12 = arith.constant dense<0.000000e+00> : vector<2x32xf32>
    %30 = tpu.matmul %17, %14, %cst_12 {dimension_numbers = #tpu.dot_dimension_numbers<[1], [0], [0], [1], [0, 0, 1, 1], [], []>} : vector<2x32xf32>, vector<32x32xf32>, vector<2x32xf32> -> vector<2x32xf32>
    %31 = arith.addf %29, %30 : vector<2x32xf32>
    %cst_13 = arith.constant 5.000000e-01 : f32
    %32 = vector.broadcast %cst_13 : f32 to vector<2x32xf32>
    %33 = arith.mulf %32, %31 : vector<2x32xf32>
    %34 = math.tanh %33 : vector<2x32xf32>
    %cst_14 = arith.constant 5.000000e-01 : f32
    %35 = vector.broadcast %cst_14 : f32 to vector<2x32xf32>
    %36 = arith.mulf %35, %34 : vector<2x32xf32>
    %cst_15 = arith.constant 5.000000e-01 : f32
    %37 = vector.broadcast %cst_15 : f32 to vector<2x32xf32>
    %38 = arith.addf %36, %37 : vector<2x32xf32>
    %39 = vector.extract_strided_slice %11 {offsets = [0, 0], sizes = [2, 32], strides = [1, 1]} : vector<16x32xf32> to vector<2x32xf32>
    %cst_16 = arith.constant dense<0.000000e+00> : vector<2x32xf32>
    %40 = tpu.matmul %17, %15, %cst_16 {dimension_numbers = #tpu.dot_dimension_numbers<[1], [0], [0], [1], [0, 0, 1, 1], [], []>} : vector<2x32xf32>, vector<32x32xf32>, vector<2x32xf32> -> vector<2x32xf32>
    %41 = arith.addf %39, %40 : vector<2x32xf32>
    %42 = math.tanh %41 : vector<2x32xf32>
    %43 = vector.extract_strided_slice %12 {offsets = [0, 0], sizes = [2, 32], strides = [1, 1]} : vector<16x32xf32> to vector<2x32xf32>
    %cst_17 = arith.constant dense<0.000000e+00> : vector<2x32xf32>
    %44 = tpu.matmul %17, %16, %cst_17 {dimension_numbers = #tpu.dot_dimension_numbers<[1], [0], [0], [1], [0, 0, 1, 1], [], []>} : vector<2x32xf32>, vector<32x32xf32>, vector<2x32xf32> -> vector<2x32xf32>
    %45 = arith.addf %43, %44 : vector<2x32xf32>
    %cst_18 = arith.constant 5.000000e-01 : f32
    %46 = vector.broadcast %cst_18 : f32 to vector<2x32xf32>
    %47 = arith.mulf %46, %45 : vector<2x32xf32>
    %48 = math.tanh %47 : vector<2x32xf32>
    %cst_19 = arith.constant 5.000000e-01 : f32
    %49 = vector.broadcast %cst_19 : f32 to vector<2x32xf32>
    %50 = arith.mulf %49, %48 : vector<2x32xf32>
    %cst_20 = arith.constant 5.000000e-01 : f32
    %51 = vector.broadcast %cst_20 : f32 to vector<2x32xf32>
    %52 = arith.addf %50, %51 : vector<2x32xf32>
    %53 = arith.mulf %38, %18 : vector<2x32xf32>
    %54 = arith.mulf %28, %42 : vector<2x32xf32>
    %55 = arith.addf %53, %54 : vector<2x32xf32>
    %56 = math.tanh %55 : vector<2x32xf32>
    %57 = arith.mulf %52, %56 : vector<2x32xf32>
    %58 = vector.extract_strided_slice %9 {offsets = [2, 0], sizes = [2, 32], strides = [1, 1]} : vector<16x32xf32> to vector<2x32xf32>
    %cst_21 = arith.constant dense<0.000000e+00> : vector<2x32xf32>
    %59 = tpu.matmul %57, %13, %cst_21 {dimension_numbers = #tpu.dot_dimension_numbers<[1], [0], [0], [1], [0, 0, 1, 1], [], []>} : vector<2x32xf32>, vector<32x32xf32>, vector<2x32xf32> -> vector<2x32xf32>
    %60 = arith.addf %58, %59 : vector<2x32xf32>
    %cst_22 = arith.constant 5.000000e-01 : f32
    %61 = vector.broadcast %cst_22 : f32 to vector<2x32xf32>
    %62 = arith.mulf %61, %60 : vector<2x32xf32>
    %63 = math.tanh %62 : vector<2x32xf32>
    %cst_23 = arith.constant 5.000000e-01 : f32
    %64 = vector.broadcast %cst_23 : f32 to vector<2x32xf32>
    %65 = arith.mulf %64, %63 : vector<2x32xf32>
    %cst_24 = arith.constant 5.000000e-01 : f32
    %66 = vector.broadcast %cst_24 : f32 to vector<2x32xf32>
    %67 = arith.addf %65, %66 : vector<2x32xf32>
    %68 = vector.extract_strided_slice %10 {offsets = [2, 0], sizes = [2, 32], strides = [1, 1]} : vector<16x32xf32> to vector<2x32xf32>
    %cst_25 = arith.constant dense<0.000000e+00> : vector<2x32xf32>
    %69 = tpu.matmul %57, %14, %cst_25 {dimension_numbers = #tpu.dot_dimension_numbers<[1], [0], [0], [1], [0, 0, 1, 1], [], []>} : vector<2x32xf32>, vector<32x32xf32>, vector<2x32xf32> -> vector<2x32xf32>
    %70 = arith.addf %68, %69 : vector<2x32xf32>
    %cst_26 = arith.constant 5.000000e-01 : f32
    %71 = vector.broadcast %cst_26 : f32 to vector<2x32xf32>
    %72 = arith.mulf %71, %70 : vector<2x32xf32>
    %73 = math.tanh %72 : vector<2x32xf32>
    %cst_27 = arith.constant 5.000000e-01 : f32
    %74 = vector.broadcast %cst_27 : f32 to vector<2x32xf32>
    %75 = arith.mulf %74, %73 : vector<2x32xf32>
    %cst_28 = arith.constant 5.000000e-01 : f32
    %76 = vector.broadcast %cst_28 : f32 to vector<2x32xf32>
    %77 = arith.addf %75, %76 : vector<2x32xf32>
    %78 = vector.extract_strided_slice %11 {offsets = [2, 0], sizes = [2, 32], strides = [1, 1]} : vector<16x32xf32> to vector<2x32xf32>
    %cst_29 = arith.constant dense<0.000000e+00> : vector<2x32xf32>
    %79 = tpu.matmul %57, %15, %cst_29 {dimension_numbers = #tpu.dot_dimension_numbers<[1], [0], [0], [1], [0, 0, 1, 1], [], []>} : vector<2x32xf32>, vector<32x32xf32>, vector<2x32xf32> -> vector<2x32xf32>
    %80 = arith.addf %78, %79 : vector<2x32xf32>
    %81 = math.tanh %80 : vector<2x32xf32>
    %82 = vector.extract_strided_slice %12 {offsets = [2, 0], sizes = [2, 32], strides = [1, 1]} : vector<16x32xf32> to vector<2x32xf32>
    %cst_30 = arith.constant dense<0.000000e+00> : vector<2x32xf32>
    %83 = tpu.matmul %57, %16, %cst_30 {dimension_numbers = #tpu.dot_dimension_numbers<[1], [0], [0], [1], [0, 0, 1, 1], [], []>} : vector<2x32xf32>, vector<32x32xf32>, vector<2x32xf32> -> vector<2x32xf32>
    %84 = arith.addf %82, %83 : vector<2x32xf32>
    %cst_31 = arith.constant 5.000000e-01 : f32
    %85 = vector.broadcast %cst_31 : f32 to vector<2x32xf32>
    %86 = arith.mulf %85, %84 : vector<2x32xf32>
    %87 = math.tanh %86 : vector<2x32xf32>
    %cst_32 = arith.constant 5.000000e-01 : f32
    %88 = vector.broadcast %cst_32 : f32 to vector<2x32xf32>
    %89 = arith.mulf %88, %87 : vector<2x32xf32>
    %cst_33 = arith.constant 5.000000e-01 : f32
    %90 = vector.broadcast %cst_33 : f32 to vector<2x32xf32>
    %91 = arith.addf %89, %90 : vector<2x32xf32>
    %92 = arith.mulf %77, %55 : vector<2x32xf32>
    %93 = arith.mulf %67, %81 : vector<2x32xf32>
    %94 = arith.addf %92, %93 : vector<2x32xf32>
    %95 = math.tanh %94 : vector<2x32xf32>
    %96 = arith.mulf %91, %95 : vector<2x32xf32>
    %97 = vector.extract_strided_slice %9 {offsets = [4, 0], sizes = [2, 32], strides = [1, 1]} : vector<16x32xf32> to vector<2x32xf32>
    %cst_34 = arith.constant dense<0.000000e+00> : vector<2x32xf32>
    %98 = tpu.matmul %96, %13, %cst_34 {dimension_numbers = #tpu.dot_dimension_numbers<[1], [0], [0], [1], [0, 0, 1, 1], [], []>} : vector<2x32xf32>, vector<32x32xf32>, vector<2x32xf32> -> vector<2x32xf32>
    %99 = arith.addf %97, %98 : vector<2x32xf32>
    %cst_35 = arith.constant 5.000000e-01 : f32
    %100 = vector.broadcast %cst_35 : f32 to vector<2x32xf32>
    %101 = arith.mulf %100, %99 : vector<2x32xf32>
    %102 = math.tanh %101 : vector<2x32xf32>
    %cst_36 = arith.constant 5.000000e-01 : f32
    %103 = vector.broadcast %cst_36 : f32 to vector<2x32xf32>
    %104 = arith.mulf %103, %102 : vector<2x32xf32>
    %cst_37 = arith.constant 5.000000e-01 : f32
    %105 = vector.broadcast %cst_37 : f32 to vector<2x32xf32>
    %106 = arith.addf %104, %105 : vector<2x32xf32>
    %107 = vector.extract_strided_slice %10 {offsets = [4, 0], sizes = [2, 32], strides = [1, 1]} : vector<16x32xf32> to vector<2x32xf32>
    %cst_38 = arith.constant dense<0.000000e+00> : vector<2x32xf32>
    %108 = tpu.matmul %96, %14, %cst_38 {dimension_numbers = #tpu.dot_dimension_numbers<[1], [0], [0], [1], [0, 0, 1, 1], [], []>} : vector<2x32xf32>, vector<32x32xf32>, vector<2x32xf32> -> vector<2x32xf32>
    %109 = arith.addf %107, %108 : vector<2x32xf32>
    %cst_39 = arith.constant 5.000000e-01 : f32
    %110 = vector.broadcast %cst_39 : f32 to vector<2x32xf32>
    %111 = arith.mulf %110, %109 : vector<2x32xf32>
    %112 = math.tanh %111 : vector<2x32xf32>
    %cst_40 = arith.constant 5.000000e-01 : f32
    %113 = vector.broadcast %cst_40 : f32 to vector<2x32xf32>
    %114 = arith.mulf %113, %112 : vector<2x32xf32>
    %cst_41 = arith.constant 5.000000e-01 : f32
    %115 = vector.broadcast %cst_41 : f32 to vector<2x32xf32>
    %116 = arith.addf %114, %115 : vector<2x32xf32>
    %117 = vector.extract_strided_slice %11 {offsets = [4, 0], sizes = [2, 32], strides = [1, 1]} : vector<16x32xf32> to vector<2x32xf32>
    %cst_42 = arith.constant dense<0.000000e+00> : vector<2x32xf32>
    %118 = tpu.matmul %96, %15, %cst_42 {dimension_numbers = #tpu.dot_dimension_numbers<[1], [0], [0], [1], [0, 0, 1, 1], [], []>} : vector<2x32xf32>, vector<32x32xf32>, vector<2x32xf32> -> vector<2x32xf32>
    %119 = arith.addf %117, %118 : vector<2x32xf32>
    %120 = math.tanh %119 : vector<2x32xf32>
    %121 = vector.extract_strided_slice %12 {offsets = [4, 0], sizes = [2, 32], strides = [1, 1]} : vector<16x32xf32> to vector<2x32xf32>
    %cst_43 = arith.constant dense<0.000000e+00> : vector<2x32xf32>
    %122 = tpu.matmul %96, %16, %cst_43 {dimension_numbers = #tpu.dot_dimension_numbers<[1], [0], [0], [1], [0, 0, 1, 1], [], []>} : vector<2x32xf32>, vector<32x32xf32>, vector<2x32xf32> -> vector<2x32xf32>
    %123 = arith.addf %121, %122 : vector<2x32xf32>
    %cst_44 = arith.constant 5.000000e-01 : f32
    %124 = vector.broadcast %cst_44 : f32 to vector<2x32xf32>
    %125 = arith.mulf %124, %123 : vector<2x32xf32>
    %126 = math.tanh %125 : vector<2x32xf32>
    %cst_45 = arith.constant 5.000000e-01 : f32
    %127 = vector.broadcast %cst_45 : f32 to vector<2x32xf32>
    %128 = arith.mulf %127, %126 : vector<2x32xf32>
    %cst_46 = arith.constant 5.000000e-01 : f32
    %129 = vector.broadcast %cst_46 : f32 to vector<2x32xf32>
    %130 = arith.addf %128, %129 : vector<2x32xf32>
    %131 = arith.mulf %116, %94 : vector<2x32xf32>
    %132 = arith.mulf %106, %120 : vector<2x32xf32>
    %133 = arith.addf %131, %132 : vector<2x32xf32>
    %134 = math.tanh %133 : vector<2x32xf32>
    %135 = arith.mulf %130, %134 : vector<2x32xf32>
    %136 = vector.extract_strided_slice %9 {offsets = [6, 0], sizes = [2, 32], strides = [1, 1]} : vector<16x32xf32> to vector<2x32xf32>
    %cst_47 = arith.constant dense<0.000000e+00> : vector<2x32xf32>
    %137 = tpu.matmul %135, %13, %cst_47 {dimension_numbers = #tpu.dot_dimension_numbers<[1], [0], [0], [1], [0, 0, 1, 1], [], []>} : vector<2x32xf32>, vector<32x32xf32>, vector<2x32xf32> -> vector<2x32xf32>
    %138 = arith.addf %136, %137 : vector<2x32xf32>
    %cst_48 = arith.constant 5.000000e-01 : f32
    %139 = vector.broadcast %cst_48 : f32 to vector<2x32xf32>
    %140 = arith.mulf %139, %138 : vector<2x32xf32>
    %141 = math.tanh %140 : vector<2x32xf32>
    %cst_49 = arith.constant 5.000000e-01 : f32
    %142 = vector.broadcast %cst_49 : f32 to vector<2x32xf32>
    %143 = arith.mulf %142, %141 : vector<2x32xf32>
    %cst_50 = arith.constant 5.000000e-01 : f32
    %144 = vector.broadcast %cst_50 : f32 to vector<2x32xf32>
    %145 = arith.addf %143, %144 : vector<2x32xf32>
    %146 = vector.extract_strided_slice %10 {offsets = [6, 0], sizes = [2, 32], strides = [1, 1]} : vector<16x32xf32> to vector<2x32xf32>
    %cst_51 = arith.constant dense<0.000000e+00> : vector<2x32xf32>
    %147 = tpu.matmul %135, %14, %cst_51 {dimension_numbers = #tpu.dot_dimension_numbers<[1], [0], [0], [1], [0, 0, 1, 1], [], []>} : vector<2x32xf32>, vector<32x32xf32>, vector<2x32xf32> -> vector<2x32xf32>
    %148 = arith.addf %146, %147 : vector<2x32xf32>
    %cst_52 = arith.constant 5.000000e-01 : f32
    %149 = vector.broadcast %cst_52 : f32 to vector<2x32xf32>
    %150 = arith.mulf %149, %148 : vector<2x32xf32>
    %151 = math.tanh %150 : vector<2x32xf32>
    %cst_53 = arith.constant 5.000000e-01 : f32
    %152 = vector.broadcast %cst_53 : f32 to vector<2x32xf32>
    %153 = arith.mulf %152, %151 : vector<2x32xf32>
    %cst_54 = arith.constant 5.000000e-01 : f32
    %154 = vector.broadcast %cst_54 : f32 to vector<2x32xf32>
    %155 = arith.addf %153, %154 : vector<2x32xf32>
    %156 = vector.extract_strided_slice %11 {offsets = [6, 0], sizes = [2, 32], strides = [1, 1]} : vector<16x32xf32> to vector<2x32xf32>
    %cst_55 = arith.constant dense<0.000000e+00> : vector<2x32xf32>
    %157 = tpu.matmul %135, %15, %cst_55 {dimension_numbers = #tpu.dot_dimension_numbers<[1], [0], [0], [1], [0, 0, 1, 1], [], []>} : vector<2x32xf32>, vector<32x32xf32>, vector<2x32xf32> -> vector<2x32xf32>
    %158 = arith.addf %156, %157 : vector<2x32xf32>
    %159 = math.tanh %158 : vector<2x32xf32>
    %160 = vector.extract_strided_slice %12 {offsets = [6, 0], sizes = [2, 32], strides = [1, 1]} : vector<16x32xf32> to vector<2x32xf32>
    %cst_56 = arith.constant dense<0.000000e+00> : vector<2x32xf32>
    %161 = tpu.matmul %135, %16, %cst_56 {dimension_numbers = #tpu.dot_dimension_numbers<[1], [0], [0], [1], [0, 0, 1, 1], [], []>} : vector<2x32xf32>, vector<32x32xf32>, vector<2x32xf32> -> vector<2x32xf32>
    %162 = arith.addf %160, %161 : vector<2x32xf32>
    %cst_57 = arith.constant 5.000000e-01 : f32
    %163 = vector.broadcast %cst_57 : f32 to vector<2x32xf32>
    %164 = arith.mulf %163, %162 : vector<2x32xf32>
    %165 = math.tanh %164 : vector<2x32xf32>
    %cst_58 = arith.constant 5.000000e-01 : f32
    %166 = vector.broadcast %cst_58 : f32 to vector<2x32xf32>
    %167 = arith.mulf %166, %165 : vector<2x32xf32>
    %cst_59 = arith.constant 5.000000e-01 : f32
    %168 = vector.broadcast %cst_59 : f32 to vector<2x32xf32>
    %169 = arith.addf %167, %168 : vector<2x32xf32>
    %170 = arith.mulf %155, %133 : vector<2x32xf32>
    %171 = arith.mulf %145, %159 : vector<2x32xf32>
    %172 = arith.addf %170, %171 : vector<2x32xf32>
    %173 = math.tanh %172 : vector<2x32xf32>
    %174 = arith.mulf %169, %173 : vector<2x32xf32>
    %175 = vector.extract_strided_slice %9 {offsets = [8, 0], sizes = [2, 32], strides = [1, 1]} : vector<16x32xf32> to vector<2x32xf32>
    %cst_60 = arith.constant dense<0.000000e+00> : vector<2x32xf32>
    %176 = tpu.matmul %174, %13, %cst_60 {dimension_numbers = #tpu.dot_dimension_numbers<[1], [0], [0], [1], [0, 0, 1, 1], [], []>} : vector<2x32xf32>, vector<32x32xf32>, vector<2x32xf32> -> vector<2x32xf32>
    %177 = arith.addf %175, %176 : vector<2x32xf32>
    %cst_61 = arith.constant 5.000000e-01 : f32
    %178 = vector.broadcast %cst_61 : f32 to vector<2x32xf32>
    %179 = arith.mulf %178, %177 : vector<2x32xf32>
    %180 = math.tanh %179 : vector<2x32xf32>
    %cst_62 = arith.constant 5.000000e-01 : f32
    %181 = vector.broadcast %cst_62 : f32 to vector<2x32xf32>
    %182 = arith.mulf %181, %180 : vector<2x32xf32>
    %cst_63 = arith.constant 5.000000e-01 : f32
    %183 = vector.broadcast %cst_63 : f32 to vector<2x32xf32>
    %184 = arith.addf %182, %183 : vector<2x32xf32>
    %185 = vector.extract_strided_slice %10 {offsets = [8, 0], sizes = [2, 32], strides = [1, 1]} : vector<16x32xf32> to vector<2x32xf32>
    %cst_64 = arith.constant dense<0.000000e+00> : vector<2x32xf32>
    %186 = tpu.matmul %174, %14, %cst_64 {dimension_numbers = #tpu.dot_dimension_numbers<[1], [0], [0], [1], [0, 0, 1, 1], [], []>} : vector<2x32xf32>, vector<32x32xf32>, vector<2x32xf32> -> vector<2x32xf32>
    %187 = arith.addf %185, %186 : vector<2x32xf32>
    %cst_65 = arith.constant 5.000000e-01 : f32
    %188 = vector.broadcast %cst_65 : f32 to vector<2x32xf32>
    %189 = arith.mulf %188, %187 : vector<2x32xf32>
    %190 = math.tanh %189 : vector<2x32xf32>
    %cst_66 = arith.constant 5.000000e-01 : f32
    %191 = vector.broadcast %cst_66 : f32 to vector<2x32xf32>
    %192 = arith.mulf %191, %190 : vector<2x32xf32>
    %cst_67 = arith.constant 5.000000e-01 : f32
    %193 = vector.broadcast %cst_67 : f32 to vector<2x32xf32>
    %194 = arith.addf %192, %193 : vector<2x32xf32>
    %195 = vector.extract_strided_slice %11 {offsets = [8, 0], sizes = [2, 32], strides = [1, 1]} : vector<16x32xf32> to vector<2x32xf32>
    %cst_68 = arith.constant dense<0.000000e+00> : vector<2x32xf32>
    %196 = tpu.matmul %174, %15, %cst_68 {dimension_numbers = #tpu.dot_dimension_numbers<[1], [0], [0], [1], [0, 0, 1, 1], [], []>} : vector<2x32xf32>, vector<32x32xf32>, vector<2x32xf32> -> vector<2x32xf32>
    %197 = arith.addf %195, %196 : vector<2x32xf32>
    %198 = math.tanh %197 : vector<2x32xf32>
    %199 = vector.extract_strided_slice %12 {offsets = [8, 0], sizes = [2, 32], strides = [1, 1]} : vector<16x32xf32> to vector<2x32xf32>
    %cst_69 = arith.constant dense<0.000000e+00> : vector<2x32xf32>
    %200 = tpu.matmul %174, %16, %cst_69 {dimension_numbers = #tpu.dot_dimension_numbers<[1], [0], [0], [1], [0, 0, 1, 1], [], []>} : vector<2x32xf32>, vector<32x32xf32>, vector<2x32xf32> -> vector<2x32xf32>
    %201 = arith.addf %199, %200 : vector<2x32xf32>
    %cst_70 = arith.constant 5.000000e-01 : f32
    %202 = vector.broadcast %cst_70 : f32 to vector<2x32xf32>
    %203 = arith.mulf %202, %201 : vector<2x32xf32>
    %204 = math.tanh %203 : vector<2x32xf32>
    %cst_71 = arith.constant 5.000000e-01 : f32
    %205 = vector.broadcast %cst_71 : f32 to vector<2x32xf32>
    %206 = arith.mulf %205, %204 : vector<2x32xf32>
    %cst_72 = arith.constant 5.000000e-01 : f32
    %207 = vector.broadcast %cst_72 : f32 to vector<2x32xf32>
    %208 = arith.addf %206, %207 : vector<2x32xf32>
    %209 = arith.mulf %194, %172 : vector<2x32xf32>
    %210 = arith.mulf %184, %198 : vector<2x32xf32>
    %211 = arith.addf %209, %210 : vector<2x32xf32>
    %212 = math.tanh %211 : vector<2x32xf32>
    %213 = arith.mulf %208, %212 : vector<2x32xf32>
    %214 = vector.extract_strided_slice %9 {offsets = [10, 0], sizes = [2, 32], strides = [1, 1]} : vector<16x32xf32> to vector<2x32xf32>
    %cst_73 = arith.constant dense<0.000000e+00> : vector<2x32xf32>
    %215 = tpu.matmul %213, %13, %cst_73 {dimension_numbers = #tpu.dot_dimension_numbers<[1], [0], [0], [1], [0, 0, 1, 1], [], []>} : vector<2x32xf32>, vector<32x32xf32>, vector<2x32xf32> -> vector<2x32xf32>
    %216 = arith.addf %214, %215 : vector<2x32xf32>
    %cst_74 = arith.constant 5.000000e-01 : f32
    %217 = vector.broadcast %cst_74 : f32 to vector<2x32xf32>
    %218 = arith.mulf %217, %216 : vector<2x32xf32>
    %219 = math.tanh %218 : vector<2x32xf32>
    %cst_75 = arith.constant 5.000000e-01 : f32
    %220 = vector.broadcast %cst_75 : f32 to vector<2x32xf32>
    %221 = arith.mulf %220, %219 : vector<2x32xf32>
    %cst_76 = arith.constant 5.000000e-01 : f32
    %222 = vector.broadcast %cst_76 : f32 to vector<2x32xf32>
    %223 = arith.addf %221, %222 : vector<2x32xf32>
    %224 = vector.extract_strided_slice %10 {offsets = [10, 0], sizes = [2, 32], strides = [1, 1]} : vector<16x32xf32> to vector<2x32xf32>
    %cst_77 = arith.constant dense<0.000000e+00> : vector<2x32xf32>
    %225 = tpu.matmul %213, %14, %cst_77 {dimension_numbers = #tpu.dot_dimension_numbers<[1], [0], [0], [1], [0, 0, 1, 1], [], []>} : vector<2x32xf32>, vector<32x32xf32>, vector<2x32xf32> -> vector<2x32xf32>
    %226 = arith.addf %224, %225 : vector<2x32xf32>
    %cst_78 = arith.constant 5.000000e-01 : f32
    %227 = vector.broadcast %cst_78 : f32 to vector<2x32xf32>
    %228 = arith.mulf %227, %226 : vector<2x32xf32>
    %229 = math.tanh %228 : vector<2x32xf32>
    %cst_79 = arith.constant 5.000000e-01 : f32
    %230 = vector.broadcast %cst_79 : f32 to vector<2x32xf32>
    %231 = arith.mulf %230, %229 : vector<2x32xf32>
    %cst_80 = arith.constant 5.000000e-01 : f32
    %232 = vector.broadcast %cst_80 : f32 to vector<2x32xf32>
    %233 = arith.addf %231, %232 : vector<2x32xf32>
    %234 = vector.extract_strided_slice %11 {offsets = [10, 0], sizes = [2, 32], strides = [1, 1]} : vector<16x32xf32> to vector<2x32xf32>
    %cst_81 = arith.constant dense<0.000000e+00> : vector<2x32xf32>
    %235 = tpu.matmul %213, %15, %cst_81 {dimension_numbers = #tpu.dot_dimension_numbers<[1], [0], [0], [1], [0, 0, 1, 1], [], []>} : vector<2x32xf32>, vector<32x32xf32>, vector<2x32xf32> -> vector<2x32xf32>
    %236 = arith.addf %234, %235 : vector<2x32xf32>
    %237 = math.tanh %236 : vector<2x32xf32>
    %238 = vector.extract_strided_slice %12 {offsets = [10, 0], sizes = [2, 32], strides = [1, 1]} : vector<16x32xf32> to vector<2x32xf32>
    %cst_82 = arith.constant dense<0.000000e+00> : vector<2x32xf32>
    %239 = tpu.matmul %213, %16, %cst_82 {dimension_numbers = #tpu.dot_dimension_numbers<[1], [0], [0], [1], [0, 0, 1, 1], [], []>} : vector<2x32xf32>, vector<32x32xf32>, vector<2x32xf32> -> vector<2x32xf32>
    %240 = arith.addf %238, %239 : vector<2x32xf32>
    %cst_83 = arith.constant 5.000000e-01 : f32
    %241 = vector.broadcast %cst_83 : f32 to vector<2x32xf32>
    %242 = arith.mulf %241, %240 : vector<2x32xf32>
    %243 = math.tanh %242 : vector<2x32xf32>
    %cst_84 = arith.constant 5.000000e-01 : f32
    %244 = vector.broadcast %cst_84 : f32 to vector<2x32xf32>
    %245 = arith.mulf %244, %243 : vector<2x32xf32>
    %cst_85 = arith.constant 5.000000e-01 : f32
    %246 = vector.broadcast %cst_85 : f32 to vector<2x32xf32>
    %247 = arith.addf %245, %246 : vector<2x32xf32>
    %248 = arith.mulf %233, %211 : vector<2x32xf32>
    %249 = arith.mulf %223, %237 : vector<2x32xf32>
    %250 = arith.addf %248, %249 : vector<2x32xf32>
    %251 = math.tanh %250 : vector<2x32xf32>
    %252 = arith.mulf %247, %251 : vector<2x32xf32>
    %253 = vector.extract_strided_slice %9 {offsets = [12, 0], sizes = [2, 32], strides = [1, 1]} : vector<16x32xf32> to vector<2x32xf32>
    %cst_86 = arith.constant dense<0.000000e+00> : vector<2x32xf32>
    %254 = tpu.matmul %252, %13, %cst_86 {dimension_numbers = #tpu.dot_dimension_numbers<[1], [0], [0], [1], [0, 0, 1, 1], [], []>} : vector<2x32xf32>, vector<32x32xf32>, vector<2x32xf32> -> vector<2x32xf32>
    %255 = arith.addf %253, %254 : vector<2x32xf32>
    %cst_87 = arith.constant 5.000000e-01 : f32
    %256 = vector.broadcast %cst_87 : f32 to vector<2x32xf32>
    %257 = arith.mulf %256, %255 : vector<2x32xf32>
    %258 = math.tanh %257 : vector<2x32xf32>
    %cst_88 = arith.constant 5.000000e-01 : f32
    %259 = vector.broadcast %cst_88 : f32 to vector<2x32xf32>
    %260 = arith.mulf %259, %258 : vector<2x32xf32>
    %cst_89 = arith.constant 5.000000e-01 : f32
    %261 = vector.broadcast %cst_89 : f32 to vector<2x32xf32>
    %262 = arith.addf %260, %261 : vector<2x32xf32>
    %263 = vector.extract_strided_slice %10 {offsets = [12, 0], sizes = [2, 32], strides = [1, 1]} : vector<16x32xf32> to vector<2x32xf32>
    %cst_90 = arith.constant dense<0.000000e+00> : vector<2x32xf32>
    %264 = tpu.matmul %252, %14, %cst_90 {dimension_numbers = #tpu.dot_dimension_numbers<[1], [0], [0], [1], [0, 0, 1, 1], [], []>} : vector<2x32xf32>, vector<32x32xf32>, vector<2x32xf32> -> vector<2x32xf32>
    %265 = arith.addf %263, %264 : vector<2x32xf32>
    %cst_91 = arith.constant 5.000000e-01 : f32
    %266 = vector.broadcast %cst_91 : f32 to vector<2x32xf32>
    %267 = arith.mulf %266, %265 : vector<2x32xf32>
    %268 = math.tanh %267 : vector<2x32xf32>
    %cst_92 = arith.constant 5.000000e-01 : f32
    %269 = vector.broadcast %cst_92 : f32 to vector<2x32xf32>
    %270 = arith.mulf %269, %268 : vector<2x32xf32>
    %cst_93 = arith.constant 5.000000e-01 : f32
    %271 = vector.broadcast %cst_93 : f32 to vector<2x32xf32>
    %272 = arith.addf %270, %271 : vector<2x32xf32>
    %273 = vector.extract_strided_slice %11 {offsets = [12, 0], sizes = [2, 32], strides = [1, 1]} : vector<16x32xf32> to vector<2x32xf32>
    %cst_94 = arith.constant dense<0.000000e+00> : vector<2x32xf32>
    %274 = tpu.matmul %252, %15, %cst_94 {dimension_numbers = #tpu.dot_dimension_numbers<[1], [0], [0], [1], [0, 0, 1, 1], [], []>} : vector<2x32xf32>, vector<32x32xf32>, vector<2x32xf32> -> vector<2x32xf32>
    %275 = arith.addf %273, %274 : vector<2x32xf32>
    %276 = math.tanh %275 : vector<2x32xf32>
    %277 = vector.extract_strided_slice %12 {offsets = [12, 0], sizes = [2, 32], strides = [1, 1]} : vector<16x32xf32> to vector<2x32xf32>
    %cst_95 = arith.constant dense<0.000000e+00> : vector<2x32xf32>
    %278 = tpu.matmul %252, %16, %cst_95 {dimension_numbers = #tpu.dot_dimension_numbers<[1], [0], [0], [1], [0, 0, 1, 1], [], []>} : vector<2x32xf32>, vector<32x32xf32>, vector<2x32xf32> -> vector<2x32xf32>
    %279 = arith.addf %277, %278 : vector<2x32xf32>
    %cst_96 = arith.constant 5.000000e-01 : f32
    %280 = vector.broadcast %cst_96 : f32 to vector<2x32xf32>
    %281 = arith.mulf %280, %279 : vector<2x32xf32>
    %282 = math.tanh %281 : vector<2x32xf32>
    %cst_97 = arith.constant 5.000000e-01 : f32
    %283 = vector.broadcast %cst_97 : f32 to vector<2x32xf32>
    %284 = arith.mulf %283, %282 : vector<2x32xf32>
    %cst_98 = arith.constant 5.000000e-01 : f32
    %285 = vector.broadcast %cst_98 : f32 to vector<2x32xf32>
    %286 = arith.addf %284, %285 : vector<2x32xf32>
    %287 = arith.mulf %272, %250 : vector<2x32xf32>
    %288 = arith.mulf %262, %276 : vector<2x32xf32>
    %289 = arith.addf %287, %288 : vector<2x32xf32>
    %290 = math.tanh %289 : vector<2x32xf32>
    %291 = arith.mulf %286, %290 : vector<2x32xf32>
    %292 = vector.extract_strided_slice %9 {offsets = [14, 0], sizes = [2, 32], strides = [1, 1]} : vector<16x32xf32> to vector<2x32xf32>
    %cst_99 = arith.constant dense<0.000000e+00> : vector<2x32xf32>
    %293 = tpu.matmul %291, %13, %cst_99 {dimension_numbers = #tpu.dot_dimension_numbers<[1], [0], [0], [1], [0, 0, 1, 1], [], []>} : vector<2x32xf32>, vector<32x32xf32>, vector<2x32xf32> -> vector<2x32xf32>
    %294 = arith.addf %292, %293 : vector<2x32xf32>
    %cst_100 = arith.constant 5.000000e-01 : f32
    %295 = vector.broadcast %cst_100 : f32 to vector<2x32xf32>
    %296 = arith.mulf %295, %294 : vector<2x32xf32>
    %297 = math.tanh %296 : vector<2x32xf32>
    %cst_101 = arith.constant 5.000000e-01 : f32
    %298 = vector.broadcast %cst_101 : f32 to vector<2x32xf32>
    %299 = arith.mulf %298, %297 : vector<2x32xf32>
    %cst_102 = arith.constant 5.000000e-01 : f32
    %300 = vector.broadcast %cst_102 : f32 to vector<2x32xf32>
    %301 = arith.addf %299, %300 : vector<2x32xf32>
    %302 = vector.extract_strided_slice %10 {offsets = [14, 0], sizes = [2, 32], strides = [1, 1]} : vector<16x32xf32> to vector<2x32xf32>
    %cst_103 = arith.constant dense<0.000000e+00> : vector<2x32xf32>
    %303 = tpu.matmul %291, %14, %cst_103 {dimension_numbers = #tpu.dot_dimension_numbers<[1], [0], [0], [1], [0, 0, 1, 1], [], []>} : vector<2x32xf32>, vector<32x32xf32>, vector<2x32xf32> -> vector<2x32xf32>
    %304 = arith.addf %302, %303 : vector<2x32xf32>
    %cst_104 = arith.constant 5.000000e-01 : f32
    %305 = vector.broadcast %cst_104 : f32 to vector<2x32xf32>
    %306 = arith.mulf %305, %304 : vector<2x32xf32>
    %307 = math.tanh %306 : vector<2x32xf32>
    %cst_105 = arith.constant 5.000000e-01 : f32
    %308 = vector.broadcast %cst_105 : f32 to vector<2x32xf32>
    %309 = arith.mulf %308, %307 : vector<2x32xf32>
    %cst_106 = arith.constant 5.000000e-01 : f32
    %310 = vector.broadcast %cst_106 : f32 to vector<2x32xf32>
    %311 = arith.addf %309, %310 : vector<2x32xf32>
    %312 = vector.extract_strided_slice %11 {offsets = [14, 0], sizes = [2, 32], strides = [1, 1]} : vector<16x32xf32> to vector<2x32xf32>
    %cst_107 = arith.constant dense<0.000000e+00> : vector<2x32xf32>
    %313 = tpu.matmul %291, %15, %cst_107 {dimension_numbers = #tpu.dot_dimension_numbers<[1], [0], [0], [1], [0, 0, 1, 1], [], []>} : vector<2x32xf32>, vector<32x32xf32>, vector<2x32xf32> -> vector<2x32xf32>
    %314 = arith.addf %312, %313 : vector<2x32xf32>
    %315 = math.tanh %314 : vector<2x32xf32>
    %316 = vector.extract_strided_slice %12 {offsets = [14, 0], sizes = [2, 32], strides = [1, 1]} : vector<16x32xf32> to vector<2x32xf32>
    %cst_108 = arith.constant dense<0.000000e+00> : vector<2x32xf32>
    %317 = tpu.matmul %291, %16, %cst_108 {dimension_numbers = #tpu.dot_dimension_numbers<[1], [0], [0], [1], [0, 0, 1, 1], [], []>} : vector<2x32xf32>, vector<32x32xf32>, vector<2x32xf32> -> vector<2x32xf32>
    %318 = arith.addf %316, %317 : vector<2x32xf32>
    %cst_109 = arith.constant 5.000000e-01 : f32
    %319 = vector.broadcast %cst_109 : f32 to vector<2x32xf32>
    %320 = arith.mulf %319, %318 : vector<2x32xf32>
    %321 = math.tanh %320 : vector<2x32xf32>
    %cst_110 = arith.constant 5.000000e-01 : f32
    %322 = vector.broadcast %cst_110 : f32 to vector<2x32xf32>
    %323 = arith.mulf %322, %321 : vector<2x32xf32>
    %cst_111 = arith.constant 5.000000e-01 : f32
    %324 = vector.broadcast %cst_111 : f32 to vector<2x32xf32>
    %325 = arith.addf %323, %324 : vector<2x32xf32>
    %326 = arith.mulf %311, %289 : vector<2x32xf32>
    %327 = arith.mulf %301, %315 : vector<2x32xf32>
    %328 = arith.addf %326, %327 : vector<2x32xf32>
    %329 = math.tanh %328 : vector<2x32xf32>
    %330 = arith.mulf %325, %329 : vector<2x32xf32>
    %331 = tpu.concatenate %57, %96, %135, %174, %213, %252, %291, %330 in 0 : vector<2x32xf32>, vector<2x32xf32>, vector<2x32xf32>, vector<2x32xf32>, vector<2x32xf32>, vector<2x32xf32>, vector<2x32xf32>, vector<2x32xf32> -> vector<16x32xf32>
    %c0_112 = arith.constant 0 : index
    %c0_113 = arith.constant 0 : index
    %332 = vector.load %arg4[%c0_112, %c0_113] : memref<32x128xf32, #tpu.memory_space<vmem>>, vector<32x128xf32>
    %c0_114 = arith.constant 0 : index
    %c0_115 = arith.constant 0 : index
    %333 = vector.load %arg5[%c0_114, %c0_115] : memref<32x128xf32, #tpu.memory_space<vmem>>, vector<32x128xf32>
    %c0_116 = arith.constant 0 : index
    %c0_117 = arith.constant 0 : index
    %334 = vector.load %arg6[%c0_116, %c0_117] : memref<1x128xf32, #tpu.memory_space<vmem>>, vector<1x128xf32>
    %cst_118 = arith.constant dense<0.000000e+00> : vector<16x128xf32>
    %335 = tpu.matmul %331, %332, %cst_118 {dimension_numbers = #tpu.dot_dimension_numbers<[1], [0], [0], [1], [0, 0, 1, 1], [], []>} : vector<16x32xf32>, vector<32x128xf32>, vector<16x128xf32> -> vector<16x128xf32>
    %336 = vector.broadcast %334 : vector<1x128xf32> to vector<16x128xf32>
    %337 = arith.addf %335, %336 : vector<16x128xf32>
    %338 = vector.extract_strided_slice %337 {offsets = [0, 0], sizes = [16, 32], strides = [1, 1]} : vector<16x128xf32> to vector<16x32xf32>
    %339 = vector.extract_strided_slice %337 {offsets = [0, 32], sizes = [16, 32], strides = [1, 1]} : vector<16x128xf32> to vector<16x32xf32>
    %340 = vector.extract_strided_slice %337 {offsets = [0, 64], sizes = [16, 32], strides = [1, 1]} : vector<16x128xf32> to vector<16x32xf32>
    %341 = vector.extract_strided_slice %337 {offsets = [0, 96], sizes = [16, 32], strides = [1, 1]} : vector<16x128xf32> to vector<16x32xf32>
    %342 = vector.extract_strided_slice %333 {offsets = [0, 0], sizes = [32, 32], strides = [1, 1]} : vector<32x128xf32> to vector<32x32xf32>
    %343 = vector.extract_strided_slice %333 {offsets = [0, 32], sizes = [32, 32], strides = [1, 1]} : vector<32x128xf32> to vector<32x32xf32>
    %344 = vector.extract_strided_slice %333 {offsets = [0, 64], sizes = [32, 32], strides = [1, 1]} : vector<32x128xf32> to vector<32x32xf32>
    %345 = vector.extract_strided_slice %333 {offsets = [0, 96], sizes = [32, 32], strides = [1, 1]} : vector<32x128xf32> to vector<32x32xf32>
    %cst_119 = arith.constant 0.000000e+00 : f32
    %346 = vector.broadcast %cst_119 : f32 to vector<2x32xf32>
    %cst_120 = arith.constant 0.000000e+00 : f32
    %347 = vector.broadcast %cst_120 : f32 to vector<2x32xf32>
    %348 = vector.extract_strided_slice %338 {offsets = [0, 0], sizes = [2, 32], strides = [1, 1]} : vector<16x32xf32> to vector<2x32xf32>
    %cst_121 = arith.constant dense<0.000000e+00> : vector<2x32xf32>
    %349 = tpu.matmul %346, %342, %cst_121 {dimension_numbers = #tpu.dot_dimension_numbers<[1], [0], [0], [1], [0, 0, 1, 1], [], []>} : vector<2x32xf32>, vector<32x32xf32>, vector<2x32xf32> -> vector<2x32xf32>
    %350 = arith.addf %348, %349 : vector<2x32xf32>
    %cst_122 = arith.constant 5.000000e-01 : f32
    %351 = vector.broadcast %cst_122 : f32 to vector<2x32xf32>
    %352 = arith.mulf %351, %350 : vector<2x32xf32>
    %353 = math.tanh %352 : vector<2x32xf32>
    %cst_123 = arith.constant 5.000000e-01 : f32
    %354 = vector.broadcast %cst_123 : f32 to vector<2x32xf32>
    %355 = arith.mulf %354, %353 : vector<2x32xf32>
    %cst_124 = arith.constant 5.000000e-01 : f32
    %356 = vector.broadcast %cst_124 : f32 to vector<2x32xf32>
    %357 = arith.addf %355, %356 : vector<2x32xf32>
    %358 = vector.extract_strided_slice %339 {offsets = [0, 0], sizes = [2, 32], strides = [1, 1]} : vector<16x32xf32> to vector<2x32xf32>
    %cst_125 = arith.constant dense<0.000000e+00> : vector<2x32xf32>
    %359 = tpu.matmul %346, %343, %cst_125 {dimension_numbers = #tpu.dot_dimension_numbers<[1], [0], [0], [1], [0, 0, 1, 1], [], []>} : vector<2x32xf32>, vector<32x32xf32>, vector<2x32xf32> -> vector<2x32xf32>
    %360 = arith.addf %358, %359 : vector<2x32xf32>
    %cst_126 = arith.constant 5.000000e-01 : f32
    %361 = vector.broadcast %cst_126 : f32 to vector<2x32xf32>
    %362 = arith.mulf %361, %360 : vector<2x32xf32>
    %363 = math.tanh %362 : vector<2x32xf32>
    %cst_127 = arith.constant 5.000000e-01 : f32
    %364 = vector.broadcast %cst_127 : f32 to vector<2x32xf32>
    %365 = arith.mulf %364, %363 : vector<2x32xf32>
    %cst_128 = arith.constant 5.000000e-01 : f32
    %366 = vector.broadcast %cst_128 : f32 to vector<2x32xf32>
    %367 = arith.addf %365, %366 : vector<2x32xf32>
    %368 = vector.extract_strided_slice %340 {offsets = [0, 0], sizes = [2, 32], strides = [1, 1]} : vector<16x32xf32> to vector<2x32xf32>
    %cst_129 = arith.constant dense<0.000000e+00> : vector<2x32xf32>
    %369 = tpu.matmul %346, %344, %cst_129 {dimension_numbers = #tpu.dot_dimension_numbers<[1], [0], [0], [1], [0, 0, 1, 1], [], []>} : vector<2x32xf32>, vector<32x32xf32>, vector<2x32xf32> -> vector<2x32xf32>
    %370 = arith.addf %368, %369 : vector<2x32xf32>
    %371 = math.tanh %370 : vector<2x32xf32>
    %372 = vector.extract_strided_slice %341 {offsets = [0, 0], sizes = [2, 32], strides = [1, 1]} : vector<16x32xf32> to vector<2x32xf32>
    %cst_130 = arith.constant dense<0.000000e+00> : vector<2x32xf32>
    %373 = tpu.matmul %346, %345, %cst_130 {dimension_numbers = #tpu.dot_dimension_numbers<[1], [0], [0], [1], [0, 0, 1, 1], [], []>} : vector<2x32xf32>, vector<32x32xf32>, vector<2x32xf32> -> vector<2x32xf32>
    %374 = arith.addf %372, %373 : vector<2x32xf32>
    %cst_131 = arith.constant 5.000000e-01 : f32
    %375 = vector.broadcast %cst_131 : f32 to vector<2x32xf32>
    %376 = arith.mulf %375, %374 : vector<2x32xf32>
    %377 = math.tanh %376 : vector<2x32xf32>
    %cst_132 = arith.constant 5.000000e-01 : f32
    %378 = vector.broadcast %cst_132 : f32 to vector<2x32xf32>
    %379 = arith.mulf %378, %377 : vector<2x32xf32>
    %cst_133 = arith.constant 5.000000e-01 : f32
    %380 = vector.broadcast %cst_133 : f32 to vector<2x32xf32>
    %381 = arith.addf %379, %380 : vector<2x32xf32>
    %382 = arith.mulf %367, %347 : vector<2x32xf32>
    %383 = arith.mulf %357, %371 : vector<2x32xf32>
    %384 = arith.addf %382, %383 : vector<2x32xf32>
    %385 = math.tanh %384 : vector<2x32xf32>
    %386 = arith.mulf %381, %385 : vector<2x32xf32>
    %387 = vector.extract_strided_slice %338 {offsets = [2, 0], sizes = [2, 32], strides = [1, 1]} : vector<16x32xf32> to vector<2x32xf32>
    %cst_134 = arith.constant dense<0.000000e+00> : vector<2x32xf32>
    %388 = tpu.matmul %386, %342, %cst_134 {dimension_numbers = #tpu.dot_dimension_numbers<[1], [0], [0], [1], [0, 0, 1, 1], [], []>} : vector<2x32xf32>, vector<32x32xf32>, vector<2x32xf32> -> vector<2x32xf32>
    %389 = arith.addf %387, %388 : vector<2x32xf32>
    %cst_135 = arith.constant 5.000000e-01 : f32
    %390 = vector.broadcast %cst_135 : f32 to vector<2x32xf32>
    %391 = arith.mulf %390, %389 : vector<2x32xf32>
    %392 = math.tanh %391 : vector<2x32xf32>
    %cst_136 = arith.constant 5.000000e-01 : f32
    %393 = vector.broadcast %cst_136 : f32 to vector<2x32xf32>
    %394 = arith.mulf %393, %392 : vector<2x32xf32>
    %cst_137 = arith.constant 5.000000e-01 : f32
    %395 = vector.broadcast %cst_137 : f32 to vector<2x32xf32>
    %396 = arith.addf %394, %395 : vector<2x32xf32>
    %397 = vector.extract_strided_slice %339 {offsets = [2, 0], sizes = [2, 32], strides = [1, 1]} : vector<16x32xf32> to vector<2x32xf32>
    %cst_138 = arith.constant dense<0.000000e+00> : vector<2x32xf32>
    %398 = tpu.matmul %386, %343, %cst_138 {dimension_numbers = #tpu.dot_dimension_numbers<[1], [0], [0], [1], [0, 0, 1, 1], [], []>} : vector<2x32xf32>, vector<32x32xf32>, vector<2x32xf32> -> vector<2x32xf32>
    %399 = arith.addf %397, %398 : vector<2x32xf32>
    %cst_139 = arith.constant 5.000000e-01 : f32
    %400 = vector.broadcast %cst_139 : f32 to vector<2x32xf32>
    %401 = arith.mulf %400, %399 : vector<2x32xf32>
    %402 = math.tanh %401 : vector<2x32xf32>
    %cst_140 = arith.constant 5.000000e-01 : f32
    %403 = vector.broadcast %cst_140 : f32 to vector<2x32xf32>
    %404 = arith.mulf %403, %402 : vector<2x32xf32>
    %cst_141 = arith.constant 5.000000e-01 : f32
    %405 = vector.broadcast %cst_141 : f32 to vector<2x32xf32>
    %406 = arith.addf %404, %405 : vector<2x32xf32>
    %407 = vector.extract_strided_slice %340 {offsets = [2, 0], sizes = [2, 32], strides = [1, 1]} : vector<16x32xf32> to vector<2x32xf32>
    %cst_142 = arith.constant dense<0.000000e+00> : vector<2x32xf32>
    %408 = tpu.matmul %386, %344, %cst_142 {dimension_numbers = #tpu.dot_dimension_numbers<[1], [0], [0], [1], [0, 0, 1, 1], [], []>} : vector<2x32xf32>, vector<32x32xf32>, vector<2x32xf32> -> vector<2x32xf32>
    %409 = arith.addf %407, %408 : vector<2x32xf32>
    %410 = math.tanh %409 : vector<2x32xf32>
    %411 = vector.extract_strided_slice %341 {offsets = [2, 0], sizes = [2, 32], strides = [1, 1]} : vector<16x32xf32> to vector<2x32xf32>
    %cst_143 = arith.constant dense<0.000000e+00> : vector<2x32xf32>
    %412 = tpu.matmul %386, %345, %cst_143 {dimension_numbers = #tpu.dot_dimension_numbers<[1], [0], [0], [1], [0, 0, 1, 1], [], []>} : vector<2x32xf32>, vector<32x32xf32>, vector<2x32xf32> -> vector<2x32xf32>
    %413 = arith.addf %411, %412 : vector<2x32xf32>
    %cst_144 = arith.constant 5.000000e-01 : f32
    %414 = vector.broadcast %cst_144 : f32 to vector<2x32xf32>
    %415 = arith.mulf %414, %413 : vector<2x32xf32>
    %416 = math.tanh %415 : vector<2x32xf32>
    %cst_145 = arith.constant 5.000000e-01 : f32
    %417 = vector.broadcast %cst_145 : f32 to vector<2x32xf32>
    %418 = arith.mulf %417, %416 : vector<2x32xf32>
    %cst_146 = arith.constant 5.000000e-01 : f32
    %419 = vector.broadcast %cst_146 : f32 to vector<2x32xf32>
    %420 = arith.addf %418, %419 : vector<2x32xf32>
    %421 = arith.mulf %406, %384 : vector<2x32xf32>
    %422 = arith.mulf %396, %410 : vector<2x32xf32>
    %423 = arith.addf %421, %422 : vector<2x32xf32>
    %424 = math.tanh %423 : vector<2x32xf32>
    %425 = arith.mulf %420, %424 : vector<2x32xf32>
    %426 = vector.extract_strided_slice %338 {offsets = [4, 0], sizes = [2, 32], strides = [1, 1]} : vector<16x32xf32> to vector<2x32xf32>
    %cst_147 = arith.constant dense<0.000000e+00> : vector<2x32xf32>
    %427 = tpu.matmul %425, %342, %cst_147 {dimension_numbers = #tpu.dot_dimension_numbers<[1], [0], [0], [1], [0, 0, 1, 1], [], []>} : vector<2x32xf32>, vector<32x32xf32>, vector<2x32xf32> -> vector<2x32xf32>
    %428 = arith.addf %426, %427 : vector<2x32xf32>
    %cst_148 = arith.constant 5.000000e-01 : f32
    %429 = vector.broadcast %cst_148 : f32 to vector<2x32xf32>
    %430 = arith.mulf %429, %428 : vector<2x32xf32>
    %431 = math.tanh %430 : vector<2x32xf32>
    %cst_149 = arith.constant 5.000000e-01 : f32
    %432 = vector.broadcast %cst_149 : f32 to vector<2x32xf32>
    %433 = arith.mulf %432, %431 : vector<2x32xf32>
    %cst_150 = arith.constant 5.000000e-01 : f32
    %434 = vector.broadcast %cst_150 : f32 to vector<2x32xf32>
    %435 = arith.addf %433, %434 : vector<2x32xf32>
    %436 = vector.extract_strided_slice %339 {offsets = [4, 0], sizes = [2, 32], strides = [1, 1]} : vector<16x32xf32> to vector<2x32xf32>
    %cst_151 = arith.constant dense<0.000000e+00> : vector<2x32xf32>
    %437 = tpu.matmul %425, %343, %cst_151 {dimension_numbers = #tpu.dot_dimension_numbers<[1], [0], [0], [1], [0, 0, 1, 1], [], []>} : vector<2x32xf32>, vector<32x32xf32>, vector<2x32xf32> -> vector<2x32xf32>
    %438 = arith.addf %436, %437 : vector<2x32xf32>
    %cst_152 = arith.constant 5.000000e-01 : f32
    %439 = vector.broadcast %cst_152 : f32 to vector<2x32xf32>
    %440 = arith.mulf %439, %438 : vector<2x32xf32>
    %441 = math.tanh %440 : vector<2x32xf32>
    %cst_153 = arith.constant 5.000000e-01 : f32
    %442 = vector.broadcast %cst_153 : f32 to vector<2x32xf32>
    %443 = arith.mulf %442, %441 : vector<2x32xf32>
    %cst_154 = arith.constant 5.000000e-01 : f32
    %444 = vector.broadcast %cst_154 : f32 to vector<2x32xf32>
    %445 = arith.addf %443, %444 : vector<2x32xf32>
    %446 = vector.extract_strided_slice %340 {offsets = [4, 0], sizes = [2, 32], strides = [1, 1]} : vector<16x32xf32> to vector<2x32xf32>
    %cst_155 = arith.constant dense<0.000000e+00> : vector<2x32xf32>
    %447 = tpu.matmul %425, %344, %cst_155 {dimension_numbers = #tpu.dot_dimension_numbers<[1], [0], [0], [1], [0, 0, 1, 1], [], []>} : vector<2x32xf32>, vector<32x32xf32>, vector<2x32xf32> -> vector<2x32xf32>
    %448 = arith.addf %446, %447 : vector<2x32xf32>
    %449 = math.tanh %448 : vector<2x32xf32>
    %450 = vector.extract_strided_slice %341 {offsets = [4, 0], sizes = [2, 32], strides = [1, 1]} : vector<16x32xf32> to vector<2x32xf32>
    %cst_156 = arith.constant dense<0.000000e+00> : vector<2x32xf32>
    %451 = tpu.matmul %425, %345, %cst_156 {dimension_numbers = #tpu.dot_dimension_numbers<[1], [0], [0], [1], [0, 0, 1, 1], [], []>} : vector<2x32xf32>, vector<32x32xf32>, vector<2x32xf32> -> vector<2x32xf32>
    %452 = arith.addf %450, %451 : vector<2x32xf32>
    %cst_157 = arith.constant 5.000000e-01 : f32
    %453 = vector.broadcast %cst_157 : f32 to vector<2x32xf32>
    %454 = arith.mulf %453, %452 : vector<2x32xf32>
    %455 = math.tanh %454 : vector<2x32xf32>
    %cst_158 = arith.constant 5.000000e-01 : f32
    %456 = vector.broadcast %cst_158 : f32 to vector<2x32xf32>
    %457 = arith.mulf %456, %455 : vector<2x32xf32>
    %cst_159 = arith.constant 5.000000e-01 : f32
    %458 = vector.broadcast %cst_159 : f32 to vector<2x32xf32>
    %459 = arith.addf %457, %458 : vector<2x32xf32>
    %460 = arith.mulf %445, %423 : vector<2x32xf32>
    %461 = arith.mulf %435, %449 : vector<2x32xf32>
    %462 = arith.addf %460, %461 : vector<2x32xf32>
    %463 = math.tanh %462 : vector<2x32xf32>
    %464 = arith.mulf %459, %463 : vector<2x32xf32>
    %465 = vector.extract_strided_slice %338 {offsets = [6, 0], sizes = [2, 32], strides = [1, 1]} : vector<16x32xf32> to vector<2x32xf32>
    %cst_160 = arith.constant dense<0.000000e+00> : vector<2x32xf32>
    %466 = tpu.matmul %464, %342, %cst_160 {dimension_numbers = #tpu.dot_dimension_numbers<[1], [0], [0], [1], [0, 0, 1, 1], [], []>} : vector<2x32xf32>, vector<32x32xf32>, vector<2x32xf32> -> vector<2x32xf32>
    %467 = arith.addf %465, %466 : vector<2x32xf32>
    %cst_161 = arith.constant 5.000000e-01 : f32
    %468 = vector.broadcast %cst_161 : f32 to vector<2x32xf32>
    %469 = arith.mulf %468, %467 : vector<2x32xf32>
    %470 = math.tanh %469 : vector<2x32xf32>
    %cst_162 = arith.constant 5.000000e-01 : f32
    %471 = vector.broadcast %cst_162 : f32 to vector<2x32xf32>
    %472 = arith.mulf %471, %470 : vector<2x32xf32>
    %cst_163 = arith.constant 5.000000e-01 : f32
    %473 = vector.broadcast %cst_163 : f32 to vector<2x32xf32>
    %474 = arith.addf %472, %473 : vector<2x32xf32>
    %475 = vector.extract_strided_slice %339 {offsets = [6, 0], sizes = [2, 32], strides = [1, 1]} : vector<16x32xf32> to vector<2x32xf32>
    %cst_164 = arith.constant dense<0.000000e+00> : vector<2x32xf32>
    %476 = tpu.matmul %464, %343, %cst_164 {dimension_numbers = #tpu.dot_dimension_numbers<[1], [0], [0], [1], [0, 0, 1, 1], [], []>} : vector<2x32xf32>, vector<32x32xf32>, vector<2x32xf32> -> vector<2x32xf32>
    %477 = arith.addf %475, %476 : vector<2x32xf32>
    %cst_165 = arith.constant 5.000000e-01 : f32
    %478 = vector.broadcast %cst_165 : f32 to vector<2x32xf32>
    %479 = arith.mulf %478, %477 : vector<2x32xf32>
    %480 = math.tanh %479 : vector<2x32xf32>
    %cst_166 = arith.constant 5.000000e-01 : f32
    %481 = vector.broadcast %cst_166 : f32 to vector<2x32xf32>
    %482 = arith.mulf %481, %480 : vector<2x32xf32>
    %cst_167 = arith.constant 5.000000e-01 : f32
    %483 = vector.broadcast %cst_167 : f32 to vector<2x32xf32>
    %484 = arith.addf %482, %483 : vector<2x32xf32>
    %485 = vector.extract_strided_slice %340 {offsets = [6, 0], sizes = [2, 32], strides = [1, 1]} : vector<16x32xf32> to vector<2x32xf32>
    %cst_168 = arith.constant dense<0.000000e+00> : vector<2x32xf32>
    %486 = tpu.matmul %464, %344, %cst_168 {dimension_numbers = #tpu.dot_dimension_numbers<[1], [0], [0], [1], [0, 0, 1, 1], [], []>} : vector<2x32xf32>, vector<32x32xf32>, vector<2x32xf32> -> vector<2x32xf32>
    %487 = arith.addf %485, %486 : vector<2x32xf32>
    %488 = math.tanh %487 : vector<2x32xf32>
    %489 = vector.extract_strided_slice %341 {offsets = [6, 0], sizes = [2, 32], strides = [1, 1]} : vector<16x32xf32> to vector<2x32xf32>
    %cst_169 = arith.constant dense<0.000000e+00> : vector<2x32xf32>
    %490 = tpu.matmul %464, %345, %cst_169 {dimension_numbers = #tpu.dot_dimension_numbers<[1], [0], [0], [1], [0, 0, 1, 1], [], []>} : vector<2x32xf32>, vector<32x32xf32>, vector<2x32xf32> -> vector<2x32xf32>
    %491 = arith.addf %489, %490 : vector<2x32xf32>
    %cst_170 = arith.constant 5.000000e-01 : f32
    %492 = vector.broadcast %cst_170 : f32 to vector<2x32xf32>
    %493 = arith.mulf %492, %491 : vector<2x32xf32>
    %494 = math.tanh %493 : vector<2x32xf32>
    %cst_171 = arith.constant 5.000000e-01 : f32
    %495 = vector.broadcast %cst_171 : f32 to vector<2x32xf32>
    %496 = arith.mulf %495, %494 : vector<2x32xf32>
    %cst_172 = arith.constant 5.000000e-01 : f32
    %497 = vector.broadcast %cst_172 : f32 to vector<2x32xf32>
    %498 = arith.addf %496, %497 : vector<2x32xf32>
    %499 = arith.mulf %484, %462 : vector<2x32xf32>
    %500 = arith.mulf %474, %488 : vector<2x32xf32>
    %501 = arith.addf %499, %500 : vector<2x32xf32>
    %502 = math.tanh %501 : vector<2x32xf32>
    %503 = arith.mulf %498, %502 : vector<2x32xf32>
    %504 = vector.extract_strided_slice %338 {offsets = [8, 0], sizes = [2, 32], strides = [1, 1]} : vector<16x32xf32> to vector<2x32xf32>
    %cst_173 = arith.constant dense<0.000000e+00> : vector<2x32xf32>
    %505 = tpu.matmul %503, %342, %cst_173 {dimension_numbers = #tpu.dot_dimension_numbers<[1], [0], [0], [1], [0, 0, 1, 1], [], []>} : vector<2x32xf32>, vector<32x32xf32>, vector<2x32xf32> -> vector<2x32xf32>
    %506 = arith.addf %504, %505 : vector<2x32xf32>
    %cst_174 = arith.constant 5.000000e-01 : f32
    %507 = vector.broadcast %cst_174 : f32 to vector<2x32xf32>
    %508 = arith.mulf %507, %506 : vector<2x32xf32>
    %509 = math.tanh %508 : vector<2x32xf32>
    %cst_175 = arith.constant 5.000000e-01 : f32
    %510 = vector.broadcast %cst_175 : f32 to vector<2x32xf32>
    %511 = arith.mulf %510, %509 : vector<2x32xf32>
    %cst_176 = arith.constant 5.000000e-01 : f32
    %512 = vector.broadcast %cst_176 : f32 to vector<2x32xf32>
    %513 = arith.addf %511, %512 : vector<2x32xf32>
    %514 = vector.extract_strided_slice %339 {offsets = [8, 0], sizes = [2, 32], strides = [1, 1]} : vector<16x32xf32> to vector<2x32xf32>
    %cst_177 = arith.constant dense<0.000000e+00> : vector<2x32xf32>
    %515 = tpu.matmul %503, %343, %cst_177 {dimension_numbers = #tpu.dot_dimension_numbers<[1], [0], [0], [1], [0, 0, 1, 1], [], []>} : vector<2x32xf32>, vector<32x32xf32>, vector<2x32xf32> -> vector<2x32xf32>
    %516 = arith.addf %514, %515 : vector<2x32xf32>
    %cst_178 = arith.constant 5.000000e-01 : f32
    %517 = vector.broadcast %cst_178 : f32 to vector<2x32xf32>
    %518 = arith.mulf %517, %516 : vector<2x32xf32>
    %519 = math.tanh %518 : vector<2x32xf32>
    %cst_179 = arith.constant 5.000000e-01 : f32
    %520 = vector.broadcast %cst_179 : f32 to vector<2x32xf32>
    %521 = arith.mulf %520, %519 : vector<2x32xf32>
    %cst_180 = arith.constant 5.000000e-01 : f32
    %522 = vector.broadcast %cst_180 : f32 to vector<2x32xf32>
    %523 = arith.addf %521, %522 : vector<2x32xf32>
    %524 = vector.extract_strided_slice %340 {offsets = [8, 0], sizes = [2, 32], strides = [1, 1]} : vector<16x32xf32> to vector<2x32xf32>
    %cst_181 = arith.constant dense<0.000000e+00> : vector<2x32xf32>
    %525 = tpu.matmul %503, %344, %cst_181 {dimension_numbers = #tpu.dot_dimension_numbers<[1], [0], [0], [1], [0, 0, 1, 1], [], []>} : vector<2x32xf32>, vector<32x32xf32>, vector<2x32xf32> -> vector<2x32xf32>
    %526 = arith.addf %524, %525 : vector<2x32xf32>
    %527 = math.tanh %526 : vector<2x32xf32>
    %528 = vector.extract_strided_slice %341 {offsets = [8, 0], sizes = [2, 32], strides = [1, 1]} : vector<16x32xf32> to vector<2x32xf32>
    %cst_182 = arith.constant dense<0.000000e+00> : vector<2x32xf32>
    %529 = tpu.matmul %503, %345, %cst_182 {dimension_numbers = #tpu.dot_dimension_numbers<[1], [0], [0], [1], [0, 0, 1, 1], [], []>} : vector<2x32xf32>, vector<32x32xf32>, vector<2x32xf32> -> vector<2x32xf32>
    %530 = arith.addf %528, %529 : vector<2x32xf32>
    %cst_183 = arith.constant 5.000000e-01 : f32
    %531 = vector.broadcast %cst_183 : f32 to vector<2x32xf32>
    %532 = arith.mulf %531, %530 : vector<2x32xf32>
    %533 = math.tanh %532 : vector<2x32xf32>
    %cst_184 = arith.constant 5.000000e-01 : f32
    %534 = vector.broadcast %cst_184 : f32 to vector<2x32xf32>
    %535 = arith.mulf %534, %533 : vector<2x32xf32>
    %cst_185 = arith.constant 5.000000e-01 : f32
    %536 = vector.broadcast %cst_185 : f32 to vector<2x32xf32>
    %537 = arith.addf %535, %536 : vector<2x32xf32>
    %538 = arith.mulf %523, %501 : vector<2x32xf32>
    %539 = arith.mulf %513, %527 : vector<2x32xf32>
    %540 = arith.addf %538, %539 : vector<2x32xf32>
    %541 = math.tanh %540 : vector<2x32xf32>
    %542 = arith.mulf %537, %541 : vector<2x32xf32>
    %543 = vector.extract_strided_slice %338 {offsets = [10, 0], sizes = [2, 32], strides = [1, 1]} : vector<16x32xf32> to vector<2x32xf32>
    %cst_186 = arith.constant dense<0.000000e+00> : vector<2x32xf32>
    %544 = tpu.matmul %542, %342, %cst_186 {dimension_numbers = #tpu.dot_dimension_numbers<[1], [0], [0], [1], [0, 0, 1, 1], [], []>} : vector<2x32xf32>, vector<32x32xf32>, vector<2x32xf32> -> vector<2x32xf32>
    %545 = arith.addf %543, %544 : vector<2x32xf32>
    %cst_187 = arith.constant 5.000000e-01 : f32
    %546 = vector.broadcast %cst_187 : f32 to vector<2x32xf32>
    %547 = arith.mulf %546, %545 : vector<2x32xf32>
    %548 = math.tanh %547 : vector<2x32xf32>
    %cst_188 = arith.constant 5.000000e-01 : f32
    %549 = vector.broadcast %cst_188 : f32 to vector<2x32xf32>
    %550 = arith.mulf %549, %548 : vector<2x32xf32>
    %cst_189 = arith.constant 5.000000e-01 : f32
    %551 = vector.broadcast %cst_189 : f32 to vector<2x32xf32>
    %552 = arith.addf %550, %551 : vector<2x32xf32>
    %553 = vector.extract_strided_slice %339 {offsets = [10, 0], sizes = [2, 32], strides = [1, 1]} : vector<16x32xf32> to vector<2x32xf32>
    %cst_190 = arith.constant dense<0.000000e+00> : vector<2x32xf32>
    %554 = tpu.matmul %542, %343, %cst_190 {dimension_numbers = #tpu.dot_dimension_numbers<[1], [0], [0], [1], [0, 0, 1, 1], [], []>} : vector<2x32xf32>, vector<32x32xf32>, vector<2x32xf32> -> vector<2x32xf32>
    %555 = arith.addf %553, %554 : vector<2x32xf32>
    %cst_191 = arith.constant 5.000000e-01 : f32
    %556 = vector.broadcast %cst_191 : f32 to vector<2x32xf32>
    %557 = arith.mulf %556, %555 : vector<2x32xf32>
    %558 = math.tanh %557 : vector<2x32xf32>
    %cst_192 = arith.constant 5.000000e-01 : f32
    %559 = vector.broadcast %cst_192 : f32 to vector<2x32xf32>
    %560 = arith.mulf %559, %558 : vector<2x32xf32>
    %cst_193 = arith.constant 5.000000e-01 : f32
    %561 = vector.broadcast %cst_193 : f32 to vector<2x32xf32>
    %562 = arith.addf %560, %561 : vector<2x32xf32>
    %563 = vector.extract_strided_slice %340 {offsets = [10, 0], sizes = [2, 32], strides = [1, 1]} : vector<16x32xf32> to vector<2x32xf32>
    %cst_194 = arith.constant dense<0.000000e+00> : vector<2x32xf32>
    %564 = tpu.matmul %542, %344, %cst_194 {dimension_numbers = #tpu.dot_dimension_numbers<[1], [0], [0], [1], [0, 0, 1, 1], [], []>} : vector<2x32xf32>, vector<32x32xf32>, vector<2x32xf32> -> vector<2x32xf32>
    %565 = arith.addf %563, %564 : vector<2x32xf32>
    %566 = math.tanh %565 : vector<2x32xf32>
    %567 = vector.extract_strided_slice %341 {offsets = [10, 0], sizes = [2, 32], strides = [1, 1]} : vector<16x32xf32> to vector<2x32xf32>
    %cst_195 = arith.constant dense<0.000000e+00> : vector<2x32xf32>
    %568 = tpu.matmul %542, %345, %cst_195 {dimension_numbers = #tpu.dot_dimension_numbers<[1], [0], [0], [1], [0, 0, 1, 1], [], []>} : vector<2x32xf32>, vector<32x32xf32>, vector<2x32xf32> -> vector<2x32xf32>
    %569 = arith.addf %567, %568 : vector<2x32xf32>
    %cst_196 = arith.constant 5.000000e-01 : f32
    %570 = vector.broadcast %cst_196 : f32 to vector<2x32xf32>
    %571 = arith.mulf %570, %569 : vector<2x32xf32>
    %572 = math.tanh %571 : vector<2x32xf32>
    %cst_197 = arith.constant 5.000000e-01 : f32
    %573 = vector.broadcast %cst_197 : f32 to vector<2x32xf32>
    %574 = arith.mulf %573, %572 : vector<2x32xf32>
    %cst_198 = arith.constant 5.000000e-01 : f32
    %575 = vector.broadcast %cst_198 : f32 to vector<2x32xf32>
    %576 = arith.addf %574, %575 : vector<2x32xf32>
    %577 = arith.mulf %562, %540 : vector<2x32xf32>
    %578 = arith.mulf %552, %566 : vector<2x32xf32>
    %579 = arith.addf %577, %578 : vector<2x32xf32>
    %580 = math.tanh %579 : vector<2x32xf32>
    %581 = arith.mulf %576, %580 : vector<2x32xf32>
    %582 = vector.extract_strided_slice %338 {offsets = [12, 0], sizes = [2, 32], strides = [1, 1]} : vector<16x32xf32> to vector<2x32xf32>
    %cst_199 = arith.constant dense<0.000000e+00> : vector<2x32xf32>
    %583 = tpu.matmul %581, %342, %cst_199 {dimension_numbers = #tpu.dot_dimension_numbers<[1], [0], [0], [1], [0, 0, 1, 1], [], []>} : vector<2x32xf32>, vector<32x32xf32>, vector<2x32xf32> -> vector<2x32xf32>
    %584 = arith.addf %582, %583 : vector<2x32xf32>
    %cst_200 = arith.constant 5.000000e-01 : f32
    %585 = vector.broadcast %cst_200 : f32 to vector<2x32xf32>
    %586 = arith.mulf %585, %584 : vector<2x32xf32>
    %587 = math.tanh %586 : vector<2x32xf32>
    %cst_201 = arith.constant 5.000000e-01 : f32
    %588 = vector.broadcast %cst_201 : f32 to vector<2x32xf32>
    %589 = arith.mulf %588, %587 : vector<2x32xf32>
    %cst_202 = arith.constant 5.000000e-01 : f32
    %590 = vector.broadcast %cst_202 : f32 to vector<2x32xf32>
    %591 = arith.addf %589, %590 : vector<2x32xf32>
    %592 = vector.extract_strided_slice %339 {offsets = [12, 0], sizes = [2, 32], strides = [1, 1]} : vector<16x32xf32> to vector<2x32xf32>
    %cst_203 = arith.constant dense<0.000000e+00> : vector<2x32xf32>
    %593 = tpu.matmul %581, %343, %cst_203 {dimension_numbers = #tpu.dot_dimension_numbers<[1], [0], [0], [1], [0, 0, 1, 1], [], []>} : vector<2x32xf32>, vector<32x32xf32>, vector<2x32xf32> -> vector<2x32xf32>
    %594 = arith.addf %592, %593 : vector<2x32xf32>
    %cst_204 = arith.constant 5.000000e-01 : f32
    %595 = vector.broadcast %cst_204 : f32 to vector<2x32xf32>
    %596 = arith.mulf %595, %594 : vector<2x32xf32>
    %597 = math.tanh %596 : vector<2x32xf32>
    %cst_205 = arith.constant 5.000000e-01 : f32
    %598 = vector.broadcast %cst_205 : f32 to vector<2x32xf32>
    %599 = arith.mulf %598, %597 : vector<2x32xf32>
    %cst_206 = arith.constant 5.000000e-01 : f32
    %600 = vector.broadcast %cst_206 : f32 to vector<2x32xf32>
    %601 = arith.addf %599, %600 : vector<2x32xf32>
    %602 = vector.extract_strided_slice %340 {offsets = [12, 0], sizes = [2, 32], strides = [1, 1]} : vector<16x32xf32> to vector<2x32xf32>
    %cst_207 = arith.constant dense<0.000000e+00> : vector<2x32xf32>
    %603 = tpu.matmul %581, %344, %cst_207 {dimension_numbers = #tpu.dot_dimension_numbers<[1], [0], [0], [1], [0, 0, 1, 1], [], []>} : vector<2x32xf32>, vector<32x32xf32>, vector<2x32xf32> -> vector<2x32xf32>
    %604 = arith.addf %602, %603 : vector<2x32xf32>
    %605 = math.tanh %604 : vector<2x32xf32>
    %606 = vector.extract_strided_slice %341 {offsets = [12, 0], sizes = [2, 32], strides = [1, 1]} : vector<16x32xf32> to vector<2x32xf32>
    %cst_208 = arith.constant dense<0.000000e+00> : vector<2x32xf32>
    %607 = tpu.matmul %581, %345, %cst_208 {dimension_numbers = #tpu.dot_dimension_numbers<[1], [0], [0], [1], [0, 0, 1, 1], [], []>} : vector<2x32xf32>, vector<32x32xf32>, vector<2x32xf32> -> vector<2x32xf32>
    %608 = arith.addf %606, %607 : vector<2x32xf32>
    %cst_209 = arith.constant 5.000000e-01 : f32
    %609 = vector.broadcast %cst_209 : f32 to vector<2x32xf32>
    %610 = arith.mulf %609, %608 : vector<2x32xf32>
    %611 = math.tanh %610 : vector<2x32xf32>
    %cst_210 = arith.constant 5.000000e-01 : f32
    %612 = vector.broadcast %cst_210 : f32 to vector<2x32xf32>
    %613 = arith.mulf %612, %611 : vector<2x32xf32>
    %cst_211 = arith.constant 5.000000e-01 : f32
    %614 = vector.broadcast %cst_211 : f32 to vector<2x32xf32>
    %615 = arith.addf %613, %614 : vector<2x32xf32>
    %616 = arith.mulf %601, %579 : vector<2x32xf32>
    %617 = arith.mulf %591, %605 : vector<2x32xf32>
    %618 = arith.addf %616, %617 : vector<2x32xf32>
    %619 = math.tanh %618 : vector<2x32xf32>
    %620 = arith.mulf %615, %619 : vector<2x32xf32>
    %621 = vector.extract_strided_slice %338 {offsets = [14, 0], sizes = [2, 32], strides = [1, 1]} : vector<16x32xf32> to vector<2x32xf32>
    %cst_212 = arith.constant dense<0.000000e+00> : vector<2x32xf32>
    %622 = tpu.matmul %620, %342, %cst_212 {dimension_numbers = #tpu.dot_dimension_numbers<[1], [0], [0], [1], [0, 0, 1, 1], [], []>} : vector<2x32xf32>, vector<32x32xf32>, vector<2x32xf32> -> vector<2x32xf32>
    %623 = arith.addf %621, %622 : vector<2x32xf32>
    %cst_213 = arith.constant 5.000000e-01 : f32
    %624 = vector.broadcast %cst_213 : f32 to vector<2x32xf32>
    %625 = arith.mulf %624, %623 : vector<2x32xf32>
    %626 = math.tanh %625 : vector<2x32xf32>
    %cst_214 = arith.constant 5.000000e-01 : f32
    %627 = vector.broadcast %cst_214 : f32 to vector<2x32xf32>
    %628 = arith.mulf %627, %626 : vector<2x32xf32>
    %cst_215 = arith.constant 5.000000e-01 : f32
    %629 = vector.broadcast %cst_215 : f32 to vector<2x32xf32>
    %630 = arith.addf %628, %629 : vector<2x32xf32>
    %631 = vector.extract_strided_slice %339 {offsets = [14, 0], sizes = [2, 32], strides = [1, 1]} : vector<16x32xf32> to vector<2x32xf32>
    %cst_216 = arith.constant dense<0.000000e+00> : vector<2x32xf32>
    %632 = tpu.matmul %620, %343, %cst_216 {dimension_numbers = #tpu.dot_dimension_numbers<[1], [0], [0], [1], [0, 0, 1, 1], [], []>} : vector<2x32xf32>, vector<32x32xf32>, vector<2x32xf32> -> vector<2x32xf32>
    %633 = arith.addf %631, %632 : vector<2x32xf32>
    %cst_217 = arith.constant 5.000000e-01 : f32
    %634 = vector.broadcast %cst_217 : f32 to vector<2x32xf32>
    %635 = arith.mulf %634, %633 : vector<2x32xf32>
    %636 = math.tanh %635 : vector<2x32xf32>
    %cst_218 = arith.constant 5.000000e-01 : f32
    %637 = vector.broadcast %cst_218 : f32 to vector<2x32xf32>
    %638 = arith.mulf %637, %636 : vector<2x32xf32>
    %cst_219 = arith.constant 5.000000e-01 : f32
    %639 = vector.broadcast %cst_219 : f32 to vector<2x32xf32>
    %640 = arith.addf %638, %639 : vector<2x32xf32>
    %641 = vector.extract_strided_slice %340 {offsets = [14, 0], sizes = [2, 32], strides = [1, 1]} : vector<16x32xf32> to vector<2x32xf32>
    %cst_220 = arith.constant dense<0.000000e+00> : vector<2x32xf32>
    %642 = tpu.matmul %620, %344, %cst_220 {dimension_numbers = #tpu.dot_dimension_numbers<[1], [0], [0], [1], [0, 0, 1, 1], [], []>} : vector<2x32xf32>, vector<32x32xf32>, vector<2x32xf32> -> vector<2x32xf32>
    %643 = arith.addf %641, %642 : vector<2x32xf32>
    %644 = math.tanh %643 : vector<2x32xf32>
    %645 = vector.extract_strided_slice %341 {offsets = [14, 0], sizes = [2, 32], strides = [1, 1]} : vector<16x32xf32> to vector<2x32xf32>
    %cst_221 = arith.constant dense<0.000000e+00> : vector<2x32xf32>
    %646 = tpu.matmul %620, %345, %cst_221 {dimension_numbers = #tpu.dot_dimension_numbers<[1], [0], [0], [1], [0, 0, 1, 1], [], []>} : vector<2x32xf32>, vector<32x32xf32>, vector<2x32xf32> -> vector<2x32xf32>
    %647 = arith.addf %645, %646 : vector<2x32xf32>
    %cst_222 = arith.constant 5.000000e-01 : f32
    %648 = vector.broadcast %cst_222 : f32 to vector<2x32xf32>
    %649 = arith.mulf %648, %647 : vector<2x32xf32>
    %650 = math.tanh %649 : vector<2x32xf32>
    %cst_223 = arith.constant 5.000000e-01 : f32
    %651 = vector.broadcast %cst_223 : f32 to vector<2x32xf32>
    %652 = arith.mulf %651, %650 : vector<2x32xf32>
    %cst_224 = arith.constant 5.000000e-01 : f32
    %653 = vector.broadcast %cst_224 : f32 to vector<2x32xf32>
    %654 = arith.addf %652, %653 : vector<2x32xf32>
    %655 = arith.mulf %640, %618 : vector<2x32xf32>
    %656 = arith.mulf %630, %644 : vector<2x32xf32>
    %657 = arith.addf %655, %656 : vector<2x32xf32>
    %658 = math.tanh %657 : vector<2x32xf32>
    %659 = arith.mulf %654, %658 : vector<2x32xf32>
    %660 = tpu.concatenate %386, %425, %464, %503, %542, %581, %620, %659 in 0 : vector<2x32xf32>, vector<2x32xf32>, vector<2x32xf32>, vector<2x32xf32>, vector<2x32xf32>, vector<2x32xf32>, vector<2x32xf32>, vector<2x32xf32> -> vector<16x32xf32>
    %c0_225 = arith.constant 0 : index
    %c0_226 = arith.constant 0 : index
    %661 = vector.load %arg7[%c0_225, %c0_226] : memref<32x128xf32, #tpu.memory_space<vmem>>, vector<32x128xf32>
    %c0_227 = arith.constant 0 : index
    %c0_228 = arith.constant 0 : index
    %662 = vector.load %arg8[%c0_227, %c0_228] : memref<32x128xf32, #tpu.memory_space<vmem>>, vector<32x128xf32>
    %c0_229 = arith.constant 0 : index
    %c0_230 = arith.constant 0 : index
    %663 = vector.load %arg9[%c0_229, %c0_230] : memref<1x128xf32, #tpu.memory_space<vmem>>, vector<1x128xf32>
    %cst_231 = arith.constant dense<0.000000e+00> : vector<16x128xf32>
    %664 = tpu.matmul %660, %661, %cst_231 {dimension_numbers = #tpu.dot_dimension_numbers<[1], [0], [0], [1], [0, 0, 1, 1], [], []>} : vector<16x32xf32>, vector<32x128xf32>, vector<16x128xf32> -> vector<16x128xf32>
    %665 = vector.broadcast %663 : vector<1x128xf32> to vector<16x128xf32>
    %666 = arith.addf %664, %665 : vector<16x128xf32>
    %667 = vector.extract_strided_slice %666 {offsets = [0, 0], sizes = [16, 32], strides = [1, 1]} : vector<16x128xf32> to vector<16x32xf32>
    %668 = vector.extract_strided_slice %666 {offsets = [0, 32], sizes = [16, 32], strides = [1, 1]} : vector<16x128xf32> to vector<16x32xf32>
    %669 = vector.extract_strided_slice %666 {offsets = [0, 64], sizes = [16, 32], strides = [1, 1]} : vector<16x128xf32> to vector<16x32xf32>
    %670 = vector.extract_strided_slice %666 {offsets = [0, 96], sizes = [16, 32], strides = [1, 1]} : vector<16x128xf32> to vector<16x32xf32>
    %671 = vector.extract_strided_slice %662 {offsets = [0, 0], sizes = [32, 32], strides = [1, 1]} : vector<32x128xf32> to vector<32x32xf32>
    %672 = vector.extract_strided_slice %662 {offsets = [0, 32], sizes = [32, 32], strides = [1, 1]} : vector<32x128xf32> to vector<32x32xf32>
    %673 = vector.extract_strided_slice %662 {offsets = [0, 64], sizes = [32, 32], strides = [1, 1]} : vector<32x128xf32> to vector<32x32xf32>
    %674 = vector.extract_strided_slice %662 {offsets = [0, 96], sizes = [32, 32], strides = [1, 1]} : vector<32x128xf32> to vector<32x32xf32>
    %cst_232 = arith.constant 0.000000e+00 : f32
    %675 = vector.broadcast %cst_232 : f32 to vector<2x32xf32>
    %cst_233 = arith.constant 0.000000e+00 : f32
    %676 = vector.broadcast %cst_233 : f32 to vector<2x32xf32>
    %677 = vector.extract_strided_slice %667 {offsets = [0, 0], sizes = [2, 32], strides = [1, 1]} : vector<16x32xf32> to vector<2x32xf32>
    %cst_234 = arith.constant dense<0.000000e+00> : vector<2x32xf32>
    %678 = tpu.matmul %675, %671, %cst_234 {dimension_numbers = #tpu.dot_dimension_numbers<[1], [0], [0], [1], [0, 0, 1, 1], [], []>} : vector<2x32xf32>, vector<32x32xf32>, vector<2x32xf32> -> vector<2x32xf32>
    %679 = arith.addf %677, %678 : vector<2x32xf32>
    %cst_235 = arith.constant 5.000000e-01 : f32
    %680 = vector.broadcast %cst_235 : f32 to vector<2x32xf32>
    %681 = arith.mulf %680, %679 : vector<2x32xf32>
    %682 = math.tanh %681 : vector<2x32xf32>
    %cst_236 = arith.constant 5.000000e-01 : f32
    %683 = vector.broadcast %cst_236 : f32 to vector<2x32xf32>
    %684 = arith.mulf %683, %682 : vector<2x32xf32>
    %cst_237 = arith.constant 5.000000e-01 : f32
    %685 = vector.broadcast %cst_237 : f32 to vector<2x32xf32>
    %686 = arith.addf %684, %685 : vector<2x32xf32>
    %687 = vector.extract_strided_slice %668 {offsets = [0, 0], sizes = [2, 32], strides = [1, 1]} : vector<16x32xf32> to vector<2x32xf32>
    %cst_238 = arith.constant dense<0.000000e+00> : vector<2x32xf32>
    %688 = tpu.matmul %675, %672, %cst_238 {dimension_numbers = #tpu.dot_dimension_numbers<[1], [0], [0], [1], [0, 0, 1, 1], [], []>} : vector<2x32xf32>, vector<32x32xf32>, vector<2x32xf32> -> vector<2x32xf32>
    %689 = arith.addf %687, %688 : vector<2x32xf32>
    %cst_239 = arith.constant 5.000000e-01 : f32
    %690 = vector.broadcast %cst_239 : f32 to vector<2x32xf32>
    %691 = arith.mulf %690, %689 : vector<2x32xf32>
    %692 = math.tanh %691 : vector<2x32xf32>
    %cst_240 = arith.constant 5.000000e-01 : f32
    %693 = vector.broadcast %cst_240 : f32 to vector<2x32xf32>
    %694 = arith.mulf %693, %692 : vector<2x32xf32>
    %cst_241 = arith.constant 5.000000e-01 : f32
    %695 = vector.broadcast %cst_241 : f32 to vector<2x32xf32>
    %696 = arith.addf %694, %695 : vector<2x32xf32>
    %697 = vector.extract_strided_slice %669 {offsets = [0, 0], sizes = [2, 32], strides = [1, 1]} : vector<16x32xf32> to vector<2x32xf32>
    %cst_242 = arith.constant dense<0.000000e+00> : vector<2x32xf32>
    %698 = tpu.matmul %675, %673, %cst_242 {dimension_numbers = #tpu.dot_dimension_numbers<[1], [0], [0], [1], [0, 0, 1, 1], [], []>} : vector<2x32xf32>, vector<32x32xf32>, vector<2x32xf32> -> vector<2x32xf32>
    %699 = arith.addf %697, %698 : vector<2x32xf32>
    %700 = math.tanh %699 : vector<2x32xf32>
    %701 = vector.extract_strided_slice %670 {offsets = [0, 0], sizes = [2, 32], strides = [1, 1]} : vector<16x32xf32> to vector<2x32xf32>
    %cst_243 = arith.constant dense<0.000000e+00> : vector<2x32xf32>
    %702 = tpu.matmul %675, %674, %cst_243 {dimension_numbers = #tpu.dot_dimension_numbers<[1], [0], [0], [1], [0, 0, 1, 1], [], []>} : vector<2x32xf32>, vector<32x32xf32>, vector<2x32xf32> -> vector<2x32xf32>
    %703 = arith.addf %701, %702 : vector<2x32xf32>
    %cst_244 = arith.constant 5.000000e-01 : f32
    %704 = vector.broadcast %cst_244 : f32 to vector<2x32xf32>
    %705 = arith.mulf %704, %703 : vector<2x32xf32>
    %706 = math.tanh %705 : vector<2x32xf32>
    %cst_245 = arith.constant 5.000000e-01 : f32
    %707 = vector.broadcast %cst_245 : f32 to vector<2x32xf32>
    %708 = arith.mulf %707, %706 : vector<2x32xf32>
    %cst_246 = arith.constant 5.000000e-01 : f32
    %709 = vector.broadcast %cst_246 : f32 to vector<2x32xf32>
    %710 = arith.addf %708, %709 : vector<2x32xf32>
    %711 = arith.mulf %696, %676 : vector<2x32xf32>
    %712 = arith.mulf %686, %700 : vector<2x32xf32>
    %713 = arith.addf %711, %712 : vector<2x32xf32>
    %714 = math.tanh %713 : vector<2x32xf32>
    %715 = arith.mulf %710, %714 : vector<2x32xf32>
    %716 = vector.extract_strided_slice %667 {offsets = [2, 0], sizes = [2, 32], strides = [1, 1]} : vector<16x32xf32> to vector<2x32xf32>
    %cst_247 = arith.constant dense<0.000000e+00> : vector<2x32xf32>
    %717 = tpu.matmul %715, %671, %cst_247 {dimension_numbers = #tpu.dot_dimension_numbers<[1], [0], [0], [1], [0, 0, 1, 1], [], []>} : vector<2x32xf32>, vector<32x32xf32>, vector<2x32xf32> -> vector<2x32xf32>
    %718 = arith.addf %716, %717 : vector<2x32xf32>
    %cst_248 = arith.constant 5.000000e-01 : f32
    %719 = vector.broadcast %cst_248 : f32 to vector<2x32xf32>
    %720 = arith.mulf %719, %718 : vector<2x32xf32>
    %721 = math.tanh %720 : vector<2x32xf32>
    %cst_249 = arith.constant 5.000000e-01 : f32
    %722 = vector.broadcast %cst_249 : f32 to vector<2x32xf32>
    %723 = arith.mulf %722, %721 : vector<2x32xf32>
    %cst_250 = arith.constant 5.000000e-01 : f32
    %724 = vector.broadcast %cst_250 : f32 to vector<2x32xf32>
    %725 = arith.addf %723, %724 : vector<2x32xf32>
    %726 = vector.extract_strided_slice %668 {offsets = [2, 0], sizes = [2, 32], strides = [1, 1]} : vector<16x32xf32> to vector<2x32xf32>
    %cst_251 = arith.constant dense<0.000000e+00> : vector<2x32xf32>
    %727 = tpu.matmul %715, %672, %cst_251 {dimension_numbers = #tpu.dot_dimension_numbers<[1], [0], [0], [1], [0, 0, 1, 1], [], []>} : vector<2x32xf32>, vector<32x32xf32>, vector<2x32xf32> -> vector<2x32xf32>
    %728 = arith.addf %726, %727 : vector<2x32xf32>
    %cst_252 = arith.constant 5.000000e-01 : f32
    %729 = vector.broadcast %cst_252 : f32 to vector<2x32xf32>
    %730 = arith.mulf %729, %728 : vector<2x32xf32>
    %731 = math.tanh %730 : vector<2x32xf32>
    %cst_253 = arith.constant 5.000000e-01 : f32
    %732 = vector.broadcast %cst_253 : f32 to vector<2x32xf32>
    %733 = arith.mulf %732, %731 : vector<2x32xf32>
    %cst_254 = arith.constant 5.000000e-01 : f32
    %734 = vector.broadcast %cst_254 : f32 to vector<2x32xf32>
    %735 = arith.addf %733, %734 : vector<2x32xf32>
    %736 = vector.extract_strided_slice %669 {offsets = [2, 0], sizes = [2, 32], strides = [1, 1]} : vector<16x32xf32> to vector<2x32xf32>
    %cst_255 = arith.constant dense<0.000000e+00> : vector<2x32xf32>
    %737 = tpu.matmul %715, %673, %cst_255 {dimension_numbers = #tpu.dot_dimension_numbers<[1], [0], [0], [1], [0, 0, 1, 1], [], []>} : vector<2x32xf32>, vector<32x32xf32>, vector<2x32xf32> -> vector<2x32xf32>
    %738 = arith.addf %736, %737 : vector<2x32xf32>
    %739 = math.tanh %738 : vector<2x32xf32>
    %740 = vector.extract_strided_slice %670 {offsets = [2, 0], sizes = [2, 32], strides = [1, 1]} : vector<16x32xf32> to vector<2x32xf32>
    %cst_256 = arith.constant dense<0.000000e+00> : vector<2x32xf32>
    %741 = tpu.matmul %715, %674, %cst_256 {dimension_numbers = #tpu.dot_dimension_numbers<[1], [0], [0], [1], [0, 0, 1, 1], [], []>} : vector<2x32xf32>, vector<32x32xf32>, vector<2x32xf32> -> vector<2x32xf32>
    %742 = arith.addf %740, %741 : vector<2x32xf32>
    %cst_257 = arith.constant 5.000000e-01 : f32
    %743 = vector.broadcast %cst_257 : f32 to vector<2x32xf32>
    %744 = arith.mulf %743, %742 : vector<2x32xf32>
    %745 = math.tanh %744 : vector<2x32xf32>
    %cst_258 = arith.constant 5.000000e-01 : f32
    %746 = vector.broadcast %cst_258 : f32 to vector<2x32xf32>
    %747 = arith.mulf %746, %745 : vector<2x32xf32>
    %cst_259 = arith.constant 5.000000e-01 : f32
    %748 = vector.broadcast %cst_259 : f32 to vector<2x32xf32>
    %749 = arith.addf %747, %748 : vector<2x32xf32>
    %750 = arith.mulf %735, %713 : vector<2x32xf32>
    %751 = arith.mulf %725, %739 : vector<2x32xf32>
    %752 = arith.addf %750, %751 : vector<2x32xf32>
    %753 = math.tanh %752 : vector<2x32xf32>
    %754 = arith.mulf %749, %753 : vector<2x32xf32>
    %755 = vector.extract_strided_slice %667 {offsets = [4, 0], sizes = [2, 32], strides = [1, 1]} : vector<16x32xf32> to vector<2x32xf32>
    %cst_260 = arith.constant dense<0.000000e+00> : vector<2x32xf32>
    %756 = tpu.matmul %754, %671, %cst_260 {dimension_numbers = #tpu.dot_dimension_numbers<[1], [0], [0], [1], [0, 0, 1, 1], [], []>} : vector<2x32xf32>, vector<32x32xf32>, vector<2x32xf32> -> vector<2x32xf32>
    %757 = arith.addf %755, %756 : vector<2x32xf32>
    %cst_261 = arith.constant 5.000000e-01 : f32
    %758 = vector.broadcast %cst_261 : f32 to vector<2x32xf32>
    %759 = arith.mulf %758, %757 : vector<2x32xf32>
    %760 = math.tanh %759 : vector<2x32xf32>
    %cst_262 = arith.constant 5.000000e-01 : f32
    %761 = vector.broadcast %cst_262 : f32 to vector<2x32xf32>
    %762 = arith.mulf %761, %760 : vector<2x32xf32>
    %cst_263 = arith.constant 5.000000e-01 : f32
    %763 = vector.broadcast %cst_263 : f32 to vector<2x32xf32>
    %764 = arith.addf %762, %763 : vector<2x32xf32>
    %765 = vector.extract_strided_slice %668 {offsets = [4, 0], sizes = [2, 32], strides = [1, 1]} : vector<16x32xf32> to vector<2x32xf32>
    %cst_264 = arith.constant dense<0.000000e+00> : vector<2x32xf32>
    %766 = tpu.matmul %754, %672, %cst_264 {dimension_numbers = #tpu.dot_dimension_numbers<[1], [0], [0], [1], [0, 0, 1, 1], [], []>} : vector<2x32xf32>, vector<32x32xf32>, vector<2x32xf32> -> vector<2x32xf32>
    %767 = arith.addf %765, %766 : vector<2x32xf32>
    %cst_265 = arith.constant 5.000000e-01 : f32
    %768 = vector.broadcast %cst_265 : f32 to vector<2x32xf32>
    %769 = arith.mulf %768, %767 : vector<2x32xf32>
    %770 = math.tanh %769 : vector<2x32xf32>
    %cst_266 = arith.constant 5.000000e-01 : f32
    %771 = vector.broadcast %cst_266 : f32 to vector<2x32xf32>
    %772 = arith.mulf %771, %770 : vector<2x32xf32>
    %cst_267 = arith.constant 5.000000e-01 : f32
    %773 = vector.broadcast %cst_267 : f32 to vector<2x32xf32>
    %774 = arith.addf %772, %773 : vector<2x32xf32>
    %775 = vector.extract_strided_slice %669 {offsets = [4, 0], sizes = [2, 32], strides = [1, 1]} : vector<16x32xf32> to vector<2x32xf32>
    %cst_268 = arith.constant dense<0.000000e+00> : vector<2x32xf32>
    %776 = tpu.matmul %754, %673, %cst_268 {dimension_numbers = #tpu.dot_dimension_numbers<[1], [0], [0], [1], [0, 0, 1, 1], [], []>} : vector<2x32xf32>, vector<32x32xf32>, vector<2x32xf32> -> vector<2x32xf32>
    %777 = arith.addf %775, %776 : vector<2x32xf32>
    %778 = math.tanh %777 : vector<2x32xf32>
    %779 = vector.extract_strided_slice %670 {offsets = [4, 0], sizes = [2, 32], strides = [1, 1]} : vector<16x32xf32> to vector<2x32xf32>
    %cst_269 = arith.constant dense<0.000000e+00> : vector<2x32xf32>
    %780 = tpu.matmul %754, %674, %cst_269 {dimension_numbers = #tpu.dot_dimension_numbers<[1], [0], [0], [1], [0, 0, 1, 1], [], []>} : vector<2x32xf32>, vector<32x32xf32>, vector<2x32xf32> -> vector<2x32xf32>
    %781 = arith.addf %779, %780 : vector<2x32xf32>
    %cst_270 = arith.constant 5.000000e-01 : f32
    %782 = vector.broadcast %cst_270 : f32 to vector<2x32xf32>
    %783 = arith.mulf %782, %781 : vector<2x32xf32>
    %784 = math.tanh %783 : vector<2x32xf32>
    %cst_271 = arith.constant 5.000000e-01 : f32
    %785 = vector.broadcast %cst_271 : f32 to vector<2x32xf32>
    %786 = arith.mulf %785, %784 : vector<2x32xf32>
    %cst_272 = arith.constant 5.000000e-01 : f32
    %787 = vector.broadcast %cst_272 : f32 to vector<2x32xf32>
    %788 = arith.addf %786, %787 : vector<2x32xf32>
    %789 = arith.mulf %774, %752 : vector<2x32xf32>
    %790 = arith.mulf %764, %778 : vector<2x32xf32>
    %791 = arith.addf %789, %790 : vector<2x32xf32>
    %792 = math.tanh %791 : vector<2x32xf32>
    %793 = arith.mulf %788, %792 : vector<2x32xf32>
    %794 = vector.extract_strided_slice %667 {offsets = [6, 0], sizes = [2, 32], strides = [1, 1]} : vector<16x32xf32> to vector<2x32xf32>
    %cst_273 = arith.constant dense<0.000000e+00> : vector<2x32xf32>
    %795 = tpu.matmul %793, %671, %cst_273 {dimension_numbers = #tpu.dot_dimension_numbers<[1], [0], [0], [1], [0, 0, 1, 1], [], []>} : vector<2x32xf32>, vector<32x32xf32>, vector<2x32xf32> -> vector<2x32xf32>
    %796 = arith.addf %794, %795 : vector<2x32xf32>
    %cst_274 = arith.constant 5.000000e-01 : f32
    %797 = vector.broadcast %cst_274 : f32 to vector<2x32xf32>
    %798 = arith.mulf %797, %796 : vector<2x32xf32>
    %799 = math.tanh %798 : vector<2x32xf32>
    %cst_275 = arith.constant 5.000000e-01 : f32
    %800 = vector.broadcast %cst_275 : f32 to vector<2x32xf32>
    %801 = arith.mulf %800, %799 : vector<2x32xf32>
    %cst_276 = arith.constant 5.000000e-01 : f32
    %802 = vector.broadcast %cst_276 : f32 to vector<2x32xf32>
    %803 = arith.addf %801, %802 : vector<2x32xf32>
    %804 = vector.extract_strided_slice %668 {offsets = [6, 0], sizes = [2, 32], strides = [1, 1]} : vector<16x32xf32> to vector<2x32xf32>
    %cst_277 = arith.constant dense<0.000000e+00> : vector<2x32xf32>
    %805 = tpu.matmul %793, %672, %cst_277 {dimension_numbers = #tpu.dot_dimension_numbers<[1], [0], [0], [1], [0, 0, 1, 1], [], []>} : vector<2x32xf32>, vector<32x32xf32>, vector<2x32xf32> -> vector<2x32xf32>
    %806 = arith.addf %804, %805 : vector<2x32xf32>
    %cst_278 = arith.constant 5.000000e-01 : f32
    %807 = vector.broadcast %cst_278 : f32 to vector<2x32xf32>
    %808 = arith.mulf %807, %806 : vector<2x32xf32>
    %809 = math.tanh %808 : vector<2x32xf32>
    %cst_279 = arith.constant 5.000000e-01 : f32
    %810 = vector.broadcast %cst_279 : f32 to vector<2x32xf32>
    %811 = arith.mulf %810, %809 : vector<2x32xf32>
    %cst_280 = arith.constant 5.000000e-01 : f32
    %812 = vector.broadcast %cst_280 : f32 to vector<2x32xf32>
    %813 = arith.addf %811, %812 : vector<2x32xf32>
    %814 = vector.extract_strided_slice %669 {offsets = [6, 0], sizes = [2, 32], strides = [1, 1]} : vector<16x32xf32> to vector<2x32xf32>
    %cst_281 = arith.constant dense<0.000000e+00> : vector<2x32xf32>
    %815 = tpu.matmul %793, %673, %cst_281 {dimension_numbers = #tpu.dot_dimension_numbers<[1], [0], [0], [1], [0, 0, 1, 1], [], []>} : vector<2x32xf32>, vector<32x32xf32>, vector<2x32xf32> -> vector<2x32xf32>
    %816 = arith.addf %814, %815 : vector<2x32xf32>
    %817 = math.tanh %816 : vector<2x32xf32>
    %818 = vector.extract_strided_slice %670 {offsets = [6, 0], sizes = [2, 32], strides = [1, 1]} : vector<16x32xf32> to vector<2x32xf32>
    %cst_282 = arith.constant dense<0.000000e+00> : vector<2x32xf32>
    %819 = tpu.matmul %793, %674, %cst_282 {dimension_numbers = #tpu.dot_dimension_numbers<[1], [0], [0], [1], [0, 0, 1, 1], [], []>} : vector<2x32xf32>, vector<32x32xf32>, vector<2x32xf32> -> vector<2x32xf32>
    %820 = arith.addf %818, %819 : vector<2x32xf32>
    %cst_283 = arith.constant 5.000000e-01 : f32
    %821 = vector.broadcast %cst_283 : f32 to vector<2x32xf32>
    %822 = arith.mulf %821, %820 : vector<2x32xf32>
    %823 = math.tanh %822 : vector<2x32xf32>
    %cst_284 = arith.constant 5.000000e-01 : f32
    %824 = vector.broadcast %cst_284 : f32 to vector<2x32xf32>
    %825 = arith.mulf %824, %823 : vector<2x32xf32>
    %cst_285 = arith.constant 5.000000e-01 : f32
    %826 = vector.broadcast %cst_285 : f32 to vector<2x32xf32>
    %827 = arith.addf %825, %826 : vector<2x32xf32>
    %828 = arith.mulf %813, %791 : vector<2x32xf32>
    %829 = arith.mulf %803, %817 : vector<2x32xf32>
    %830 = arith.addf %828, %829 : vector<2x32xf32>
    %831 = math.tanh %830 : vector<2x32xf32>
    %832 = arith.mulf %827, %831 : vector<2x32xf32>
    %833 = vector.extract_strided_slice %667 {offsets = [8, 0], sizes = [2, 32], strides = [1, 1]} : vector<16x32xf32> to vector<2x32xf32>
    %cst_286 = arith.constant dense<0.000000e+00> : vector<2x32xf32>
    %834 = tpu.matmul %832, %671, %cst_286 {dimension_numbers = #tpu.dot_dimension_numbers<[1], [0], [0], [1], [0, 0, 1, 1], [], []>} : vector<2x32xf32>, vector<32x32xf32>, vector<2x32xf32> -> vector<2x32xf32>
    %835 = arith.addf %833, %834 : vector<2x32xf32>
    %cst_287 = arith.constant 5.000000e-01 : f32
    %836 = vector.broadcast %cst_287 : f32 to vector<2x32xf32>
    %837 = arith.mulf %836, %835 : vector<2x32xf32>
    %838 = math.tanh %837 : vector<2x32xf32>
    %cst_288 = arith.constant 5.000000e-01 : f32
    %839 = vector.broadcast %cst_288 : f32 to vector<2x32xf32>
    %840 = arith.mulf %839, %838 : vector<2x32xf32>
    %cst_289 = arith.constant 5.000000e-01 : f32
    %841 = vector.broadcast %cst_289 : f32 to vector<2x32xf32>
    %842 = arith.addf %840, %841 : vector<2x32xf32>
    %843 = vector.extract_strided_slice %668 {offsets = [8, 0], sizes = [2, 32], strides = [1, 1]} : vector<16x32xf32> to vector<2x32xf32>
    %cst_290 = arith.constant dense<0.000000e+00> : vector<2x32xf32>
    %844 = tpu.matmul %832, %672, %cst_290 {dimension_numbers = #tpu.dot_dimension_numbers<[1], [0], [0], [1], [0, 0, 1, 1], [], []>} : vector<2x32xf32>, vector<32x32xf32>, vector<2x32xf32> -> vector<2x32xf32>
    %845 = arith.addf %843, %844 : vector<2x32xf32>
    %cst_291 = arith.constant 5.000000e-01 : f32
    %846 = vector.broadcast %cst_291 : f32 to vector<2x32xf32>
    %847 = arith.mulf %846, %845 : vector<2x32xf32>
    %848 = math.tanh %847 : vector<2x32xf32>
    %cst_292 = arith.constant 5.000000e-01 : f32
    %849 = vector.broadcast %cst_292 : f32 to vector<2x32xf32>
    %850 = arith.mulf %849, %848 : vector<2x32xf32>
    %cst_293 = arith.constant 5.000000e-01 : f32
    %851 = vector.broadcast %cst_293 : f32 to vector<2x32xf32>
    %852 = arith.addf %850, %851 : vector<2x32xf32>
    %853 = vector.extract_strided_slice %669 {offsets = [8, 0], sizes = [2, 32], strides = [1, 1]} : vector<16x32xf32> to vector<2x32xf32>
    %cst_294 = arith.constant dense<0.000000e+00> : vector<2x32xf32>
    %854 = tpu.matmul %832, %673, %cst_294 {dimension_numbers = #tpu.dot_dimension_numbers<[1], [0], [0], [1], [0, 0, 1, 1], [], []>} : vector<2x32xf32>, vector<32x32xf32>, vector<2x32xf32> -> vector<2x32xf32>
    %855 = arith.addf %853, %854 : vector<2x32xf32>
    %856 = math.tanh %855 : vector<2x32xf32>
    %857 = vector.extract_strided_slice %670 {offsets = [8, 0], sizes = [2, 32], strides = [1, 1]} : vector<16x32xf32> to vector<2x32xf32>
    %cst_295 = arith.constant dense<0.000000e+00> : vector<2x32xf32>
    %858 = tpu.matmul %832, %674, %cst_295 {dimension_numbers = #tpu.dot_dimension_numbers<[1], [0], [0], [1], [0, 0, 1, 1], [], []>} : vector<2x32xf32>, vector<32x32xf32>, vector<2x32xf32> -> vector<2x32xf32>
    %859 = arith.addf %857, %858 : vector<2x32xf32>
    %cst_296 = arith.constant 5.000000e-01 : f32
    %860 = vector.broadcast %cst_296 : f32 to vector<2x32xf32>
    %861 = arith.mulf %860, %859 : vector<2x32xf32>
    %862 = math.tanh %861 : vector<2x32xf32>
    %cst_297 = arith.constant 5.000000e-01 : f32
    %863 = vector.broadcast %cst_297 : f32 to vector<2x32xf32>
    %864 = arith.mulf %863, %862 : vector<2x32xf32>
    %cst_298 = arith.constant 5.000000e-01 : f32
    %865 = vector.broadcast %cst_298 : f32 to vector<2x32xf32>
    %866 = arith.addf %864, %865 : vector<2x32xf32>
    %867 = arith.mulf %852, %830 : vector<2x32xf32>
    %868 = arith.mulf %842, %856 : vector<2x32xf32>
    %869 = arith.addf %867, %868 : vector<2x32xf32>
    %870 = math.tanh %869 : vector<2x32xf32>
    %871 = arith.mulf %866, %870 : vector<2x32xf32>
    %872 = vector.extract_strided_slice %667 {offsets = [10, 0], sizes = [2, 32], strides = [1, 1]} : vector<16x32xf32> to vector<2x32xf32>
    %cst_299 = arith.constant dense<0.000000e+00> : vector<2x32xf32>
    %873 = tpu.matmul %871, %671, %cst_299 {dimension_numbers = #tpu.dot_dimension_numbers<[1], [0], [0], [1], [0, 0, 1, 1], [], []>} : vector<2x32xf32>, vector<32x32xf32>, vector<2x32xf32> -> vector<2x32xf32>
    %874 = arith.addf %872, %873 : vector<2x32xf32>
    %cst_300 = arith.constant 5.000000e-01 : f32
    %875 = vector.broadcast %cst_300 : f32 to vector<2x32xf32>
    %876 = arith.mulf %875, %874 : vector<2x32xf32>
    %877 = math.tanh %876 : vector<2x32xf32>
    %cst_301 = arith.constant 5.000000e-01 : f32
    %878 = vector.broadcast %cst_301 : f32 to vector<2x32xf32>
    %879 = arith.mulf %878, %877 : vector<2x32xf32>
    %cst_302 = arith.constant 5.000000e-01 : f32
    %880 = vector.broadcast %cst_302 : f32 to vector<2x32xf32>
    %881 = arith.addf %879, %880 : vector<2x32xf32>
    %882 = vector.extract_strided_slice %668 {offsets = [10, 0], sizes = [2, 32], strides = [1, 1]} : vector<16x32xf32> to vector<2x32xf32>
    %cst_303 = arith.constant dense<0.000000e+00> : vector<2x32xf32>
    %883 = tpu.matmul %871, %672, %cst_303 {dimension_numbers = #tpu.dot_dimension_numbers<[1], [0], [0], [1], [0, 0, 1, 1], [], []>} : vector<2x32xf32>, vector<32x32xf32>, vector<2x32xf32> -> vector<2x32xf32>
    %884 = arith.addf %882, %883 : vector<2x32xf32>
    %cst_304 = arith.constant 5.000000e-01 : f32
    %885 = vector.broadcast %cst_304 : f32 to vector<2x32xf32>
    %886 = arith.mulf %885, %884 : vector<2x32xf32>
    %887 = math.tanh %886 : vector<2x32xf32>
    %cst_305 = arith.constant 5.000000e-01 : f32
    %888 = vector.broadcast %cst_305 : f32 to vector<2x32xf32>
    %889 = arith.mulf %888, %887 : vector<2x32xf32>
    %cst_306 = arith.constant 5.000000e-01 : f32
    %890 = vector.broadcast %cst_306 : f32 to vector<2x32xf32>
    %891 = arith.addf %889, %890 : vector<2x32xf32>
    %892 = vector.extract_strided_slice %669 {offsets = [10, 0], sizes = [2, 32], strides = [1, 1]} : vector<16x32xf32> to vector<2x32xf32>
    %cst_307 = arith.constant dense<0.000000e+00> : vector<2x32xf32>
    %893 = tpu.matmul %871, %673, %cst_307 {dimension_numbers = #tpu.dot_dimension_numbers<[1], [0], [0], [1], [0, 0, 1, 1], [], []>} : vector<2x32xf32>, vector<32x32xf32>, vector<2x32xf32> -> vector<2x32xf32>
    %894 = arith.addf %892, %893 : vector<2x32xf32>
    %895 = math.tanh %894 : vector<2x32xf32>
    %896 = vector.extract_strided_slice %670 {offsets = [10, 0], sizes = [2, 32], strides = [1, 1]} : vector<16x32xf32> to vector<2x32xf32>
    %cst_308 = arith.constant dense<0.000000e+00> : vector<2x32xf32>
    %897 = tpu.matmul %871, %674, %cst_308 {dimension_numbers = #tpu.dot_dimension_numbers<[1], [0], [0], [1], [0, 0, 1, 1], [], []>} : vector<2x32xf32>, vector<32x32xf32>, vector<2x32xf32> -> vector<2x32xf32>
    %898 = arith.addf %896, %897 : vector<2x32xf32>
    %cst_309 = arith.constant 5.000000e-01 : f32
    %899 = vector.broadcast %cst_309 : f32 to vector<2x32xf32>
    %900 = arith.mulf %899, %898 : vector<2x32xf32>
    %901 = math.tanh %900 : vector<2x32xf32>
    %cst_310 = arith.constant 5.000000e-01 : f32
    %902 = vector.broadcast %cst_310 : f32 to vector<2x32xf32>
    %903 = arith.mulf %902, %901 : vector<2x32xf32>
    %cst_311 = arith.constant 5.000000e-01 : f32
    %904 = vector.broadcast %cst_311 : f32 to vector<2x32xf32>
    %905 = arith.addf %903, %904 : vector<2x32xf32>
    %906 = arith.mulf %891, %869 : vector<2x32xf32>
    %907 = arith.mulf %881, %895 : vector<2x32xf32>
    %908 = arith.addf %906, %907 : vector<2x32xf32>
    %909 = math.tanh %908 : vector<2x32xf32>
    %910 = arith.mulf %905, %909 : vector<2x32xf32>
    %911 = vector.extract_strided_slice %667 {offsets = [12, 0], sizes = [2, 32], strides = [1, 1]} : vector<16x32xf32> to vector<2x32xf32>
    %cst_312 = arith.constant dense<0.000000e+00> : vector<2x32xf32>
    %912 = tpu.matmul %910, %671, %cst_312 {dimension_numbers = #tpu.dot_dimension_numbers<[1], [0], [0], [1], [0, 0, 1, 1], [], []>} : vector<2x32xf32>, vector<32x32xf32>, vector<2x32xf32> -> vector<2x32xf32>
    %913 = arith.addf %911, %912 : vector<2x32xf32>
    %cst_313 = arith.constant 5.000000e-01 : f32
    %914 = vector.broadcast %cst_313 : f32 to vector<2x32xf32>
    %915 = arith.mulf %914, %913 : vector<2x32xf32>
    %916 = math.tanh %915 : vector<2x32xf32>
    %cst_314 = arith.constant 5.000000e-01 : f32
    %917 = vector.broadcast %cst_314 : f32 to vector<2x32xf32>
    %918 = arith.mulf %917, %916 : vector<2x32xf32>
    %cst_315 = arith.constant 5.000000e-01 : f32
    %919 = vector.broadcast %cst_315 : f32 to vector<2x32xf32>
    %920 = arith.addf %918, %919 : vector<2x32xf32>
    %921 = vector.extract_strided_slice %668 {offsets = [12, 0], sizes = [2, 32], strides = [1, 1]} : vector<16x32xf32> to vector<2x32xf32>
    %cst_316 = arith.constant dense<0.000000e+00> : vector<2x32xf32>
    %922 = tpu.matmul %910, %672, %cst_316 {dimension_numbers = #tpu.dot_dimension_numbers<[1], [0], [0], [1], [0, 0, 1, 1], [], []>} : vector<2x32xf32>, vector<32x32xf32>, vector<2x32xf32> -> vector<2x32xf32>
    %923 = arith.addf %921, %922 : vector<2x32xf32>
    %cst_317 = arith.constant 5.000000e-01 : f32
    %924 = vector.broadcast %cst_317 : f32 to vector<2x32xf32>
    %925 = arith.mulf %924, %923 : vector<2x32xf32>
    %926 = math.tanh %925 : vector<2x32xf32>
    %cst_318 = arith.constant 5.000000e-01 : f32
    %927 = vector.broadcast %cst_318 : f32 to vector<2x32xf32>
    %928 = arith.mulf %927, %926 : vector<2x32xf32>
    %cst_319 = arith.constant 5.000000e-01 : f32
    %929 = vector.broadcast %cst_319 : f32 to vector<2x32xf32>
    %930 = arith.addf %928, %929 : vector<2x32xf32>
    %931 = vector.extract_strided_slice %669 {offsets = [12, 0], sizes = [2, 32], strides = [1, 1]} : vector<16x32xf32> to vector<2x32xf32>
    %cst_320 = arith.constant dense<0.000000e+00> : vector<2x32xf32>
    %932 = tpu.matmul %910, %673, %cst_320 {dimension_numbers = #tpu.dot_dimension_numbers<[1], [0], [0], [1], [0, 0, 1, 1], [], []>} : vector<2x32xf32>, vector<32x32xf32>, vector<2x32xf32> -> vector<2x32xf32>
    %933 = arith.addf %931, %932 : vector<2x32xf32>
    %934 = math.tanh %933 : vector<2x32xf32>
    %935 = vector.extract_strided_slice %670 {offsets = [12, 0], sizes = [2, 32], strides = [1, 1]} : vector<16x32xf32> to vector<2x32xf32>
    %cst_321 = arith.constant dense<0.000000e+00> : vector<2x32xf32>
    %936 = tpu.matmul %910, %674, %cst_321 {dimension_numbers = #tpu.dot_dimension_numbers<[1], [0], [0], [1], [0, 0, 1, 1], [], []>} : vector<2x32xf32>, vector<32x32xf32>, vector<2x32xf32> -> vector<2x32xf32>
    %937 = arith.addf %935, %936 : vector<2x32xf32>
    %cst_322 = arith.constant 5.000000e-01 : f32
    %938 = vector.broadcast %cst_322 : f32 to vector<2x32xf32>
    %939 = arith.mulf %938, %937 : vector<2x32xf32>
    %940 = math.tanh %939 : vector<2x32xf32>
    %cst_323 = arith.constant 5.000000e-01 : f32
    %941 = vector.broadcast %cst_323 : f32 to vector<2x32xf32>
    %942 = arith.mulf %941, %940 : vector<2x32xf32>
    %cst_324 = arith.constant 5.000000e-01 : f32
    %943 = vector.broadcast %cst_324 : f32 to vector<2x32xf32>
    %944 = arith.addf %942, %943 : vector<2x32xf32>
    %945 = arith.mulf %930, %908 : vector<2x32xf32>
    %946 = arith.mulf %920, %934 : vector<2x32xf32>
    %947 = arith.addf %945, %946 : vector<2x32xf32>
    %948 = math.tanh %947 : vector<2x32xf32>
    %949 = arith.mulf %944, %948 : vector<2x32xf32>
    %950 = vector.extract_strided_slice %667 {offsets = [14, 0], sizes = [2, 32], strides = [1, 1]} : vector<16x32xf32> to vector<2x32xf32>
    %cst_325 = arith.constant dense<0.000000e+00> : vector<2x32xf32>
    %951 = tpu.matmul %949, %671, %cst_325 {dimension_numbers = #tpu.dot_dimension_numbers<[1], [0], [0], [1], [0, 0, 1, 1], [], []>} : vector<2x32xf32>, vector<32x32xf32>, vector<2x32xf32> -> vector<2x32xf32>
    %952 = arith.addf %950, %951 : vector<2x32xf32>
    %cst_326 = arith.constant 5.000000e-01 : f32
    %953 = vector.broadcast %cst_326 : f32 to vector<2x32xf32>
    %954 = arith.mulf %953, %952 : vector<2x32xf32>
    %955 = math.tanh %954 : vector<2x32xf32>
    %cst_327 = arith.constant 5.000000e-01 : f32
    %956 = vector.broadcast %cst_327 : f32 to vector<2x32xf32>
    %957 = arith.mulf %956, %955 : vector<2x32xf32>
    %cst_328 = arith.constant 5.000000e-01 : f32
    %958 = vector.broadcast %cst_328 : f32 to vector<2x32xf32>
    %959 = arith.addf %957, %958 : vector<2x32xf32>
    %960 = vector.extract_strided_slice %668 {offsets = [14, 0], sizes = [2, 32], strides = [1, 1]} : vector<16x32xf32> to vector<2x32xf32>
    %cst_329 = arith.constant dense<0.000000e+00> : vector<2x32xf32>
    %961 = tpu.matmul %949, %672, %cst_329 {dimension_numbers = #tpu.dot_dimension_numbers<[1], [0], [0], [1], [0, 0, 1, 1], [], []>} : vector<2x32xf32>, vector<32x32xf32>, vector<2x32xf32> -> vector<2x32xf32>
    %962 = arith.addf %960, %961 : vector<2x32xf32>
    %cst_330 = arith.constant 5.000000e-01 : f32
    %963 = vector.broadcast %cst_330 : f32 to vector<2x32xf32>
    %964 = arith.mulf %963, %962 : vector<2x32xf32>
    %965 = math.tanh %964 : vector<2x32xf32>
    %cst_331 = arith.constant 5.000000e-01 : f32
    %966 = vector.broadcast %cst_331 : f32 to vector<2x32xf32>
    %967 = arith.mulf %966, %965 : vector<2x32xf32>
    %cst_332 = arith.constant 5.000000e-01 : f32
    %968 = vector.broadcast %cst_332 : f32 to vector<2x32xf32>
    %969 = arith.addf %967, %968 : vector<2x32xf32>
    %970 = vector.extract_strided_slice %669 {offsets = [14, 0], sizes = [2, 32], strides = [1, 1]} : vector<16x32xf32> to vector<2x32xf32>
    %cst_333 = arith.constant dense<0.000000e+00> : vector<2x32xf32>
    %971 = tpu.matmul %949, %673, %cst_333 {dimension_numbers = #tpu.dot_dimension_numbers<[1], [0], [0], [1], [0, 0, 1, 1], [], []>} : vector<2x32xf32>, vector<32x32xf32>, vector<2x32xf32> -> vector<2x32xf32>
    %972 = arith.addf %970, %971 : vector<2x32xf32>
    %973 = math.tanh %972 : vector<2x32xf32>
    %974 = vector.extract_strided_slice %670 {offsets = [14, 0], sizes = [2, 32], strides = [1, 1]} : vector<16x32xf32> to vector<2x32xf32>
    %cst_334 = arith.constant dense<0.000000e+00> : vector<2x32xf32>
    %975 = tpu.matmul %949, %674, %cst_334 {dimension_numbers = #tpu.dot_dimension_numbers<[1], [0], [0], [1], [0, 0, 1, 1], [], []>} : vector<2x32xf32>, vector<32x32xf32>, vector<2x32xf32> -> vector<2x32xf32>
    %976 = arith.addf %974, %975 : vector<2x32xf32>
    %cst_335 = arith.constant 5.000000e-01 : f32
    %977 = vector.broadcast %cst_335 : f32 to vector<2x32xf32>
    %978 = arith.mulf %977, %976 : vector<2x32xf32>
    %979 = math.tanh %978 : vector<2x32xf32>
    %cst_336 = arith.constant 5.000000e-01 : f32
    %980 = vector.broadcast %cst_336 : f32 to vector<2x32xf32>
    %981 = arith.mulf %980, %979 : vector<2x32xf32>
    %cst_337 = arith.constant 5.000000e-01 : f32
    %982 = vector.broadcast %cst_337 : f32 to vector<2x32xf32>
    %983 = arith.addf %981, %982 : vector<2x32xf32>
    %984 = arith.mulf %969, %947 : vector<2x32xf32>
    %985 = arith.mulf %959, %973 : vector<2x32xf32>
    %986 = arith.addf %984, %985 : vector<2x32xf32>
    %987 = math.tanh %986 : vector<2x32xf32>
    %988 = arith.mulf %983, %987 : vector<2x32xf32>
    %c0_338 = arith.constant 0 : index
    %c0_339 = arith.constant 0 : index
    %989 = vector.load %arg10[%c0_338, %c0_339] : memref<32x1xf32, #tpu.memory_space<vmem>>, vector<32x1xf32>
    %cst_340 = arith.constant dense<0.000000e+00> : vector<2x1xf32>
    %990 = tpu.matmul %988, %989, %cst_340 {dimension_numbers = #tpu.dot_dimension_numbers<[1], [0], [0], [1], [0, 0, 1, 1], [], []>} : vector<2x32xf32>, vector<32x1xf32>, vector<2x1xf32> -> vector<2x1xf32>
    %c0_341 = arith.constant 0 : index
    %c0_342 = arith.constant 0 : index
    %991 = vector.load %arg11[%c0_341, %c0_342] : memref<1x1xf32, #tpu.memory_space<vmem>>, vector<1x1xf32>
    %992 = vector.broadcast %991 : vector<1x1xf32> to vector<2x1xf32>
    %993 = arith.addf %990, %992 : vector<2x1xf32>
    %c0_343 = arith.constant 0 : index
    %c0_344 = arith.constant 0 : index
    %994 = vector.load %arg12[%c0_343, %c0_344] : memref<2x1xf32, #tpu.memory_space<vmem>>, vector<2x1xf32>
    tpu.vector_store %arg12[%c0_343, %c0_344], %993 {strides = array<i32>} : memref<2x1xf32, #tpu.memory_space<vmem>>, vector<2x1xf32>,
    return
  }
}

</mosaic_0001>

<llo_original>
// kernel: stock_lstm_forward.1
$region0: #{stock_lstm_forward.1}
  #allocation0 [shape = 'u32[]', space=smem, size = 0x4, offset = 0x4, fixed_abs, tag = 'smem constant byte address 0x4 - core index']
  #allocation1 [shape = 'u32[72,128]{1,0:T(1,128)}', space=vmem, size = 0x9000, scoped, tag = 'internal scratch']
  #allocation2 [shape = 'f32[1,1]{1,0:T(1,128)S(1)}', space=vmem, size = 0x200, scoped, tag = 'scoped memory for stock_lstm_forward.1']
  %s0 = inlined_call_operand.vmem [shape: f32[16,1], index: 0, kind: input, shape index: {}]
  %s1 = inlined_call_operand.vmem [shape: f32[1,128], index: 1, kind: input, shape index: {}]
  %s2 = inlined_call_operand.hbm [shape: f32[32,128], index: 2, kind: input, shape index: {}]
  %s3 = inlined_call_operand.vmem [shape: f32[1,128], index: 3, kind: input, shape index: {}]
  %s4 = inlined_call_operand.hbm [shape: f32[32,128], index: 4, kind: input, shape index: {}]
  %s5 = inlined_call_operand.hbm [shape: f32[32,128], index: 5, kind: input, shape index: {}]
  %s6 = inlined_call_operand.vmem [shape: f32[1,128], index: 6, kind: input, shape index: {}]
  %s7 = inlined_call_operand.hbm [shape: f32[32,128], index: 7, kind: input, shape index: {}]
  %s8 = inlined_call_operand.hbm [shape: f32[32,128], index: 8, kind: input, shape index: {}]
  %s9 = inlined_call_operand.vmem [shape: f32[1,128], index: 9, kind: input, shape index: {}]
  %s10 = inlined_call_operand.vmem [shape: f32[32,1], index: 10, kind: input, shape index: {}]
  %s11 = inlined_call_operand.<no memory space> [shape: f32[1,1], index: 11, kind: input, shape index: {}]
  %s12 = inlined_call_operand.vmem [shape: f32[2,1], index: 12, kind: output, shape index: {}]
  %s13 = sld [smem:[#allocation0]]
  $region78: #{stock_lstm_forward.1} parent=0
    _
  %s15 = ssub.s32 1, %s13
  %s16 = scalar_select 0, %s15, %s13
  %v17 = vstv %s11
  %18 = vst [vmem:[#allocation2] sm:$0x1] %v17
  $region1: #{stock_lstm_forward.1} parent=0
    #allocation3 [shape = 'u8[16384]{0}', space=vmem, size = 0x4000, scoped, tag = 'input window, operand 2, single buffered']
    #allocation4 [shape = 's32[1]{0}', space=sflag, size = 0x4, scoped, tag = 'scoped memory for stock_lstm_forward.1']
    #allocation5 [shape = 'u8[16384]{0}', space=vmem, size = 0x4000, scoped, tag = 'input window, operand 4, single buffered']
    #allocation6 [shape = 's32[1]{0}', space=sflag, size = 0x4, scoped, tag = 'scoped memory for stock_lstm_forward.1']
    #allocation7 [shape = 'u8[16384]{0}', space=vmem, size = 0x4000, scoped, tag = 'input window, operand 5, single buffered']
    #allocation8 [shape = 'u8[16384]{0}', space=vmem, size = 0x4000, scoped, tag = 'input window, operand 7, single buffered']
    #allocation9 [shape = 's32[1]{0}', space=sflag, size = 0x4, scoped, tag = 'scoped memory for stock_lstm_forward.1']
    #allocation10 [shape = 'u8[16384]{0}', space=vmem, size = 0x4000, scoped, tag = 'input window, operand 8, single buffered']
    %19 = vsyncpa [#allocation4], 0
    %20 = vsyncpa [#allocation6], 0
    %21 = vsyncpa [#allocation9], 0
    // Predicated region
    $region2: #{stock_lstm_forward.1} parent=1 // pred_check
      _
    $region3: #{stock_lstm_forward.1} parent=1 // pred_check_branch
      %23 = sbr.rel (0) target = $region5
    $region4: #{stock_lstm_forward.1} parent=1 // pred_region
      _
    $region5: #{stock_lstm_forward.1} parent=1 // pred_fallthru
      _
    // Predicated region
    $region6: #{stock_lstm_forward.1} parent=1 // pred_check
      _
    $region7: #{stock_lstm_forward.1} parent=1 // pred_check_branch
      %25 = sbr.rel (0) target = $region9
    $region8: #{stock_lstm_forward.1} parent=1 // pred_region
      _
    $region9: #{stock_lstm_forward.1} parent=1 // pred_fallthru
      _
    // Predicated region
    $region10: #{stock_lstm_forward.1} parent=1 // pred_check
      _
    $region11: #{stock_lstm_forward.1} parent=1 // pred_check_branch
      %27 = sbr.rel (0) target = $region13
    $region12: #{stock_lstm_forward.1} parent=1 // pred_region
      %29 = vsyncadd [#allocation4], 0
      %s30 = sshll.u32 %s2, 4
      %s31 = int_to_ptr.hbm [resolvable:$true] %s30
      %s32 = sshll.u32 [#allocation3], 4
      %s33 = int_to_ptr.vmem [resolvable:$true] %s32
      %38 = dma.hbm_to_vmem [thread:$0]  %s31, 512, %s33, [#allocation4], 128, 128, 8
    $region13: #{stock_lstm_forward.1} parent=1 // pred_fallthru
      _
    // Predicated region
    $region14: #{stock_lstm_forward.1} parent=1 // pred_check
      _
    $region15: #{stock_lstm_forward.1} parent=1 // pred_check_branch
      %40 = sbr.rel (0) target = $region17
    $region16: #{stock_lstm_forward.1} parent=1 // pred_region
      _
    $region17: #{stock_lstm_forward.1} parent=1 // pred_fallthru
      _
    // Predicated region
    $region18: #{stock_lstm_forward.1} parent=1 // pred_check
      _
    $region19: #{stock_lstm_forward.1} parent=1 // pred_check_branch
      %42 = sbr.rel (0) target = $region21
    $region20: #{stock_lstm_forward.1} parent=1 // pred_region
      %44 = vsyncadd [#allocation6], 0
      %s45 = sshll.u32 %s4, 4
      %s46 = int_to_ptr.hbm [resolvable:$true] %s45
      %s47 = sshll.u32 [#allocation5], 4
      %s48 = int_to_ptr.vmem [resolvable:$true] %s47
      %53 = dma.hbm_to_vmem [thread:$0]  %s46, 512, %s48, [#allocation6], 128, 128, 8
    $region21: #{stock_lstm_forward.1} parent=1 // pred_fallthru
      _
    // Predicated region
    $region22: #{stock_lstm_forward.1} parent=1 // pred_check
      _
    $region23: #{stock_lstm_forward.1} parent=1 // pred_check_branch
      %55 = sbr.rel (0) target = $region25
    $region24: #{stock_lstm_forward.1} parent=1 // pred_region
      %57 = vsyncadd [#allocation6], 0
      %s58 = sshll.u32 %s5, 4
      %s59 = int_to_ptr.hbm [resolvable:$true] %s58
      %s60 = sshll.u32 [#allocation7], 4
      %s61 = int_to_ptr.vmem [resolvable:$true] %s60
      %66 = dma.hbm_to_vmem [thread:$0]  %s59, 512, %s61, [#allocation6], 128, 128, 8
    $region25: #{stock_lstm_forward.1} parent=1 // pred_fallthru
      _
    // Predicated region
    $region26: #{stock_lstm_forward.1} parent=1 // pred_check
      _
    $region27: #{stock_lstm_forward.1} parent=1 // pred_check_branch
      %68 = sbr.rel (0) target = $region29
    $region28: #{stock_lstm_forward.1} parent=1 // pred_region
      _
    $region29: #{stock_lstm_forward.1} parent=1 // pred_fallthru
      _
    // Predicated region
    $region30: #{stock_lstm_forward.1} parent=1 // pred_check
      _
    $region31: #{stock_lstm_forward.1} parent=1 // pred_check_branch
      %70 = sbr.rel (0) target = $region33
    $region32: #{stock_lstm_forward.1} parent=1 // pred_region
      %72 = vsyncadd [#allocation9], 0
      %s73 = sshll.u32 %s7, 4
      %s74 = int_to_ptr.hbm [resolvable:$true] %s73
      %s75 = sshll.u32 [#allocation8], 4
      %s76 = int_to_ptr.vmem [resolvable:$true] %s75
      %81 = dma.hbm_to_vmem [thread:$0]  %s74, 512, %s76, [#allocation9], 128, 128, 8
    $region33: #{stock_lstm_forward.1} parent=1 // pred_fallthru
      _
    // Predicated region
    $region34: #{stock_lstm_forward.1} parent=1 // pred_check
      _
    $region35: #{stock_lstm_forward.1} parent=1 // pred_check_branch
      %83 = sbr.rel (0) target = $region37
    $region36: #{stock_lstm_forward.1} parent=1 // pred_region
      %85 = vsyncadd [#allocation9], 0
      %s86 = sshll.u32 %s8, 4
      %s87 = int_to_ptr.hbm [resolvable:$true] %s86
      %s88 = sshll.u32 [#allocation10], 4
      %s89 = int_to_ptr.vmem [resolvable:$true] %s88
      %94 = dma.hbm_to_vmem [thread:$0]  %s87, 512, %s89, [#allocation9], 128, 128, 8
    $region37: #{stock_lstm_forward.1} parent=1 // pred_fallthru
      _
    // Predicated region
    $region38: #{stock_lstm_forward.1} parent=1 // pred_check
      _
    $region39: #{stock_lstm_forward.1} parent=1 // pred_check_branch
      %96 = sbr.rel (0) target = $region41
    $region40: #{stock_lstm_forward.1} parent=1 // pred_region
      _
    $region41: #{stock_lstm_forward.1} parent=1 // pred_fallthru
      _
    // Predicated region
    $region42: #{stock_lstm_forward.1} parent=1 // pred_check
      _
    $region43: #{stock_lstm_forward.1} parent=1 // pred_check_branch
      %98 = sbr.rel (0) target = $region45
    $region44: #{stock_lstm_forward.1} parent=1 // pred_region
      _
    $region45: #{stock_lstm_forward.1} parent=1 // pred_fallthru
      _
    // Predicated region
    $region46: #{stock_lstm_forward.1} parent=1 // pred_check
      _
    $region47: #{stock_lstm_forward.1} parent=1 // pred_check_branch
      %100 = sbr.rel (0) target = $region49
    $region48: #{stock_lstm_forward.1} parent=1 // pred_region
      _
    $region49: #{stock_lstm_forward.1} parent=1 // pred_fallthru
      _
    // Predicated region
    $region50: #{stock_lstm_forward.1} parent=1 // pred_check
      _
    $region51: #{stock_lstm_forward.1} parent=1 // pred_check_branch
      %102 = sbr.rel (0) target = $region53
    $region52: #{stock_lstm_forward.1} parent=1 // pred_region
      %104 = dma.done [#allocation4], 512
    $region53: #{stock_lstm_forward.1} parent=1 // pred_fallthru
      _
    // Predicated region
    $region54: #{stock_lstm_forward.1} parent=1 // pred_check
      _
    $region55: #{stock_lstm_forward.1} parent=1 // pred_check_branch
      %106 = sbr.rel (0) target = $region57
    $region56: #{stock_lstm_forward.1} parent=1 // pred_region
      %108 = dma.done [#allocation6], 512
    $region57: #{stock_lstm_forward.1} parent=1 // pred_fallthru
      _
    // Predicated region
    $region58: #{stock_lstm_forward.1} parent=1 // pred_check
      _
    $region59: #{stock_lstm_forward.1} parent=1 // pred_check_branch
      %110 = sbr.rel (0) target = $region61
    $region60: #{stock_lstm_forward.1} parent=1 // pred_region
      %112 = dma.done [#allocation6], 512
    $region61: #{stock_lstm_forward.1} parent=1 // pred_fallthru
      _
    // Predicated region
    $region62: #{stock_lstm_forward.1} parent=1 // pred_check
      _
    $region63: #{stock_lstm_forward.1} parent=1 // pred_check_branch
      %114 = sbr.rel (0) target = $region65
    $region64: #{stock_lstm_forward.1} parent=1 // pred_region
      %116 = dma.done [#allocation9], 512
    $region65: #{stock_lstm_forward.1} parent=1 // pred_fallthru
      _
    // Predicated region
    $region66: #{stock_lstm_forward.1} parent=1 // pred_check
      _
    $region67: #{stock_lstm_forward.1} parent=1 // pred_check_branch
      %118 = sbr.rel (0) target = $region69
    $region68: #{stock_lstm_forward.1} parent=1 // pred_region
      %120 = dma.done [#allocation9], 512
    $region69: #{stock_lstm_forward.1} parent=1 // pred_fallthru
      _
    %v121 = vld [vmem:[%s0] sm:$0xff]
    %v122 = vld [vmem:[%s0 + $0x8] sm:$0xff]
    %v123 = vld [vmem:[%s1] sm:$0x1]
    %v124 = vld [vmem:[#allocation3] sm:$0xff]
    %v125 = vld [vmem:[#allocation3 + $0x8] sm:$0xff]
    %v126 = vld [vmem:[#allocation3 + $0x10] sm:$0xff]
    %v127 = vld [vmem:[#allocation3 + $0x18] sm:$0xff]
    %v128 = vld [vmem:[%s3] sm:$0x1]
    %130 = vset.pattern.permute.xlu0 0
    %131 = vperm.xlu0 %130, %v121
    %v132 = vpop.permute.xlu0 %131
    %135 = vset.pattern.permute.xlu0 0
    %136 = vperm.xlu0 %135, %v122
    %v137 = vpop.permute.xlu0 %136
    %v140 = vperm.slane %v123, 0
    %v142 = vmul.f32 %v132, %v140
    %v143 = vmul.f32 %v137, %v140
    %v145 = vperm.slane %v128, 0
    %v147 = vadd.f32 %v142, %v145
    %v148 = vadd.f32 %v143, %v145
    %vm149 = vcmask 261120
    %v151 = vsel %vm149, 0.0, 0
    %153 = vmatpush.msra.mxu0 0.0
    %154 = vmatpush.msra.mxu0 0.0
    %155 = vmatpush.msra.mxu0 0.0
    %156 = vmatpush.msra.mxu0 0.0
    %157 = vmatpush.msra.mxu0 0.0
    %158 = vmatpush.msra.mxu0 0.0
    %159 = vmatpush.msra.mxu0 0.0
    %160 = vmatpush.msra.mxu0 0.0
    %161 = vmatpush.msra.mxu0 0.0
    %162 = vmatpush.msra.mxu0 0.0
    %163 = vmatpush.msra.mxu0 0.0
    %164 = vmatpush.msra.mxu0 0.0
    %165 = vmatpush.msra.mxu0 %v127
    %166 = vmatpush.msra.mxu0 %v126
    %167 = vmatpush.msra.mxu0 %v125
    %168 = vmatpush.msra.mxu0 %v124
    %169 = vmatmul.f32.gmra.mxu0 %v151
    %v170 = vpop.f32.mrf.mxu0
    %v171 = vadd.f32 0.0, %v170
    %172 = vdwg.mxu0
    %v173 = vadd.f32 %v147, %v171
    %v174 = vmul.f32 %v173, 0.5
    %v175 = vtanh.pop %v174
    %v176 = vmul.f32 %v175, 0.5
    %v177 = vadd.f32 %v176, 0.5
    %182 = vrot.lane.b32.xlu0 %v124, 96
    %v183 = vpop.permute.xlu0 %182
    %184 = vrot.lane.b32.xlu0 %v125, 96
    %v185 = vpop.permute.xlu0 %184
    %186 = vrot.lane.b32.xlu0 %v126, 96
    %v187 = vpop.permute.xlu0 %186
    %188 = vrot.lane.b32.xlu0 %v127, 96
    %v189 = vpop.permute.xlu0 %188
    %194 = vmatpush.msra.mxu0 0.0
    %195 = vmatpush.msra.mxu0 0.0
    %196 = vmatpush.msra.mxu0 0.0
    %197 = vmatpush.msra.mxu0 0.0
    %198 = vmatpush.msra.mxu0 0.0
    %199 = vmatpush.msra.mxu0 0.0
    %200 = vmatpush.msra.mxu0 0.0
    %201 = vmatpush.msra.mxu0 0.0
    %202 = vmatpush.msra.mxu0 0.0
    %203 = vmatpush.msra.mxu0 0.0
    %204 = vmatpush.msra.mxu0 0.0
    %205 = vmatpush.msra.mxu0 0.0
    %206 = vmatpush.msra.mxu0 %v189
    %207 = vmatpush.msra.mxu0 %v187
    %208 = vmatpush.msra.mxu0 %v185
    %209 = vmatpush.msra.mxu0 %v183
    %210 = vmatmul.f32.gmra.mxu0 %v151
    %v211 = vpop.f32.mrf.mxu0
    %v212 = vadd.f32 0.0, %v211
    %213 = vdwg.mxu0
    %215 = vrot.lane.b32.xlu0 %v212, 32
    %v216 = vpop.permute.xlu0 %215
    %v218 = vadd.f32 %v147, %v216
    %v219 = vmul.f32 %v218, 0.5
    %v220 = vtanh.pop %v219
    %v221 = vmul.f32 %v220, 0.5
    %v222 = vadd.f32 %v221, 0.5
    %223 = vrot.lane.b32.xlu0 %v124, 64
    %v224 = vpop.permute.xlu0 %223
    %225 = vrot.lane.b32.xlu0 %v125, 64
    %v226 = vpop.permute.xlu0 %225
    %227 = vrot.lane.b32.xlu0 %v126, 64
    %v228 = vpop.permute.xlu0 %227
    %229 = vrot.lane.b32.xlu0 %v127, 64
    %v230 = vpop.permute.xlu0 %229
    %235 = vmatpush.msra.mxu0 0.0
    %236 = vmatpush.msra.mxu0 0.0
    %237 = vmatpush.msra.mxu0 0.0
    %238 = vmatpush.msra.mxu0 0.0
    %239 = vmatpush.msra.mxu0 0.0
    %240 = vmatpush.msra.mxu0 0.0
    %241 = vmatpush.msra.mxu0 0.0
    %242 = vmatpush.msra.mxu0 0.0
    %243 = vmatpush.msra.mxu0 0.0
    %244 = vmatpush.msra.mxu0 0.0
    %245 = vmatpush.msra.mxu0 0.0
    %246 = vmatpush.msra.mxu0 0.0
    %247 = vmatpush.msra.mxu0 %v230
    %248 = vmatpush.msra.mxu0 %v228
    %249 = vmatpush.msra.mxu0 %v226
    %250 = vmatpush.msra.mxu0 %v224
    %251 = vmatmul.f32.gmra.mxu0 %v151
    %v252 = vpop.f32.mrf.mxu0
    %v253 = vadd.f32 0.0, %v252
    %254 = vdwg.mxu0
    %256 = vrot.lane.b32.xlu0 %v253, 64
    %v257 = vpop.permute.xlu0 %256
    %v259 = vadd.f32 %v147, %v257
    %v260 = vtanh.pop %v259
    %261 = vrot.lane.b32.xlu0 %v124, 32
    %v262 = vpop.permute.xlu0 %261
    %263 = vrot.lane.b32.xlu0 %v125, 32
    %v264 = vpop.permute.xlu0 %263
    %265 = vrot.lane.b32.xlu0 %v126, 32
    %v266 = vpop.permute.xlu0 %265
    %267 = vrot.lane.b32.xlu0 %v127, 32
    %v268 = vpop.permute.xlu0 %267
    %273 = vmatpush.msra.mxu0 0.0
    %274 = vmatpush.msra.mxu0 0.0
    %275 = vmatpush.msra.mxu0 0.0
    %276 = vmatpush.msra.mxu0 0.0
    %277 = vmatpush.msra.mxu0 0.0
    %278 = vmatpush.msra.mxu0 0.0
    %279 = vmatpush.msra.mxu0 0.0
    %280 = vmatpush.msra.mxu0 0.0
    %281 = vmatpush.msra.mxu0 0.0
    %282 = vmatpush.msra.mxu0 0.0
    %283 = vmatpush.msra.mxu0 0.0
    %284 = vmatpush.msra.mxu0 0.0
    %285 = vmatpush.msra.mxu0 %v268
    %286 = vmatpush.msra.mxu0 %v266
    %287 = vmatpush.msra.mxu0 %v264
    %288 = vmatpush.msra.mxu0 %v262
    %289 = vmatmul.f32.gmra.mxu0 %v151
    %v290 = vpop.f32.mrf.mxu0
    %v291 = vadd.f32 0.0, %v290
    %292 = vdwg.mxu0
    %294 = vrot.lane.b32.xlu0 %v291, 96
    %v295 = vpop.permute.xlu0 %294
    %v297 = vadd.f32 %v147, %v295
    %v298 = vmul.f32 %v297, 0.5
    %v299 = vtanh.pop %v298
    %v300 = vmul.f32 %v299, 0.5
    %v301 = vadd.f32 %v300, 0.5
    %v302 = vmul.f32 %v222, 0.0
    %304 = vrot.lane.b32.xlu0 %v260, 64
    %v305 = vpop.permute.xlu0 %304
    %v307 = vmul.f32 %v177, %v305
    %309 = vrot.lane.b32.xlu0 %v307, 32
    %v310 = vpop.permute.xlu0 %309
    %v312 = vadd.f32 %v302, %v310
    %v313 = vtanh.pop %v312
    %315 = vrot.lane.b32.xlu0 %v313, 64
    %v316 = vpop.permute.xlu0 %315
    %v318 = vmul.f32 %v301, %v316
    %320 = vrot.lane.b32.xlu0 %v318, 32
    %v321 = vpop.permute.xlu0 %320
    %v322 = vsel %vm149, %v321, 0
    %324 = vmatpush.msra.mxu0 0.0
    %325 = vmatpush.msra.mxu0 0.0
    %326 = vmatpush.msra.mxu0 0.0
    %327 = vmatpush.msra.mxu0 0.0
    %328 = vmatpush.msra.mxu0 0.0
    %329 = vmatpush.msra.mxu0 0.0
    %330 = vmatpush.msra.mxu0 0.0
    %331 = vmatpush.msra.mxu0 0.0
    %332 = vmatpush.msra.mxu0 0.0
    %333 = vmatpush.msra.mxu0 0.0
    %334 = vmatpush.msra.mxu0 0.0
    %335 = vmatpush.msra.mxu0 0.0
    %336 = vmatpush.msra.mxu0 %v127
    %337 = vmatpush.msra.mxu0 %v126
    %338 = vmatpush.msra.mxu0 %v125
    %339 = vmatpush.msra.mxu0 %v124
    %340 = vmatmul.f32.gmra.mxu0 %v322
    %v341 = vpop.f32.mrf.mxu0
    %v342 = vadd.f32 0.0, %v341
    %343 = vdwg.mxu0
    %v345 = vrot.slane %v342, 6
    %v347 = vadd.f32 %v147, %v345
    %v348 = vmul.f32 %v347, 0.5
    %v349 = vtanh.pop %v348
    %v350 = vmul.f32 %v349, 0.5
    %v351 = vadd.f32 %v350, 0.5
    %352 = vmatpush.msra.mxu0 0.0
    %353 = vmatpush.msra.mxu0 0.0
    %354 = vmatpush.msra.mxu0 0.0
    %355 = vmatpush.msra.mxu0 0.0
    %356 = vmatpush.msra.mxu0 0.0
    %357 = vmatpush.msra.mxu0 0.0
    %358 = vmatpush.msra.mxu0 0.0
    %359 = vmatpush.msra.mxu0 0.0
    %360 = vmatpush.msra.mxu0 0.0
    %361 = vmatpush.msra.mxu0 0.0
    %362 = vmatpush.msra.mxu0 0.0
    %363 = vmatpush.msra.mxu0 0.0
    %364 = vmatpush.msra.mxu0 %v189
    %365 = vmatpush.msra.mxu0 %v187
    %366 = vmatpush.msra.mxu0 %v185
    %367 = vmatpush.msra.mxu0 %v183
    %368 = vmatmul.f32.gmra.mxu0 %v322
    %v369 = vpop.f32.mrf.mxu0
    %v370 = vadd.f32 0.0, %v369
    %371 = vdwg.mxu0
    %v373 = vrot.slane %v370, 6
    %374 = vrot.lane.b32.xlu0 %v373, 32
    %v375 = vpop.permute.xlu0 %374
    %v377 = vadd.f32 %v147, %v375
    %v378 = vmul.f32 %v377, 0.5
    %v379 = vtanh.pop %v378
    %v380 = vmul.f32 %v379, 0.5
    %v381 = vadd.f32 %v380, 0.5
    %382 = vmatpush.msra.mxu0 0.0
    %383 = vmatpush.msra.mxu0 0.0
    %384 = vmatpush.msra.mxu0 0.0
    %385 = vmatpush.msra.mxu0 0.0
    %386 = vmatpush.msra.mxu0 0.0
    %387 = vmatpush.msra.mxu0 0.0
    %388 = vmatpush.msra.mxu0 0.0
    %389 = vmatpush.msra.mxu0 0.0
    %390 = vmatpush.msra.mxu0 0.0
    %391 = vmatpush.msra.mxu0 0.0
    %392 = vmatpush.msra.mxu0 0.0
    %393 = vmatpush.msra.mxu0 0.0
    %394 = vmatpush.msra.mxu0 %v230
    %395 = vmatpush.msra.mxu0 %v228
    %396 = vmatpush.msra.mxu0 %v226
    %397 = vmatpush.msra.mxu0 %v224
    %398 = vmatmul.f32.gmra.mxu0 %v322
    %v399 = vpop.f32.mrf.mxu0
    %v400 = vadd.f32 0.0, %v399
    %401 = vdwg.mxu0
    %v403 = vrot.slane %v400, 6
    %404 = vrot.lane.b32.xlu0 %v403, 64
    %v405 = vpop.permute.xlu0 %404
    %v407 = vadd.f32 %v147, %v405
    %v408 = vtanh.pop %v407
    %409 = vmatpush.msra.mxu0 0.0
    %410 = vmatpush.msra.mxu0 0.0
    %411 = vmatpush.msra.mxu0 0.0
    %412 = vmatpush.msra.mxu0 0.0
    %413 = vmatpush.msra.mxu0 0.0
    %414 = vmatpush.msra.mxu0 0.0
    %415 = vmatpush.msra.mxu0 0.0
    %416 = vmatpush.msra.mxu0 0.0
    %417 = vmatpush.msra.mxu0 0.0
    %418 = vmatpush.msra.mxu0 0.0
    %419 = vmatpush.msra.mxu0 0.0
    %420 = vmatpush.msra.mxu0 0.0
    %421 = vmatpush.msra.mxu0 %v268
    %422 = vmatpush.msra.mxu0 %v266
    %423 = vmatpush.msra.mxu0 %v264
    %424 = vmatpush.msra.mxu0 %v262
    %425 = vmatmul.f32.gmra.mxu0 %v322
    %v426 = vpop.f32.mrf.mxu0
    %v427 = vadd.f32 0.0, %v426
    %428 = vdwg.mxu0
    %v430 = vrot.slane %v427, 6
    %431 = vrot.lane.b32.xlu0 %v430, 96
    %v432 = vpop.permute.xlu0 %431
    %v434 = vadd.f32 %v147, %v432
    %v435 = vmul.f32 %v434, 0.5
    %v436 = vtanh.pop %v435
    %v437 = vmul.f32 %v436, 0.5
    %v438 = vadd.f32 %v437, 0.5
    %v440 = vrot.slane %v312, 6
    %v442 = vmul.f32 %v381, %v440
    %444 = vrot.lane.b32.xlu0 %v408, 64
    %v445 = vpop.permute.xlu0 %444
    %v447 = vmul.f32 %v351, %v445
    %449 = vrot.lane.b32.xlu0 %v447, 32
    %v450 = vpop.permute.xlu0 %449
    %v452 = vadd.f32 %v442, %v450
    %v453 = vtanh.pop %v452
    %455 = vrot.lane.b32.xlu0 %v453, 64
    %v456 = vpop.permute.xlu0 %455
    %v458 = vmul.f32 %v438, %v456
    %v460 = vrot.slane %v458, 2
    %461 = vrot.lane.b32.xlu0 %v460, 32
    %v462 = vpop.permute.xlu0 %461
    %v463 = vsel %vm149, %v462, 0
    %465 = vmatpush.msra.mxu0 0.0
    %466 = vmatpush.msra.mxu0 0.0
    %467 = vmatpush.msra.mxu0 0.0
    %468 = vmatpush.msra.mxu0 0.0
    %469 = vmatpush.msra.mxu0 0.0
    %470 = vmatpush.msra.mxu0 0.0
    %471 = vmatpush.msra.mxu0 0.0
    %472 = vmatpush.msra.mxu0 0.0
    %473 = vmatpush.msra.mxu0 0.0
    %474 = vmatpush.msra.mxu0 0.0
    %475 = vmatpush.msra.mxu0 0.0
    %476 = vmatpush.msra.mxu0 0.0
    %477 = vmatpush.msra.mxu0 %v127
    %478 = vmatpush.msra.mxu0 %v126
    %479 = vmatpush.msra.mxu0 %v125
    %480 = vmatpush.msra.mxu0 %v124
    %481 = vmatmul.f32.gmra.mxu0 %v463
    %v482 = vpop.f32.mrf.mxu0
    %v483 = vadd.f32 0.0, %v482
    %484 = vdwg.mxu0
    %v486 = vrot.slane %v483, 4
    %v488 = vadd.f32 %v147, %v486
    %v489 = vmul.f32 %v488, 0.5
    %v490 = vtanh.pop %v489
    %v491 = vmul.f32 %v490, 0.5
    %v492 = vadd.f32 %v491, 0.5
    %493 = vmatpush.msra.mxu0 0.0
    %494 = vmatpush.msra.mxu0 0.0
    %495 = vmatpush.msra.mxu0 0.0
    %496 = vmatpush.msra.mxu0 0.0
    %497 = vmatpush.msra.mxu0 0.0
    %498 = vmatpush.msra.mxu0 0.0
    %499 = vmatpush.msra.mxu0 0.0
    %500 = vmatpush.msra.mxu0 0.0
    %501 = vmatpush.msra.mxu0 0.0
    %502 = vmatpush.msra.mxu0 0.0
    %503 = vmatpush.msra.mxu0 0.0
    %504 = vmatpush.msra.mxu0 0.0
    %505 = vmatpush.msra.mxu0 %v189
    %506 = vmatpush.msra.mxu0 %v187
    %507 = vmatpush.msra.mxu0 %v185
    %508 = vmatpush.msra.mxu0 %v183
    %509 = vmatmul.f32.gmra.mxu0 %v463
    %v510 = vpop.f32.mrf.mxu0
    %v511 = vadd.f32 0.0, %v510
    %512 = vdwg.mxu0
    %v514 = vrot.slane %v511, 4
    %515 = vrot.lane.b32.xlu0 %v514, 32
    %v516 = vpop.permute.xlu0 %515
    %v518 = vadd.f32 %v147, %v516
    %v519 = vmul.f32 %v518, 0.5
    %v520 = vtanh.pop %v519
    %v521 = vmul.f32 %v520, 0.5
    %v522 = vadd.f32 %v521, 0.5
    %523 = vmatpush.msra.mxu0 0.0
    %524 = vmatpush.msra.mxu0 0.0
    %525 = vmatpush.msra.mxu0 0.0
    %526 = vmatpush.msra.mxu0 0.0
    %527 = vmatpush.msra.mxu0 0.0
    %528 = vmatpush.msra.mxu0 0.0
    %529 = vmatpush.msra.mxu0 0.0
    %530 = vmatpush.msra.mxu0 0.0
    %531 = vmatpush.msra.mxu0 0.0
    %532 = vmatpush.msra.mxu0 0.0
    %533 = vmatpush.msra.mxu0 0.0
    %534 = vmatpush.msra.mxu0 0.0
    %535 = vmatpush.msra.mxu0 %v230
    %536 = vmatpush.msra.mxu0 %v228
    %537 = vmatpush.msra.mxu0 %v226
    %538 = vmatpush.msra.mxu0 %v224
    %539 = vmatmul.f32.gmra.mxu0 %v463
    %v540 = vpop.f32.mrf.mxu0
    %v541 = vadd.f32 0.0, %v540
    %542 = vdwg.mxu0
    %v544 = vrot.slane %v541, 4
    %545 = vrot.lane.b32.xlu0 %v544, 64
    %v546 = vpop.permute.xlu0 %545
    %v548 = vadd.f32 %v147, %v546
    %v549 = vtanh.pop %v548
    %550 = vmatpush.msra.mxu0 0.0
    %551 = vmatpush.msra.mxu0 0.0
    %552 = vmatpush.msra.mxu0 0.0
    %553 = vmatpush.msra.mxu0 0.0
    %554 = vmatpush.msra.mxu0 0.0
    %555 = vmatpush.msra.mxu0 0.0
    %556 = vmatpush.msra.mxu0 0.0
    %557 = vmatpush.msra.mxu0 0.0
    %558 = vmatpush.msra.mxu0 0.0
    %559 = vmatpush.msra.mxu0 0.0
    %560 = vmatpush.msra.mxu0 0.0
    %561 = vmatpush.msra.mxu0 0.0
    %562 = vmatpush.msra.mxu0 %v268
    %563 = vmatpush.msra.mxu0 %v266
    %564 = vmatpush.msra.mxu0 %v264
    %565 = vmatpush.msra.mxu0 %v262
    %566 = vmatmul.f32.gmra.mxu0 %v463
    %v567 = vpop.f32.mrf.mxu0
    %v568 = vadd.f32 0.0, %v567
    %569 = vdwg.mxu0
    %v571 = vrot.slane %v568, 4
    %572 = vrot.lane.b32.xlu0 %v571, 96
    %v573 = vpop.permute.xlu0 %572
    %v575 = vadd.f32 %v147, %v573
    %v576 = vmul.f32 %v575, 0.5
    %v577 = vtanh.pop %v576
    %v578 = vmul.f32 %v577, 0.5
    %v579 = vadd.f32 %v578, 0.5
    %v581 = vrot.slane %v452, 6
    %v583 = vmul.f32 %v522, %v581
    %585 = vrot.lane.b32.xlu0 %v549, 64
    %v586 = vpop.permute.xlu0 %585
    %v588 = vmul.f32 %v492, %v586
    %590 = vrot.lane.b32.xlu0 %v588, 32
    %v591 = vpop.permute.xlu0 %590
    %v593 = vadd.f32 %v583, %v591
    %v594 = vtanh.pop %v593
    %596 = vrot.lane.b32.xlu0 %v594, 64
    %v597 = vpop.permute.xlu0 %596
    %v599 = vmul.f32 %v579, %v597
    %v601 = vrot.slane %v599, 4
    %602 = vrot.lane.b32.xlu0 %v601, 32
    %v603 = vpop.permute.xlu0 %602
    %v604 = vsel %vm149, %v603, 0
    %606 = vmatpush.msra.mxu0 0.0
    %607 = vmatpush.msra.mxu0 0.0
    %608 = vmatpush.msra.mxu0 0.0
    %609 = vmatpush.msra.mxu0 0.0
    %610 = vmatpush.msra.mxu0 0.0
    %611 = vmatpush.msra.mxu0 0.0
    %612 = vmatpush.msra.mxu0 0.0
    %613 = vmatpush.msra.mxu0 0.0
    %614 = vmatpush.msra.mxu0 0.0
    %615 = vmatpush.msra.mxu0 0.0
    %616 = vmatpush.msra.mxu0 0.0
    %617 = vmatpush.msra.mxu0 0.0
    %618 = vmatpush.msra.mxu0 %v127
    %619 = vmatpush.msra.mxu0 %v126
    %620 = vmatpush.msra.mxu0 %v125
    %621 = vmatpush.msra.mxu0 %v124
    %622 = vmatmul.f32.gmra.mxu0 %v604
    %v623 = vpop.f32.mrf.mxu0
    %v624 = vadd.f32 0.0, %v623
    %625 = vdwg.mxu0
    %v627 = vrot.slane %v624, 2
    %v629 = vadd.f32 %v147, %v627
    %v630 = vmul.f32 %v629, 0.5
    %v631 = vtanh.pop %v630
    %v632 = vmul.f32 %v631, 0.5
    %v633 = vadd.f32 %v632, 0.5
    %634 = vmatpush.msra.mxu0 0.0
    %635 = vmatpush.msra.mxu0 0.0
    %636 = vmatpush.msra.mxu0 0.0
    %637 = vmatpush.msra.mxu0 0.0
    %638 = vmatpush.msra.mxu0 0.0
    %639 = vmatpush.msra.mxu0 0.0
    %640 = vmatpush.msra.mxu0 0.0
    %641 = vmatpush.msra.mxu0 0.0
    %642 = vmatpush.msra.mxu0 0.0
    %643 = vmatpush.msra.mxu0 0.0
    %644 = vmatpush.msra.mxu0 0.0
    %645 = vmatpush.msra.mxu0 0.0
    %646 = vmatpush.msra.mxu0 %v189
    %647 = vmatpush.msra.mxu0 %v187
    %648 = vmatpush.msra.mxu0 %v185
    %649 = vmatpush.msra.mxu0 %v183
    %650 = vmatmul.f32.gmra.mxu0 %v604
    %v651 = vpop.f32.mrf.mxu0
    %v652 = vadd.f32 0.0, %v651
    %653 = vdwg.mxu0
    %v655 = vrot.slane %v652, 2
    %656 = vrot.lane.b32.xlu0 %v655, 32
    %v657 = vpop.permute.xlu0 %656
    %v659 = vadd.f32 %v147, %v657
    %v660 = vmul.f32 %v659, 0.5
    %v661 = vtanh.pop %v660
    %v662 = vmul.f32 %v661, 0.5
    %v663 = vadd.f32 %v662, 0.5
    %664 = vmatpush.msra.mxu0 0.0
    %665 = vmatpush.msra.mxu0 0.0
    %666 = vmatpush.msra.mxu0 0.0
    %667 = vmatpush.msra.mxu0 0.0
    %668 = vmatpush.msra.mxu0 0.0
    %669 = vmatpush.msra.mxu0 0.0
    %670 = vmatpush.msra.mxu0 0.0
    %671 = vmatpush.msra.mxu0 0.0
    %672 = vmatpush.msra.mxu0 0.0
    %673 = vmatpush.msra.mxu0 0.0
    %674 = vmatpush.msra.mxu0 0.0
    %675 = vmatpush.msra.mxu0 0.0
    %676 = vmatpush.msra.mxu0 %v230
    %677 = vmatpush.msra.mxu0 %v228
    %678 = vmatpush.msra.mxu0 %v226
    %679 = vmatpush.msra.mxu0 %v224
    %680 = vmatmul.f32.gmra.mxu0 %v604
    %v681 = vpop.f32.mrf.mxu0
    %v682 = vadd.f32 0.0, %v681
    %683 = vdwg.mxu0
    %v685 = vrot.slane %v682, 2
    %686 = vrot.lane.b32.xlu0 %v685, 64
    %v687 = vpop.permute.xlu0 %686
    %v689 = vadd.f32 %v147, %v687
    %v690 = vtanh.pop %v689
    %691 = vmatpush.msra.mxu0 0.0
    %692 = vmatpush.msra.mxu0 0.0
    %693 = vmatpush.msra.mxu0 0.0
    %694 = vmatpush.msra.mxu0 0.0
    %695 = vmatpush.msra.mxu0 0.0
    %696 = vmatpush.msra.mxu0 0.0
    %697 = vmatpush.msra.mxu0 0.0
    %698 = vmatpush.msra.mxu0 0.0
    %699 = vmatpush.msra.mxu0 0.0
    %700 = vmatpush.msra.mxu0 0.0
    %701 = vmatpush.msra.mxu0 0.0
    %702 = vmatpush.msra.mxu0 0.0
    %703 = vmatpush.msra.mxu0 %v268
    %704 = vmatpush.msra.mxu0 %v266
    %705 = vmatpush.msra.mxu0 %v264
    %706 = vmatpush.msra.mxu0 %v262
    %707 = vmatmul.f32.gmra.mxu0 %v604
    %v708 = vpop.f32.mrf.mxu0
    %v709 = vadd.f32 0.0, %v708
    %710 = vdwg.mxu0
    %v712 = vrot.slane %v709, 2
    %713 = vrot.lane.b32.xlu0 %v712, 96
    %v714 = vpop.permute.xlu0 %713
    %v716 = vadd.f32 %v147, %v714
    %v717 = vmul.f32 %v716, 0.5
    %v718 = vtanh.pop %v717
    %v719 = vmul.f32 %v718, 0.5
    %v720 = vadd.f32 %v719, 0.5
    %v722 = vrot.slane %v593, 6
    %v724 = vmul.f32 %v663, %v722
    %726 = vrot.lane.b32.xlu0 %v690, 64
    %v727 = vpop.permute.xlu0 %726
    %v729 = vmul.f32 %v633, %v727
    %731 = vrot.lane.b32.xlu0 %v729, 32
    %v732 = vpop.permute.xlu0 %731
    %v734 = vadd.f32 %v724, %v732
    %v735 = vtanh.pop %v734
    %737 = vrot.lane.b32.xlu0 %v735, 64
    %v738 = vpop.permute.xlu0 %737
    %v740 = vmul.f32 %v720, %v738
    %v742 = vrot.slane %v740, 6
    %743 = vrot.lane.b32.xlu0 %v742, 32
    %v744 = vpop.permute.xlu0 %743
    %v745 = vsel %vm149, %v744, 0
    %747 = vmatpush.msra.mxu0 0.0
    %748 = vmatpush.msra.mxu0 0.0
    %749 = vmatpush.msra.mxu0 0.0
    %750 = vmatpush.msra.mxu0 0.0
    %751 = vmatpush.msra.mxu0 0.0
    %752 = vmatpush.msra.mxu0 0.0
    %753 = vmatpush.msra.mxu0 0.0
    %754 = vmatpush.msra.mxu0 0.0
    %755 = vmatpush.msra.mxu0 0.0
    %756 = vmatpush.msra.mxu0 0.0
    %757 = vmatpush.msra.mxu0 0.0
    %758 = vmatpush.msra.mxu0 0.0
    %759 = vmatpush.msra.mxu0 %v127
    %760 = vmatpush.msra.mxu0 %v126
    %761 = vmatpush.msra.mxu0 %v125
    %762 = vmatpush.msra.mxu0 %v124
    %763 = vmatmul.f32.gmra.mxu0 %v745
    %v764 = vpop.f32.mrf.mxu0
    %v765 = vadd.f32 0.0, %v764
    %766 = vdwg.mxu0
    %v767 = vadd.f32 %v148, %v765
    %v768 = vmul.f32 %v767, 0.5
    %v769 = vtanh.pop %v768
    %v770 = vmul.f32 %v769, 0.5
    %v771 = vadd.f32 %v770, 0.5
    %772 = vmatpush.msra.mxu0 0.0
    %773 = vmatpush.msra.mxu0 0.0
    %774 = vmatpush.msra.mxu0 0.0
    %775 = vmatpush.msra.mxu0 0.0
    %776 = vmatpush.msra.mxu0 0.0
    %777 = vmatpush.msra.mxu0 0.0
    %778 = vmatpush.msra.mxu0 0.0
    %779 = vmatpush.msra.mxu0 0.0
    %780 = vmatpush.msra.mxu0 0.0
    %781 = vmatpush.msra.mxu0 0.0
    %782 = vmatpush.msra.mxu0 0.0
    %783 = vmatpush.msra.mxu0 0.0
    %784 = vmatpush.msra.mxu0 %v189
    %785 = vmatpush.msra.mxu0 %v187
    %786 = vmatpush.msra.mxu0 %v185
    %787 = vmatpush.msra.mxu0 %v183
    %788 = vmatmul.f32.gmra.mxu0 %v745
    %v789 = vpop.f32.mrf.mxu0
    %v790 = vadd.f32 0.0, %v789
    %791 = vdwg.mxu0
    %793 = vrot.lane.b32.xlu0 %v790, 32
    %v794 = vpop.permute.xlu0 %793
    %v796 = vadd.f32 %v148, %v794
    %v797 = vmul.f32 %v796, 0.5
    %v798 = vtanh.pop %v797
    %v799 = vmul.f32 %v798, 0.5
    %v800 = vadd.f32 %v799, 0.5
    %801 = vmatpush.msra.mxu0 0.0
    %802 = vmatpush.msra.mxu0 0.0
    %803 = vmatpush.msra.mxu0 0.0
    %804 = vmatpush.msra.mxu0 0.0
    %805 = vmatpush.msra.mxu0 0.0
    %806 = vmatpush.msra.mxu0 0.0
    %807 = vmatpush.msra.mxu0 0.0
    %808 = vmatpush.msra.mxu0 0.0
    %809 = vmatpush.msra.mxu0 0.0
    %810 = vmatpush.msra.mxu0 0.0
    %811 = vmatpush.msra.mxu0 0.0
    %812 = vmatpush.msra.mxu0 0.0
    %813 = vmatpush.msra.mxu0 %v230
    %814 = vmatpush.msra.mxu0 %v228
    %815 = vmatpush.msra.mxu0 %v226
    %816 = vmatpush.msra.mxu0 %v224
    %817 = vmatmul.f32.gmra.mxu0 %v745
    %v818 = vpop.f32.mrf.mxu0
    %v819 = vadd.f32 0.0, %v818
    %820 = vdwg.mxu0
    %822 = vrot.lane.b32.xlu0 %v819, 64
    %v823 = vpop.permute.xlu0 %822
    %v825 = vadd.f32 %v148, %v823
    %v826 = vtanh.pop %v825
    %827 = vmatpush.msra.mxu0 0.0
    %828 = vmatpush.msra.mxu0 0.0
    %829 = vmatpush.msra.mxu0 0.0
    %830 = vmatpush.msra.mxu0 0.0
    %831 = vmatpush.msra.mxu0 0.0
    %832 = vmatpush.msra.mxu0 0.0
    %833 = vmatpush.msra.mxu0 0.0
    %834 = vmatpush.msra.mxu0 0.0
    %835 = vmatpush.msra.mxu0 0.0
    %836 = vmatpush.msra.mxu0 0.0
    %837 = vmatpush.msra.mxu0 0.0
    %838 = vmatpush.msra.mxu0 0.0
    %839 = vmatpush.msra.mxu0 %v268
    %840 = vmatpush.msra.mxu0 %v266
    %841 = vmatpush.msra.mxu0 %v264
    %842 = vmatpush.msra.mxu0 %v262
    %843 = vmatmul.f32.gmra.mxu0 %v745
    %v844 = vpop.f32.mrf.mxu0
    %v845 = vadd.f32 0.0, %v844
    %846 = vdwg.mxu0
    %848 = vrot.lane.b32.xlu0 %v845, 96
    %v849 = vpop.permute.xlu0 %848
    %v851 = vadd.f32 %v148, %v849
    %v852 = vmul.f32 %v851, 0.5
    %v853 = vtanh.pop %v852
    %v854 = vmul.f32 %v853, 0.5
    %v855 = vadd.f32 %v854, 0.5
    %v857 = vrot.slane %v734, 6
    %v859 = vmul.f32 %v800, %v857
    %861 = vrot.lane.b32.xlu0 %v826, 64
    %v862 = vpop.permute.xlu0 %861
    %v864 = vmul.f32 %v771, %v862
    %866 = vrot.lane.b32.xlu0 %v864, 32
    %v867 = vpop.permute.xlu0 %866
    %v869 = vadd.f32 %v859, %v867
    %v870 = vtanh.pop %v869
    %872 = vrot.lane.b32.xlu0 %v870, 64
    %v873 = vpop.permute.xlu0 %872
    %v875 = vmul.f32 %v855, %v873
    %877 = vrot.lane.b32.xlu0 %v875, 32
    %v878 = vpop.permute.xlu0 %877
    %v879 = vsel %vm149, %v878, 0
    %881 = vmatpush.msra.mxu0 0.0
    %882 = vmatpush.msra.mxu0 0.0
    %883 = vmatpush.msra.mxu0 0.0
    %884 = vmatpush.msra.mxu0 0.0
    %885 = vmatpush.msra.mxu0 0.0
    %886 = vmatpush.msra.mxu0 0.0
    %887 = vmatpush.msra.mxu0 0.0
    %888 = vmatpush.msra.mxu0 0.0
    %889 = vmatpush.msra.mxu0 0.0
    %890 = vmatpush.msra.mxu0 0.0
    %891 = vmatpush.msra.mxu0 0.0
    %892 = vmatpush.msra.mxu0 0.0
    %893 = vmatpush.msra.mxu0 %v127
    %894 = vmatpush.msra.mxu0 %v126
    %895 = vmatpush.msra.mxu0 %v125
    %896 = vmatpush.msra.mxu0 %v124
    %897 = vmatmul.f32.gmra.mxu0 %v879
    %v898 = vpop.f32.mrf.mxu0
    %v899 = vadd.f32 0.0, %v898
    %900 = vdwg.mxu0
    %v902 = vrot.slane %v899, 6
    %v904 = vadd.f32 %v148, %v902
    %v905 = vmul.f32 %v904, 0.5
    %v906 = vtanh.pop %v905
    %v907 = vmul.f32 %v906, 0.5
    %v908 = vadd.f32 %v907, 0.5
    %909 = vmatpush.msra.mxu0 0.0
    %910 = vmatpush.msra.mxu0 0.0
    %911 = vmatpush.msra.mxu0 0.0
    %912 = vmatpush.msra.mxu0 0.0
    %913 = vmatpush.msra.mxu0 0.0
    %914 = vmatpush.msra.mxu0 0.0
    %915 = vmatpush.msra.mxu0 0.0
    %916 = vmatpush.msra.mxu0 0.0
    %917 = vmatpush.msra.mxu0 0.0
    %918 = vmatpush.msra.mxu0 0.0
    %919 = vmatpush.msra.mxu0 0.0
    %920 = vmatpush.msra.mxu0 0.0
    %921 = vmatpush.msra.mxu0 %v189
    %922 = vmatpush.msra.mxu0 %v187
    %923 = vmatpush.msra.mxu0 %v185
    %924 = vmatpush.msra.mxu0 %v183
    %925 = vmatmul.f32.gmra.mxu0 %v879
    %v926 = vpop.f32.mrf.mxu0
    %v927 = vadd.f32 0.0, %v926
    %928 = vdwg.mxu0
    %v930 = vrot.slane %v927, 6
    %931 = vrot.lane.b32.xlu0 %v930, 32
    %v932 = vpop.permute.xlu0 %931
    %v934 = vadd.f32 %v148, %v932
    %v935 = vmul.f32 %v934, 0.5
    %v936 = vtanh.pop %v935
    %v937 = vmul.f32 %v936, 0.5
    %v938 = vadd.f32 %v937, 0.5
    %939 = vmatpush.msra.mxu0 0.0
    %940 = vmatpush.msra.mxu0 0.0
    %941 = vmatpush.msra.mxu0 0.0
    %942 = vmatpush.msra.mxu0 0.0
    %943 = vmatpush.msra.mxu0 0.0
    %944 = vmatpush.msra.mxu0 0.0
    %945 = vmatpush.msra.mxu0 0.0
    %946 = vmatpush.msra.mxu0 0.0
    %947 = vmatpush.msra.mxu0 0.0
    %948 = vmatpush.msra.mxu0 0.0
    %949 = vmatpush.msra.mxu0 0.0
    %950 = vmatpush.msra.mxu0 0.0
    %951 = vmatpush.msra.mxu0 %v230
    %952 = vmatpush.msra.mxu0 %v228
    %953 = vmatpush.msra.mxu0 %v226
    %954 = vmatpush.msra.mxu0 %v224
    %955 = vmatmul.f32.gmra.mxu0 %v879
    %v956 = vpop.f32.mrf.mxu0
    %v957 = vadd.f32 0.0, %v956
    %958 = vdwg.mxu0
    %v960 = vrot.slane %v957, 6
    %961 = vrot.lane.b32.xlu0 %v960, 64
    %v962 = vpop.permute.xlu0 %961
    %v964 = vadd.f32 %v148, %v962
    %v965 = vtanh.pop %v964
    %966 = vmatpush.msra.mxu0 0.0
    %967 = vmatpush.msra.mxu0 0.0
    %968 = vmatpush.msra.mxu0 0.0
    %969 = vmatpush.msra.mxu0 0.0
    %970 = vmatpush.msra.mxu0 0.0
    %971 = vmatpush.msra.mxu0 0.0
    %972 = vmatpush.msra.mxu0 0.0
    %973 = vmatpush.msra.mxu0 0.0
    %974 = vmatpush.msra.mxu0 0.0
    %975 = vmatpush.msra.mxu0 0.0
    %976 = vmatpush.msra.mxu0 0.0
    %977 = vmatpush.msra.mxu0 0.0
    %978 = vmatpush.msra.mxu0 %v268
    %979 = vmatpush.msra.mxu0 %v266
    %980 = vmatpush.msra.mxu0 %v264
    %981 = vmatpush.msra.mxu0 %v262
    %982 = vmatmul.f32.gmra.mxu0 %v879
    %v983 = vpop.f32.mrf.mxu0
    %v984 = vadd.f32 0.0, %v983
    %985 = vdwg.mxu0
    %v987 = vrot.slane %v984, 6
    %988 = vrot.lane.b32.xlu0 %v987, 96
    %v989 = vpop.permute.xlu0 %988
    %v991 = vadd.f32 %v148, %v989
    %v992 = vmul.f32 %v991, 0.5
    %v993 = vtanh.pop %v992
    %v994 = vmul.f32 %v993, 0.5
    %v995 = vadd.f32 %v994, 0.5
    %v997 = vrot.slane %v869, 6
    %v999 = vmul.f32 %v938, %v997
    %1001 = vrot.lane.b32.xlu0 %v965, 64
    %v1002 = vpop.permute.xlu0 %1001
    %v1004 = vmul.f32 %v908, %v1002
    %1006 = vrot.lane.b32.xlu0 %v1004, 32
    %v1007 = vpop.permute.xlu0 %1006
    %v1009 = vadd.f32 %v999, %v1007
    %v1010 = vtanh.pop %v1009
    %1012 = vrot.lane.b32.xlu0 %v1010, 64
    %v1013 = vpop.permute.xlu0 %1012
    %v1015 = vmul.f32 %v995, %v1013
    %v1017 = vrot.slane %v1015, 2
    %1018 = vrot.lane.b32.xlu0 %v1017, 32
    %v1019 = vpop.permute.xlu0 %1018
    %v1020 = vsel %vm149, %v1019, 0
    %1022 = vmatpush.msra.mxu0 0.0
    %1023 = vmatpush.msra.mxu0 0.0
    %1024 = vmatpush.msra.mxu0 0.0
    %1025 = vmatpush.msra.mxu0 0.0
    %1026 = vmatpush.msra.mxu0 0.0
    %1027 = vmatpush.msra.mxu0 0.0
    %1028 = vmatpush.msra.mxu0 0.0
    %1029 = vmatpush.msra.mxu0 0.0
    %1030 = vmatpush.msra.mxu0 0.0
    %1031 = vmatpush.msra.mxu0 0.0
    %1032 = vmatpush.msra.mxu0 0.0
    %1033 = vmatpush.msra.mxu0 0.0
    %1034 = vmatpush.msra.mxu0 %v127
    %1035 = vmatpush.msra.mxu0 %v126
    %1036 = vmatpush.msra.mxu0 %v125
    %1037 = vmatpush.msra.mxu0 %v124
    %1038 = vmatmul.f32.gmra.mxu0 %v1020
    %v1039 = vpop.f32.mrf.mxu0
    %v1040 = vadd.f32 0.0, %v1039
    %1041 = vdwg.mxu0
    %v1043 = vrot.slane %v1040, 4
    %v1045 = vadd.f32 %v148, %v1043
    %v1046 = vmul.f32 %v1045, 0.5
    %v1047 = vtanh.pop %v1046
    %v1048 = vmul.f32 %v1047, 0.5
    %v1049 = vadd.f32 %v1048, 0.5
    %1050 = vmatpush.msra.mxu0 0.0
    %1051 = vmatpush.msra.mxu0 0.0
    %1052 = vmatpush.msra.mxu0 0.0
    %1053 = vmatpush.msra.mxu0 0.0
    %1054 = vmatpush.msra.mxu0 0.0
    %1055 = vmatpush.msra.mxu0 0.0
    %1056 = vmatpush.msra.mxu0 0.0
    %1057 = vmatpush.msra.mxu0 0.0
    %1058 = vmatpush.msra.mxu0 0.0
    %1059 = vmatpush.msra.mxu0 0.0
    %1060 = vmatpush.msra.mxu0 0.0
    %1061 = vmatpush.msra.mxu0 0.0
    %1062 = vmatpush.msra.mxu0 %v189
    %1063 = vmatpush.msra.mxu0 %v187
    %1064 = vmatpush.msra.mxu0 %v185
    %1065 = vmatpush.msra.mxu0 %v183
    %1066 = vmatmul.f32.gmra.mxu0 %v1020
    %v1067 = vpop.f32.mrf.mxu0
    %v1068 = vadd.f32 0.0, %v1067
    %1069 = vdwg.mxu0
    %v1071 = vrot.slane %v1068, 4
    %1072 = vrot.lane.b32.xlu0 %v1071, 32
    %v1073 = vpop.permute.xlu0 %1072
    %v1075 = vadd.f32 %v148, %v1073
    %v1076 = vmul.f32 %v1075, 0.5
    %v1077 = vtanh.pop %v1076
    %v1078 = vmul.f32 %v1077, 0.5
    %v1079 = vadd.f32 %v1078, 0.5
    %1080 = vmatpush.msra.mxu0 0.0
    %1081 = vmatpush.msra.mxu0 0.0
    %1082 = vmatpush.msra.mxu0 0.0
    %1083 = vmatpush.msra.mxu0 0.0
    %1084 = vmatpush.msra.mxu0 0.0
    %1085 = vmatpush.msra.mxu0 0.0
    %1086 = vmatpush.msra.mxu0 0.0
    %1087 = vmatpush.msra.mxu0 0.0
    %1088 = vmatpush.msra.mxu0 0.0
    %1089 = vmatpush.msra.mxu0 0.0
    %1090 = vmatpush.msra.mxu0 0.0
    %1091 = vmatpush.msra.mxu0 0.0
    %1092 = vmatpush.msra.mxu0 %v230
    %1093 = vmatpush.msra.mxu0 %v228
    %1094 = vmatpush.msra.mxu0 %v226
    %1095 = vmatpush.msra.mxu0 %v224
    %1096 = vmatmul.f32.gmra.mxu0 %v1020
    %v1097 = vpop.f32.mrf.mxu0
    %v1098 = vadd.f32 0.0, %v1097
    %1099 = vdwg.mxu0
    %v1101 = vrot.slane %v1098, 4
    %1102 = vrot.lane.b32.xlu0 %v1101, 64
    %v1103 = vpop.permute.xlu0 %1102
    %v1105 = vadd.f32 %v148, %v1103
    %v1106 = vtanh.pop %v1105
    %1107 = vmatpush.msra.mxu0 0.0
    %1108 = vmatpush.msra.mxu0 0.0
    %1109 = vmatpush.msra.mxu0 0.0
    %1110 = vmatpush.msra.mxu0 0.0
    %1111 = vmatpush.msra.mxu0 0.0
    %1112 = vmatpush.msra.mxu0 0.0
    %1113 = vmatpush.msra.mxu0 0.0
    %1114 = vmatpush.msra.mxu0 0.0
    %1115 = vmatpush.msra.mxu0 0.0
    %1116 = vmatpush.msra.mxu0 0.0
    %1117 = vmatpush.msra.mxu0 0.0
    %1118 = vmatpush.msra.mxu0 0.0
    %1119 = vmatpush.msra.mxu0 %v268
    %1120 = vmatpush.msra.mxu0 %v266
    %1121 = vmatpush.msra.mxu0 %v264
    %1122 = vmatpush.msra.mxu0 %v262
    %1123 = vmatmul.f32.gmra.mxu0 %v1020
    %v1124 = vpop.f32.mrf.mxu0
    %v1125 = vadd.f32 0.0, %v1124
    %1126 = vdwg.mxu0
    %v1128 = vrot.slane %v1125, 4
    %1129 = vrot.lane.b32.xlu0 %v1128, 96
    %v1130 = vpop.permute.xlu0 %1129
    %v1132 = vadd.f32 %v148, %v1130
    %v1133 = vmul.f32 %v1132, 0.5
    %v1134 = vtanh.pop %v1133
    %v1135 = vmul.f32 %v1134, 0.5
    %v1136 = vadd.f32 %v1135, 0.5
    %v1138 = vrot.slane %v1009, 6
    %v1140 = vmul.f32 %v1079, %v1138
    %1142 = vrot.lane.b32.xlu0 %v1106, 64
    %v1143 = vpop.permute.xlu0 %1142
    %v1145 = vmul.f32 %v1049, %v1143
    %1147 = vrot.lane.b32.xlu0 %v1145, 32
    %v1148 = vpop.permute.xlu0 %1147
    %v1150 = vadd.f32 %v1140, %v1148
    %v1151 = vtanh.pop %v1150
    %1153 = vrot.lane.b32.xlu0 %v1151, 64
    %v1154 = vpop.permute.xlu0 %1153
    %v1156 = vmul.f32 %v1136, %v1154
    %v1158 = vrot.slane %v1156, 4
    %1159 = vrot.lane.b32.xlu0 %v1158, 32
    %v1160 = vpop.permute.xlu0 %1159
    %v1161 = vsel %vm149, %v1160, 0
    %1163 = vmatpush.msra.mxu0 0.0
    %1164 = vmatpush.msra.mxu0 0.0
    %1165 = vmatpush.msra.mxu0 0.0
    %1166 = vmatpush.msra.mxu0 0.0
    %1167 = vmatpush.msra.mxu0 0.0
    %1168 = vmatpush.msra.mxu0 0.0
    %1169 = vmatpush.msra.mxu0 0.0
    %1170 = vmatpush.msra.mxu0 0.0
    %1171 = vmatpush.msra.mxu0 0.0
    %1172 = vmatpush.msra.mxu0 0.0
    %1173 = vmatpush.msra.mxu0 0.0
    %1174 = vmatpush.msra.mxu0 0.0
    %1175 = vmatpush.msra.mxu0 %v127
    %1176 = vmatpush.msra.mxu0 %v126
    %1177 = vmatpush.msra.mxu0 %v125
    %1178 = vmatpush.msra.mxu0 %v124
    %1179 = vmatmul.f32.gmra.mxu0 %v1161
    %v1180 = vpop.f32.mrf.mxu0
    %v1181 = vadd.f32 0.0, %v1180
    %1182 = vdwg.mxu0
    %v1184 = vrot.slane %v1181, 2
    %v1186 = vadd.f32 %v148, %v1184
    %v1187 = vmul.f32 %v1186, 0.5
    %v1188 = vtanh.pop %v1187
    %v1189 = vmul.f32 %v1188, 0.5
    %v1190 = vadd.f32 %v1189, 0.5
    %1191 = vmatpush.msra.mxu0 0.0
    %1192 = vmatpush.msra.mxu0 0.0
    %1193 = vmatpush.msra.mxu0 0.0
    %1194 = vmatpush.msra.mxu0 0.0
    %1195 = vmatpush.msra.mxu0 0.0
    %1196 = vmatpush.msra.mxu0 0.0
    %1197 = vmatpush.msra.mxu0 0.0
    %1198 = vmatpush.msra.mxu0 0.0
    %1199 = vmatpush.msra.mxu0 0.0
    %1200 = vmatpush.msra.mxu0 0.0
    %1201 = vmatpush.msra.mxu0 0.0
    %1202 = vmatpush.msra.mxu0 0.0
    %1203 = vmatpush.msra.mxu0 %v189
    %1204 = vmatpush.msra.mxu0 %v187
    %1205 = vmatpush.msra.mxu0 %v185
    %1206 = vmatpush.msra.mxu0 %v183
    %1207 = vmatmul.f32.gmra.mxu0 %v1161
    %v1208 = vpop.f32.mrf.mxu0
    %v1209 = vadd.f32 0.0, %v1208
    %1210 = vdwg.mxu0
    %v1212 = vrot.slane %v1209, 2
    %1213 = vrot.lane.b32.xlu0 %v1212, 32
    %v1214 = vpop.permute.xlu0 %1213
    %v1216 = vadd.f32 %v148, %v1214
    %v1217 = vmul.f32 %v1216, 0.5
    %v1218 = vtanh.pop %v1217
    %v1219 = vmul.f32 %v1218, 0.5
    %v1220 = vadd.f32 %v1219, 0.5
    %1221 = vmatpush.msra.mxu0 0.0
    %1222 = vmatpush.msra.mxu0 0.0
    %1223 = vmatpush.msra.mxu0 0.0
    %1224 = vmatpush.msra.mxu0 0.0
    %1225 = vmatpush.msra.mxu0 0.0
    %1226 = vmatpush.msra.mxu0 0.0
    %1227 = vmatpush.msra.mxu0 0.0
    %1228 = vmatpush.msra.mxu0 0.0
    %1229 = vmatpush.msra.mxu0 0.0
    %1230 = vmatpush.msra.mxu0 0.0
    %1231 = vmatpush.msra.mxu0 0.0
    %1232 = vmatpush.msra.mxu0 0.0
    %1233 = vmatpush.msra.mxu0 %v230
    %1234 = vmatpush.msra.mxu0 %v228
    %1235 = vmatpush.msra.mxu0 %v226
    %1236 = vmatpush.msra.mxu0 %v224
    %1237 = vmatmul.f32.gmra.mxu0 %v1161
    %v1238 = vpop.f32.mrf.mxu0
    %v1239 = vadd.f32 0.0, %v1238
    %1240 = vdwg.mxu0
    %v1242 = vrot.slane %v1239, 2
    %1243 = vrot.lane.b32.xlu0 %v1242, 64
    %v1244 = vpop.permute.xlu0 %1243
    %v1246 = vadd.f32 %v148, %v1244
    %v1247 = vtanh.pop %v1246
    %1248 = vmatpush.msra.mxu0 0.0
    %1249 = vmatpush.msra.mxu0 0.0
    %1250 = vmatpush.msra.mxu0 0.0
    %1251 = vmatpush.msra.mxu0 0.0
    %1252 = vmatpush.msra.mxu0 0.0
    %1253 = vmatpush.msra.mxu0 0.0
    %1254 = vmatpush.msra.mxu0 0.0
    %1255 = vmatpush.msra.mxu0 0.0
    %1256 = vmatpush.msra.mxu0 0.0
    %1257 = vmatpush.msra.mxu0 0.0
    %1258 = vmatpush.msra.mxu0 0.0
    %1259 = vmatpush.msra.mxu0 0.0
    %1260 = vmatpush.msra.mxu0 %v268
    %1261 = vmatpush.msra.mxu0 %v266
    %1262 = vmatpush.msra.mxu0 %v264
    %1263 = vmatpush.msra.mxu0 %v262
    %1264 = vmatmul.f32.gmra.mxu0 %v1161
    %v1265 = vpop.f32.mrf.mxu0
    %v1266 = vadd.f32 0.0, %v1265
    %1267 = vdwg.mxu0
    %v1269 = vrot.slane %v1266, 2
    %1270 = vrot.lane.b32.xlu0 %v1269, 96
    %v1271 = vpop.permute.xlu0 %1270
    %v1273 = vadd.f32 %v148, %v1271
    %v1274 = vmul.f32 %v1273, 0.5
    %v1275 = vtanh.pop %v1274
    %v1276 = vmul.f32 %v1275, 0.5
    %v1277 = vadd.f32 %v1276, 0.5
    %v1279 = vrot.slane %v1150, 6
    %v1281 = vmul.f32 %v1220, %v1279
    %1283 = vrot.lane.b32.xlu0 %v1247, 64
    %v1284 = vpop.permute.xlu0 %1283
    %v1286 = vmul.f32 %v1190, %v1284
    %1288 = vrot.lane.b32.xlu0 %v1286, 32
    %v1289 = vpop.permute.xlu0 %1288
    %v1291 = vadd.f32 %v1281, %v1289
    %v1292 = vtanh.pop %v1291
    %1294 = vrot.lane.b32.xlu0 %v1292, 64
    %v1295 = vpop.permute.xlu0 %1294
    %v1297 = vmul.f32 %v1277, %v1295
    %vm1298 = vcmask 1041408
    %v1299 = vsel %vm1298, %v318, %v458
    %vm1300 = vcmask 1043456
    %v1301 = vsel %vm1300, %v1299, %v599
    %vm1302 = vcmask 1045504
    %v1303 = vsel %vm1302, %v1301, %v740
    %v1304 = vsel %vm1298, %v875, %v1015
    %v1305 = vsel %vm1300, %v1304, %v1156
    %v1306 = vsel %vm1302, %v1305, %v1297
    %v1307 = vld [vmem:[#allocation5] sm:$0xff]
    %v1308 = vld [vmem:[#allocation5 + $0x8] sm:$0xff]
    %v1309 = vld [vmem:[#allocation5 + $0x10] sm:$0xff]
    %v1310 = vld [vmem:[#allocation5 + $0x18] sm:$0xff]
    %v1311 = vld [vmem:[#allocation7] sm:$0xff]
    %v1312 = vld [vmem:[#allocation7 + $0x8] sm:$0xff]
    %v1313 = vld [vmem:[#allocation7 + $0x10] sm:$0xff]
    %v1314 = vld [vmem:[#allocation7 + $0x18] sm:$0xff]
    %v1315 = vld [vmem:[%s6] sm:$0x1]
    %v1317 = vperm.slane %v1315, 0
    %1321 = vrot.lane.b32.xlu0 %v1303, 32
    %v1322 = vpop.permute.xlu0 %1321
    %1323 = vrot.lane.b32.xlu0 %v1306, 32
    %v1324 = vpop.permute.xlu0 %1323
    %v1325 = vsel %vm149, %v1322, 0
    %v1327 = vsel %vm149, %v1324, 0
    %1329 = vmatpush.msra.mxu0 0.0
    %1330 = vmatpush.msra.mxu0 0.0
    %1331 = vmatpush.msra.mxu0 0.0
    %1332 = vmatpush.msra.mxu0 0.0
    %1333 = vmatpush.msra.mxu0 0.0
    %1334 = vmatpush.msra.mxu0 0.0
    %1335 = vmatpush.msra.mxu0 0.0
    %1336 = vmatpush.msra.mxu0 0.0
    %1337 = vmatpush.msra.mxu0 0.0
    %1338 = vmatpush.msra.mxu0 0.0
    %1339 = vmatpush.msra.mxu0 0.0
    %1340 = vmatpush.msra.mxu0 0.0
    %1341 = vmatpush.msra.mxu0 %v1310
    %1342 = vmatpush.msra.mxu0 %v1309
    %1343 = vmatpush.msra.mxu0 %v1308
    %1344 = vmatpush.msra.mxu0 %v1307
    %1345 = vmatmul.f32.gmra.mxu0 %v1325
    %v1346 = vpop.f32.mrf.mxu0
    %v1347 = vadd.f32 %v1317, %v1346
    %1348 = vmatmul.f32.gmra.mxu0 %v1327
    %v1349 = vpop.f32.mrf.mxu0
    %v1350 = vadd.f32 %v1317, %v1349
    %1351 = vdwg.mxu0
    %1352 = vmatpush.msra.mxu0 0.0
    %1353 = vmatpush.msra.mxu0 0.0
    %1354 = vmatpush.msra.mxu0 0.0
    %1355 = vmatpush.msra.mxu0 0.0
    %1356 = vmatpush.msra.mxu0 0.0
    %1357 = vmatpush.msra.mxu0 0.0
    %1358 = vmatpush.msra.mxu0 0.0
    %1359 = vmatpush.msra.mxu0 0.0
    %1360 = vmatpush.msra.mxu0 0.0
    %1361 = vmatpush.msra.mxu0 0.0
    %1362 = vmatpush.msra.mxu0 0.0
    %1363 = vmatpush.msra.mxu0 0.0
    %1364 = vmatpush.msra.mxu0 %v1314
    %1365 = vmatpush.msra.mxu0 %v1313
    %1366 = vmatpush.msra.mxu0 %v1312
    %1367 = vmatpush.msra.mxu0 %v1311
    %1368 = vmatmul.f32.gmra.mxu0 %v151
    %v1369 = vpop.f32.mrf.mxu0
    %v1370 = vadd.f32 0.0, %v1369
    %1371 = vdwg.mxu0
    %v1372 = vadd.f32 %v1347, %v1370
    %v1373 = vmul.f32 %v1372, 0.5
    %v1374 = vtanh.pop %v1373
    %v1375 = vmul.f32 %v1374, 0.5
    %v1376 = vadd.f32 %v1375, 0.5
    %1381 = vrot.lane.b32.xlu0 %v1311, 96
    %v1382 = vpop.permute.xlu0 %1381
    %1383 = vrot.lane.b32.xlu0 %v1312, 96
    %v1384 = vpop.permute.xlu0 %1383
    %1385 = vrot.lane.b32.xlu0 %v1313, 96
    %v1386 = vpop.permute.xlu0 %1385
    %1387 = vrot.lane.b32.xlu0 %v1314, 96
    %v1388 = vpop.permute.xlu0 %1387
    %1393 = vmatpush.msra.mxu0 0.0
    %1394 = vmatpush.msra.mxu0 0.0
    %1395 = vmatpush.msra.mxu0 0.0
    %1396 = vmatpush.msra.mxu0 0.0
    %1397 = vmatpush.msra.mxu0 0.0
    %1398 = vmatpush.msra.mxu0 0.0
    %1399 = vmatpush.msra.mxu0 0.0
    %1400 = vmatpush.msra.mxu0 0.0
    %1401 = vmatpush.msra.mxu0 0.0
    %1402 = vmatpush.msra.mxu0 0.0
    %1403 = vmatpush.msra.mxu0 0.0
    %1404 = vmatpush.msra.mxu0 0.0
    %1405 = vmatpush.msra.mxu0 %v1388
    %1406 = vmatpush.msra.mxu0 %v1386
    %1407 = vmatpush.msra.mxu0 %v1384
    %1408 = vmatpush.msra.mxu0 %v1382
    %1409 = vmatmul.f32.gmra.mxu0 %v151
    %v1410 = vpop.f32.mrf.mxu0
    %v1411 = vadd.f32 0.0, %v1410
    %1412 = vdwg.mxu0
    %1414 = vrot.lane.b32.xlu0 %v1411, 32
    %v1415 = vpop.permute.xlu0 %1414
    %v1417 = vadd.f32 %v1347, %v1415
    %v1418 = vmul.f32 %v1417, 0.5
    %v1419 = vtanh.pop %v1418
    %v1420 = vmul.f32 %v1419, 0.5
    %v1421 = vadd.f32 %v1420, 0.5
    %1422 = vrot.lane.b32.xlu0 %v1311, 64
    %v1423 = vpop.permute.xlu0 %1422
    %1424 = vrot.lane.b32.xlu0 %v1312, 64
    %v1425 = vpop.permute.xlu0 %1424
    %1426 = vrot.lane.b32.xlu0 %v1313, 64
    %v1427 = vpop.permute.xlu0 %1426
    %1428 = vrot.lane.b32.xlu0 %v1314, 64
    %v1429 = vpop.permute.xlu0 %1428
    %1434 = vmatpush.msra.mxu0 0.0
    %1435 = vmatpush.msra.mxu0 0.0
    %1436 = vmatpush.msra.mxu0 0.0
    %1437 = vmatpush.msra.mxu0 0.0
    %1438 = vmatpush.msra.mxu0 0.0
    %1439 = vmatpush.msra.mxu0 0.0
    %1440 = vmatpush.msra.mxu0 0.0
    %1441 = vmatpush.msra.mxu0 0.0
    %1442 = vmatpush.msra.mxu0 0.0
    %1443 = vmatpush.msra.mxu0 0.0
    %1444 = vmatpush.msra.mxu0 0.0
    %1445 = vmatpush.msra.mxu0 0.0
    %1446 = vmatpush.msra.mxu0 %v1429
    %1447 = vmatpush.msra.mxu0 %v1427
    %1448 = vmatpush.msra.mxu0 %v1425
    %1449 = vmatpush.msra.mxu0 %v1423
    %1450 = vmatmul.f32.gmra.mxu0 %v151
    %v1451 = vpop.f32.mrf.mxu0
    %v1452 = vadd.f32 0.0, %v1451
    %1453 = vdwg.mxu0
    %1455 = vrot.lane.b32.xlu0 %v1452, 64
    %v1456 = vpop.permute.xlu0 %1455
    %v1458 = vadd.f32 %v1347, %v1456
    %v1459 = vtanh.pop %v1458
    %1460 = vrot.lane.b32.xlu0 %v1311, 32
    %v1461 = vpop.permute.xlu0 %1460
    %1462 = vrot.lane.b32.xlu0 %v1312, 32
    %v1463 = vpop.permute.xlu0 %1462
    %1464 = vrot.lane.b32.xlu0 %v1313, 32
    %v1465 = vpop.permute.xlu0 %1464
    %1466 = vrot.lane.b32.xlu0 %v1314, 32
    %v1467 = vpop.permute.xlu0 %1466
    %1472 = vmatpush.msra.mxu0 0.0
    %1473 = vmatpush.msra.mxu0 0.0
    %1474 = vmatpush.msra.mxu0 0.0
    %1475 = vmatpush.msra.mxu0 0.0
    %1476 = vmatpush.msra.mxu0 0.0
    %1477 = vmatpush.msra.mxu0 0.0
    %1478 = vmatpush.msra.mxu0 0.0
    %1479 = vmatpush.msra.mxu0 0.0
    %1480 = vmatpush.msra.mxu0 0.0
    %1481 = vmatpush.msra.mxu0 0.0
    %1482 = vmatpush.msra.mxu0 0.0
    %1483 = vmatpush.msra.mxu0 0.0
    %1484 = vmatpush.msra.mxu0 %v1467
    %1485 = vmatpush.msra.mxu0 %v1465
    %1486 = vmatpush.msra.mxu0 %v1463
    %1487 = vmatpush.msra.mxu0 %v1461
    %1488 = vmatmul.f32.gmra.mxu0 %v151
    %v1489 = vpop.f32.mrf.mxu0
    %v1490 = vadd.f32 0.0, %v1489
    %1491 = vdwg.mxu0
    %1493 = vrot.lane.b32.xlu0 %v1490, 96
    %v1494 = vpop.permute.xlu0 %1493
    %v1496 = vadd.f32 %v1347, %v1494
    %v1497 = vmul.f32 %v1496, 0.5
    %v1498 = vtanh.pop %v1497
    %v1499 = vmul.f32 %v1498, 0.5
    %v1500 = vadd.f32 %v1499, 0.5
    %v1501 = vmul.f32 %v1421, 0.0
    %1503 = vrot.lane.b32.xlu0 %v1459, 64
    %v1504 = vpop.permute.xlu0 %1503
    %v1506 = vmul.f32 %v1376, %v1504
    %1508 = vrot.lane.b32.xlu0 %v1506, 32
    %v1509 = vpop.permute.xlu0 %1508
    %v1511 = vadd.f32 %v1501, %v1509
    %v1512 = vtanh.pop %v1511
    %1514 = vrot.lane.b32.xlu0 %v1512, 64
    %v1515 = vpop.permute.xlu0 %1514
    %v1517 = vmul.f32 %v1500, %v1515
    %1519 = vrot.lane.b32.xlu0 %v1517, 32
    %v1520 = vpop.permute.xlu0 %1519
    %v1521 = vsel %vm149, %v1520, 0
    %1523 = vmatpush.msra.mxu0 0.0
    %1524 = vmatpush.msra.mxu0 0.0
    %1525 = vmatpush.msra.mxu0 0.0
    %1526 = vmatpush.msra.mxu0 0.0
    %1527 = vmatpush.msra.mxu0 0.0
    %1528 = vmatpush.msra.mxu0 0.0
    %1529 = vmatpush.msra.mxu0 0.0
    %1530 = vmatpush.msra.mxu0 0.0
    %1531 = vmatpush.msra.mxu0 0.0
    %1532 = vmatpush.msra.mxu0 0.0
    %1533 = vmatpush.msra.mxu0 0.0
    %1534 = vmatpush.msra.mxu0 0.0
    %1535 = vmatpush.msra.mxu0 %v1314
    %1536 = vmatpush.msra.mxu0 %v1313
    %1537 = vmatpush.msra.mxu0 %v1312
    %1538 = vmatpush.msra.mxu0 %v1311
    %1539 = vmatmul.f32.gmra.mxu0 %v1521
    %v1540 = vpop.f32.mrf.mxu0
    %v1541 = vadd.f32 0.0, %v1540
    %1542 = vdwg.mxu0
    %v1544 = vrot.slane %v1541, 6
    %v1546 = vadd.f32 %v1347, %v1544
    %v1547 = vmul.f32 %v1546, 0.5
    %v1548 = vtanh.pop %v1547
    %v1549 = vmul.f32 %v1548, 0.5
    %v1550 = vadd.f32 %v1549, 0.5
    %1551 = vmatpush.msra.mxu0 0.0
    %1552 = vmatpush.msra.mxu0 0.0
    %1553 = vmatpush.msra.mxu0 0.0
    %1554 = vmatpush.msra.mxu0 0.0
    %1555 = vmatpush.msra.mxu0 0.0
    %1556 = vmatpush.msra.mxu0 0.0
    %1557 = vmatpush.msra.mxu0 0.0
    %1558 = vmatpush.msra.mxu0 0.0
    %1559 = vmatpush.msra.mxu0 0.0
    %1560 = vmatpush.msra.mxu0 0.0
    %1561 = vmatpush.msra.mxu0 0.0
    %1562 = vmatpush.msra.mxu0 0.0
    %1563 = vmatpush.msra.mxu0 %v1388
    %1564 = vmatpush.msra.mxu0 %v1386
    %1565 = vmatpush.msra.mxu0 %v1384
    %1566 = vmatpush.msra.mxu0 %v1382
    %1567 = vmatmul.f32.gmra.mxu0 %v1521
    %v1568 = vpop.f32.mrf.mxu0
    %v1569 = vadd.f32 0.0, %v1568
    %1570 = vdwg.mxu0
    %v1572 = vrot.slane %v1569, 6
    %1573 = vrot.lane.b32.xlu0 %v1572, 32
    %v1574 = vpop.permute.xlu0 %1573
    %v1576 = vadd.f32 %v1347, %v1574
    %v1577 = vmul.f32 %v1576, 0.5
    %v1578 = vtanh.pop %v1577
    %v1579 = vmul.f32 %v1578, 0.5
    %v1580 = vadd.f32 %v1579, 0.5
    %1581 = vmatpush.msra.mxu0 0.0
    %1582 = vmatpush.msra.mxu0 0.0
    %1583 = vmatpush.msra.mxu0 0.0
    %1584 = vmatpush.msra.mxu0 0.0
    %1585 = vmatpush.msra.mxu0 0.0
    %1586 = vmatpush.msra.mxu0 0.0
    %1587 = vmatpush.msra.mxu0 0.0
    %1588 = vmatpush.msra.mxu0 0.0
    %1589 = vmatpush.msra.mxu0 0.0
    %1590 = vmatpush.msra.mxu0 0.0
    %1591 = vmatpush.msra.mxu0 0.0
    %1592 = vmatpush.msra.mxu0 0.0
    %1593 = vmatpush.msra.mxu0 %v1429
    %1594 = vmatpush.msra.mxu0 %v1427
    %1595 = vmatpush.msra.mxu0 %v1425
    %1596 = vmatpush.msra.mxu0 %v1423
    %1597 = vmatmul.f32.gmra.mxu0 %v1521
    %v1598 = vpop.f32.mrf.mxu0
    %v1599 = vadd.f32 0.0, %v1598
    %1600 = vdwg.mxu0
    %v1602 = vrot.slane %v1599, 6
    %1603 = vrot.lane.b32.xlu0 %v1602, 64
    %v1604 = vpop.permute.xlu0 %1603
    %v1606 = vadd.f32 %v1347, %v1604
    %v1607 = vtanh.pop %v1606
    %1608 = vmatpush.msra.mxu0 0.0
    %1609 = vmatpush.msra.mxu0 0.0
    %1610 = vmatpush.msra.mxu0 0.0
    %1611 = vmatpush.msra.mxu0 0.0
    %1612 = vmatpush.msra.mxu0 0.0
    %1613 = vmatpush.msra.mxu0 0.0
    %1614 = vmatpush.msra.mxu0 0.0
    %1615 = vmatpush.msra.mxu0 0.0
    %1616 = vmatpush.msra.mxu0 0.0
    %1617 = vmatpush.msra.mxu0 0.0
    %1618 = vmatpush.msra.mxu0 0.0
    %1619 = vmatpush.msra.mxu0 0.0
    %1620 = vmatpush.msra.mxu0 %v1467
    %1621 = vmatpush.msra.mxu0 %v1465
    %1622 = vmatpush.msra.mxu0 %v1463
    %1623 = vmatpush.msra.mxu0 %v1461
    %1624 = vmatmul.f32.gmra.mxu0 %v1521
    %v1625 = vpop.f32.mrf.mxu0
    %v1626 = vadd.f32 0.0, %v1625
    %1627 = vdwg.mxu0
    %v1629 = vrot.slane %v1626, 6
    %1630 = vrot.lane.b32.xlu0 %v1629, 96
    %v1631 = vpop.permute.xlu0 %1630
    %v1633 = vadd.f32 %v1347, %v1631
    %v1634 = vmul.f32 %v1633, 0.5
    %v1635 = vtanh.pop %v1634
    %v1636 = vmul.f32 %v1635, 0.5
    %v1637 = vadd.f32 %v1636, 0.5
    %v1639 = vrot.slane %v1511, 6
    %v1641 = vmul.f32 %v1580, %v1639
    %1643 = vrot.lane.b32.xlu0 %v1607, 64
    %v1644 = vpop.permute.xlu0 %1643
    %v1646 = vmul.f32 %v1550, %v1644
    %1648 = vrot.lane.b32.xlu0 %v1646, 32
    %v1649 = vpop.permute.xlu0 %1648
    %v1651 = vadd.f32 %v1641, %v1649
    %v1652 = vtanh.pop %v1651
    %1654 = vrot.lane.b32.xlu0 %v1652, 64
    %v1655 = vpop.permute.xlu0 %1654
    %v1657 = vmul.f32 %v1637, %v1655
    %v1659 = vrot.slane %v1657, 2
    %1660 = vrot.lane.b32.xlu0 %v1659, 32
    %v1661 = vpop.permute.xlu0 %1660
    %v1662 = vsel %vm149, %v1661, 0
    %1664 = vmatpush.msra.mxu0 0.0
    %1665 = vmatpush.msra.mxu0 0.0
    %1666 = vmatpush.msra.mxu0 0.0
    %1667 = vmatpush.msra.mxu0 0.0
    %1668 = vmatpush.msra.mxu0 0.0
    %1669 = vmatpush.msra.mxu0 0.0
    %1670 = vmatpush.msra.mxu0 0.0
    %1671 = vmatpush.msra.mxu0 0.0
    %1672 = vmatpush.msra.mxu0 0.0
    %1673 = vmatpush.msra.mxu0 0.0
    %1674 = vmatpush.msra.mxu0 0.0
    %1675 = vmatpush.msra.mxu0 0.0
    %1676 = vmatpush.msra.mxu0 %v1314
    %1677 = vmatpush.msra.mxu0 %v1313
    %1678 = vmatpush.msra.mxu0 %v1312
    %1679 = vmatpush.msra.mxu0 %v1311
    %1680 = vmatmul.f32.gmra.mxu0 %v1662
    %v1681 = vpop.f32.mrf.mxu0
    %v1682 = vadd.f32 0.0, %v1681
    %1683 = vdwg.mxu0
    %v1685 = vrot.slane %v1682, 4
    %v1687 = vadd.f32 %v1347, %v1685
    %v1688 = vmul.f32 %v1687, 0.5
    %v1689 = vtanh.pop %v1688
    %v1690 = vmul.f32 %v1689, 0.5
    %v1691 = vadd.f32 %v1690, 0.5
    %1692 = vmatpush.msra.mxu0 0.0
    %1693 = vmatpush.msra.mxu0 0.0
    %1694 = vmatpush.msra.mxu0 0.0
    %1695 = vmatpush.msra.mxu0 0.0
    %1696 = vmatpush.msra.mxu0 0.0
    %1697 = vmatpush.msra.mxu0 0.0
    %1698 = vmatpush.msra.mxu0 0.0
    %1699 = vmatpush.msra.mxu0 0.0
    %1700 = vmatpush.msra.mxu0 0.0
    %1701 = vmatpush.msra.mxu0 0.0
    %1702 = vmatpush.msra.mxu0 0.0
    %1703 = vmatpush.msra.mxu0 0.0
    %1704 = vmatpush.msra.mxu0 %v1388
    %1705 = vmatpush.msra.mxu0 %v1386
    %1706 = vmatpush.msra.mxu0 %v1384
    %1707 = vmatpush.msra.mxu0 %v1382
    %1708 = vmatmul.f32.gmra.mxu0 %v1662
    %v1709 = vpop.f32.mrf.mxu0
    %v1710 = vadd.f32 0.0, %v1709
    %1711 = vdwg.mxu0
    %v1713 = vrot.slane %v1710, 4
    %1714 = vrot.lane.b32.xlu0 %v1713, 32
    %v1715 = vpop.permute.xlu0 %1714
    %v1717 = vadd.f32 %v1347, %v1715
    %v1718 = vmul.f32 %v1717, 0.5
    %v1719 = vtanh.pop %v1718
    %v1720 = vmul.f32 %v1719, 0.5
    %v1721 = vadd.f32 %v1720, 0.5
    %1722 = vmatpush.msra.mxu0 0.0
    %1723 = vmatpush.msra.mxu0 0.0
    %1724 = vmatpush.msra.mxu0 0.0
    %1725 = vmatpush.msra.mxu0 0.0
    %1726 = vmatpush.msra.mxu0 0.0
    %1727 = vmatpush.msra.mxu0 0.0
    %1728 = vmatpush.msra.mxu0 0.0
    %1729 = vmatpush.msra.mxu0 0.0
    %1730 = vmatpush.msra.mxu0 0.0
    %1731 = vmatpush.msra.mxu0 0.0
    %1732 = vmatpush.msra.mxu0 0.0
    %1733 = vmatpush.msra.mxu0 0.0
    %1734 = vmatpush.msra.mxu0 %v1429
    %1735 = vmatpush.msra.mxu0 %v1427
    %1736 = vmatpush.msra.mxu0 %v1425
    %1737 = vmatpush.msra.mxu0 %v1423
    %1738 = vmatmul.f32.gmra.mxu0 %v1662
    %v1739 = vpop.f32.mrf.mxu0
    %v1740 = vadd.f32 0.0, %v1739
    %1741 = vdwg.mxu0
    %v1743 = vrot.slane %v1740, 4
    %1744 = vrot.lane.b32.xlu0 %v1743, 64
    %v1745 = vpop.permute.xlu0 %1744
    %v1747 = vadd.f32 %v1347, %v1745
    %v1748 = vtanh.pop %v1747
    %1749 = vmatpush.msra.mxu0 0.0
    %1750 = vmatpush.msra.mxu0 0.0
    %1751 = vmatpush.msra.mxu0 0.0
    %1752 = vmatpush.msra.mxu0 0.0
    %1753 = vmatpush.msra.mxu0 0.0
    %1754 = vmatpush.msra.mxu0 0.0
    %1755 = vmatpush.msra.mxu0 0.0
    %1756 = vmatpush.msra.mxu0 0.0
    %1757 = vmatpush.msra.mxu0 0.0
    %1758 = vmatpush.msra.mxu0 0.0
    %1759 = vmatpush.msra.mxu0 0.0
    %1760 = vmatpush.msra.mxu0 0.0
    %1761 = vmatpush.msra.mxu0 %v1467
    %1762 = vmatpush.msra.mxu0 %v1465
    %1763 = vmatpush.msra.mxu0 %v1463
    %1764 = vmatpush.msra.mxu0 %v1461
    %1765 = vmatmul.f32.gmra.mxu0 %v1662
    %v1766 = vpop.f32.mrf.mxu0
    %v1767 = vadd.f32 0.0, %v1766
    %1768 = vdwg.mxu0
    %v1770 = vrot.slane %v1767, 4
    %1771 = vrot.lane.b32.xlu0 %v1770, 96
    %v1772 = vpop.permute.xlu0 %1771
    %v1774 = vadd.f32 %v1347, %v1772
    %v1775 = vmul.f32 %v1774, 0.5
    %v1776 = vtanh.pop %v1775
    %v1777 = vmul.f32 %v1776, 0.5
    %v1778 = vadd.f32 %v1777, 0.5
    %v1780 = vrot.slane %v1651, 6
    %v1782 = vmul.f32 %v1721, %v1780
    %1784 = vrot.lane.b32.xlu0 %v1748, 64
    %v1785 = vpop.permute.xlu0 %1784
    %v1787 = vmul.f32 %v1691, %v1785
    %1789 = vrot.lane.b32.xlu0 %v1787, 32
    %v1790 = vpop.permute.xlu0 %1789
    %v1792 = vadd.f32 %v1782, %v1790
    %v1793 = vtanh.pop %v1792
    %1795 = vrot.lane.b32.xlu0 %v1793, 64
    %v1796 = vpop.permute.xlu0 %1795
    %v1798 = vmul.f32 %v1778, %v1796
    %v1800 = vrot.slane %v1798, 4
    %1801 = vrot.lane.b32.xlu0 %v1800, 32
    %v1802 = vpop.permute.xlu0 %1801
    %v1803 = vsel %vm149, %v1802, 0
    %1805 = vmatpush.msra.mxu0 0.0
    %1806 = vmatpush.msra.mxu0 0.0
    %1807 = vmatpush.msra.mxu0 0.0
    %1808 = vmatpush.msra.mxu0 0.0
    %1809 = vmatpush.msra.mxu0 0.0
    %1810 = vmatpush.msra.mxu0 0.0
    %1811 = vmatpush.msra.mxu0 0.0
    %1812 = vmatpush.msra.mxu0 0.0
    %1813 = vmatpush.msra.mxu0 0.0
    %1814 = vmatpush.msra.mxu0 0.0
    %1815 = vmatpush.msra.mxu0 0.0
    %1816 = vmatpush.msra.mxu0 0.0
    %1817 = vmatpush.msra.mxu0 %v1314
    %1818 = vmatpush.msra.mxu0 %v1313
    %1819 = vmatpush.msra.mxu0 %v1312
    %1820 = vmatpush.msra.mxu0 %v1311
    %1821 = vmatmul.f32.gmra.mxu0 %v1803
    %v1822 = vpop.f32.mrf.mxu0
    %v1823 = vadd.f32 0.0, %v1822
    %1824 = vdwg.mxu0
    %v1826 = vrot.slane %v1823, 2
    %v1828 = vadd.f32 %v1347, %v1826
    %v1829 = vmul.f32 %v1828, 0.5
    %v1830 = vtanh.pop %v1829
    %v1831 = vmul.f32 %v1830, 0.5
    %v1832 = vadd.f32 %v1831, 0.5
    %1833 = vmatpush.msra.mxu0 0.0
    %1834 = vmatpush.msra.mxu0 0.0
    %1835 = vmatpush.msra.mxu0 0.0
    %1836 = vmatpush.msra.mxu0 0.0
    %1837 = vmatpush.msra.mxu0 0.0
    %1838 = vmatpush.msra.mxu0 0.0
    %1839 = vmatpush.msra.mxu0 0.0
    %1840 = vmatpush.msra.mxu0 0.0
    %1841 = vmatpush.msra.mxu0 0.0
    %1842 = vmatpush.msra.mxu0 0.0
    %1843 = vmatpush.msra.mxu0 0.0
    %1844 = vmatpush.msra.mxu0 0.0
    %1845 = vmatpush.msra.mxu0 %v1388
    %1846 = vmatpush.msra.mxu0 %v1386
    %1847 = vmatpush.msra.mxu0 %v1384
    %1848 = vmatpush.msra.mxu0 %v1382
    %1849 = vmatmul.f32.gmra.mxu0 %v1803
    %v1850 = vpop.f32.mrf.mxu0
    %v1851 = vadd.f32 0.0, %v1850
    %1852 = vdwg.mxu0
    %v1854 = vrot.slane %v1851, 2
    %1855 = vrot.lane.b32.xlu0 %v1854, 32
    %v1856 = vpop.permute.xlu0 %1855
    %v1858 = vadd.f32 %v1347, %v1856
    %v1859 = vmul.f32 %v1858, 0.5
    %v1860 = vtanh.pop %v1859
    %v1861 = vmul.f32 %v1860, 0.5
    %v1862 = vadd.f32 %v1861, 0.5
    %1863 = vmatpush.msra.mxu0 0.0
    %1864 = vmatpush.msra.mxu0 0.0
    %1865 = vmatpush.msra.mxu0 0.0
    %1866 = vmatpush.msra.mxu0 0.0
    %1867 = vmatpush.msra.mxu0 0.0
    %1868 = vmatpush.msra.mxu0 0.0
    %1869 = vmatpush.msra.mxu0 0.0
    %1870 = vmatpush.msra.mxu0 0.0
    %1871 = vmatpush.msra.mxu0 0.0
    %1872 = vmatpush.msra.mxu0 0.0
    %1873 = vmatpush.msra.mxu0 0.0
    %1874 = vmatpush.msra.mxu0 0.0
    %1875 = vmatpush.msra.mxu0 %v1429
    %1876 = vmatpush.msra.mxu0 %v1427
    %1877 = vmatpush.msra.mxu0 %v1425
    %1878 = vmatpush.msra.mxu0 %v1423
    %1879 = vmatmul.f32.gmra.mxu0 %v1803
    %v1880 = vpop.f32.mrf.mxu0
    %v1881 = vadd.f32 0.0, %v1880
    %1882 = vdwg.mxu0
    %v1884 = vrot.slane %v1881, 2
    %1885 = vrot.lane.b32.xlu0 %v1884, 64
    %v1886 = vpop.permute.xlu0 %1885
    %v1888 = vadd.f32 %v1347, %v1886
    %v1889 = vtanh.pop %v1888
    %1890 = vmatpush.msra.mxu0 0.0
    %1891 = vmatpush.msra.mxu0 0.0
    %1892 = vmatpush.msra.mxu0 0.0
    %1893 = vmatpush.msra.mxu0 0.0
    %1894 = vmatpush.msra.mxu0 0.0
    %1895 = vmatpush.msra.mxu0 0.0
    %1896 = vmatpush.msra.mxu0 0.0
    %1897 = vmatpush.msra.mxu0 0.0
    %1898 = vmatpush.msra.mxu0 0.0
    %1899 = vmatpush.msra.mxu0 0.0
    %1900 = vmatpush.msra.mxu0 0.0
    %1901 = vmatpush.msra.mxu0 0.0
    %1902 = vmatpush.msra.mxu0 %v1467
    %1903 = vmatpush.msra.mxu0 %v1465
    %1904 = vmatpush.msra.mxu0 %v1463
    %1905 = vmatpush.msra.mxu0 %v1461
    %1906 = vmatmul.f32.gmra.mxu0 %v1803
    %v1907 = vpop.f32.mrf.mxu0
    %v1908 = vadd.f32 0.0, %v1907
    %1909 = vdwg.mxu0
    %v1911 = vrot.slane %v1908, 2
    %1912 = vrot.lane.b32.xlu0 %v1911, 96
    %v1913 = vpop.permute.xlu0 %1912
    %v1915 = vadd.f32 %v1347, %v1913
    %v1916 = vmul.f32 %v1915, 0.5
    %v1917 = vtanh.pop %v1916
    %v1918 = vmul.f32 %v1917, 0.5
    %v1919 = vadd.f32 %v1918, 0.5
    %v1921 = vrot.slane %v1792, 6
    %v1923 = vmul.f32 %v1862, %v1921
    %1925 = vrot.lane.b32.xlu0 %v1889, 64
    %v1926 = vpop.permute.xlu0 %1925
    %v1928 = vmul.f32 %v1832, %v1926
    %1930 = vrot.lane.b32.xlu0 %v1928, 32
    %v1931 = vpop.permute.xlu0 %1930
    %v1933 = vadd.f32 %v1923, %v1931
    %v1934 = vtanh.pop %v1933
    %1936 = vrot.lane.b32.xlu0 %v1934, 64
    %v1937 = vpop.permute.xlu0 %1936
    %v1939 = vmul.f32 %v1919, %v1937
    %v1941 = vrot.slane %v1939, 6
    %1942 = vrot.lane.b32.xlu0 %v1941, 32
    %v1943 = vpop.permute.xlu0 %1942
    %v1944 = vsel %vm149, %v1943, 0
    %1946 = vmatpush.msra.mxu0 0.0
    %1947 = vmatpush.msra.mxu0 0.0
    %1948 = vmatpush.msra.mxu0 0.0
    %1949 = vmatpush.msra.mxu0 0.0
    %1950 = vmatpush.msra.mxu0 0.0
    %1951 = vmatpush.msra.mxu0 0.0
    %1952 = vmatpush.msra.mxu0 0.0
    %1953 = vmatpush.msra.mxu0 0.0
    %1954 = vmatpush.msra.mxu0 0.0
    %1955 = vmatpush.msra.mxu0 0.0
    %1956 = vmatpush.msra.mxu0 0.0
    %1957 = vmatpush.msra.mxu0 0.0
    %1958 = vmatpush.msra.mxu0 %v1314
    %1959 = vmatpush.msra.mxu0 %v1313
    %1960 = vmatpush.msra.mxu0 %v1312
    %1961 = vmatpush.msra.mxu0 %v1311
    %1962 = vmatmul.f32.gmra.mxu0 %v1944
    %v1963 = vpop.f32.mrf.mxu0
    %v1964 = vadd.f32 0.0, %v1963
    %1965 = vdwg.mxu0
    %v1966 = vadd.f32 %v1350, %v1964
    %v1967 = vmul.f32 %v1966, 0.5
    %v1968 = vtanh.pop %v1967
    %v1969 = vmul.f32 %v1968, 0.5
    %v1970 = vadd.f32 %v1969, 0.5
    %1971 = vmatpush.msra.mxu0 0.0
    %1972 = vmatpush.msra.mxu0 0.0
    %1973 = vmatpush.msra.mxu0 0.0
    %1974 = vmatpush.msra.mxu0 0.0
    %1975 = vmatpush.msra.mxu0 0.0
    %1976 = vmatpush.msra.mxu0 0.0
    %1977 = vmatpush.msra.mxu0 0.0
    %1978 = vmatpush.msra.mxu0 0.0
    %1979 = vmatpush.msra.mxu0 0.0
    %1980 = vmatpush.msra.mxu0 0.0
    %1981 = vmatpush.msra.mxu0 0.0
    %1982 = vmatpush.msra.mxu0 0.0
    %1983 = vmatpush.msra.mxu0 %v1388
    %1984 = vmatpush.msra.mxu0 %v1386
    %1985 = vmatpush.msra.mxu0 %v1384
    %1986 = vmatpush.msra.mxu0 %v1382
    %1987 = vmatmul.f32.gmra.mxu0 %v1944
    %v1988 = vpop.f32.mrf.mxu0
    %v1989 = vadd.f32 0.0, %v1988
    %1990 = vdwg.mxu0
    %1992 = vrot.lane.b32.xlu0 %v1989, 32
    %v1993 = vpop.permute.xlu0 %1992
    %v1995 = vadd.f32 %v1350, %v1993
    %v1996 = vmul.f32 %v1995, 0.5
    %v1997 = vtanh.pop %v1996
    %v1998 = vmul.f32 %v1997, 0.5
    %v1999 = vadd.f32 %v1998, 0.5
    %2000 = vmatpush.msra.mxu0 0.0
    %2001 = vmatpush.msra.mxu0 0.0
    %2002 = vmatpush.msra.mxu0 0.0
    %2003 = vmatpush.msra.mxu0 0.0
    %2004 = vmatpush.msra.mxu0 0.0
    %2005 = vmatpush.msra.mxu0 0.0
    %2006 = vmatpush.msra.mxu0 0.0
    %2007 = vmatpush.msra.mxu0 0.0
    %2008 = vmatpush.msra.mxu0 0.0
    %2009 = vmatpush.msra.mxu0 0.0
    %2010 = vmatpush.msra.mxu0 0.0
    %2011 = vmatpush.msra.mxu0 0.0
    %2012 = vmatpush.msra.mxu0 %v1429
    %2013 = vmatpush.msra.mxu0 %v1427
    %2014 = vmatpush.msra.mxu0 %v1425
    %2015 = vmatpush.msra.mxu0 %v1423
    %2016 = vmatmul.f32.gmra.mxu0 %v1944
    %v2017 = vpop.f32.mrf.mxu0
    %v2018 = vadd.f32 0.0, %v2017
    %2019 = vdwg.mxu0
    %2021 = vrot.lane.b32.xlu0 %v2018, 64
    %v2022 = vpop.permute.xlu0 %2021
    %v2024 = vadd.f32 %v1350, %v2022
    %v2025 = vtanh.pop %v2024
    %2026 = vmatpush.msra.mxu0 0.0
    %2027 = vmatpush.msra.mxu0 0.0
    %2028 = vmatpush.msra.mxu0 0.0
    %2029 = vmatpush.msra.mxu0 0.0
    %2030 = vmatpush.msra.mxu0 0.0
    %2031 = vmatpush.msra.mxu0 0.0
    %2032 = vmatpush.msra.mxu0 0.0
    %2033 = vmatpush.msra.mxu0 0.0
    %2034 = vmatpush.msra.mxu0 0.0
    %2035 = vmatpush.msra.mxu0 0.0
    %2036 = vmatpush.msra.mxu0 0.0
    %2037 = vmatpush.msra.mxu0 0.0
    %2038 = vmatpush.msra.mxu0 %v1467
    %2039 = vmatpush.msra.mxu0 %v1465
    %2040 = vmatpush.msra.mxu0 %v1463
    %2041 = vmatpush.msra.mxu0 %v1461
    %2042 = vmatmul.f32.gmra.mxu0 %v1944
    %v2043 = vpop.f32.mrf.mxu0
    %v2044 = vadd.f32 0.0, %v2043
    %2045 = vdwg.mxu0
    %2047 = vrot.lane.b32.xlu0 %v2044, 96
    %v2048 = vpop.permute.xlu0 %2047
    %v2050 = vadd.f32 %v1350, %v2048
    %v2051 = vmul.f32 %v2050, 0.5
    %v2052 = vtanh.pop %v2051
    %v2053 = vmul.f32 %v2052, 0.5
    %v2054 = vadd.f32 %v2053, 0.5
    %v2056 = vrot.slane %v1933, 6
    %v2058 = vmul.f32 %v1999, %v2056
    %2060 = vrot.lane.b32.xlu0 %v2025, 64
    %v2061 = vpop.permute.xlu0 %2060
    %v2063 = vmul.f32 %v1970, %v2061
    %2065 = vrot.lane.b32.xlu0 %v2063, 32
    %v2066 = vpop.permute.xlu0 %2065
    %v2068 = vadd.f32 %v2058, %v2066
    %v2069 = vtanh.pop %v2068
    %2071 = vrot.lane.b32.xlu0 %v2069, 64
    %v2072 = vpop.permute.xlu0 %2071
    %v2074 = vmul.f32 %v2054, %v2072
    %2076 = vrot.lane.b32.xlu0 %v2074, 32
    %v2077 = vpop.permute.xlu0 %2076
    %v2078 = vsel %vm149, %v2077, 0
    %2080 = vmatpush.msra.mxu0 0.0
    %2081 = vmatpush.msra.mxu0 0.0
    %2082 = vmatpush.msra.mxu0 0.0
    %2083 = vmatpush.msra.mxu0 0.0
    %2084 = vmatpush.msra.mxu0 0.0
    %2085 = vmatpush.msra.mxu0 0.0
    %2086 = vmatpush.msra.mxu0 0.0
    %2087 = vmatpush.msra.mxu0 0.0
    %2088 = vmatpush.msra.mxu0 0.0
    %2089 = vmatpush.msra.mxu0 0.0
    %2090 = vmatpush.msra.mxu0 0.0
    %2091 = vmatpush.msra.mxu0 0.0
    %2092 = vmatpush.msra.mxu0 %v1314
    %2093 = vmatpush.msra.mxu0 %v1313
    %2094 = vmatpush.msra.mxu0 %v1312
    %2095 = vmatpush.msra.mxu0 %v1311
    %2096 = vmatmul.f32.gmra.mxu0 %v2078
    %v2097 = vpop.f32.mrf.mxu0
    %v2098 = vadd.f32 0.0, %v2097
    %2099 = vdwg.mxu0
    %v2101 = vrot.slane %v2098, 6
    %v2103 = vadd.f32 %v1350, %v2101
    %v2104 = vmul.f32 %v2103, 0.5
    %v2105 = vtanh.pop %v2104
    %v2106 = vmul.f32 %v2105, 0.5
    %v2107 = vadd.f32 %v2106, 0.5
    %2108 = vmatpush.msra.mxu0 0.0
    %2109 = vmatpush.msra.mxu0 0.0
    %2110 = vmatpush.msra.mxu0 0.0
    %2111 = vmatpush.msra.mxu0 0.0
    %2112 = vmatpush.msra.mxu0 0.0
    %2113 = vmatpush.msra.mxu0 0.0
    %2114 = vmatpush.msra.mxu0 0.0
    %2115 = vmatpush.msra.mxu0 0.0
    %2116 = vmatpush.msra.mxu0 0.0
    %2117 = vmatpush.msra.mxu0 0.0
    %2118 = vmatpush.msra.mxu0 0.0
    %2119 = vmatpush.msra.mxu0 0.0
    %2120 = vmatpush.msra.mxu0 %v1388
    %2121 = vmatpush.msra.mxu0 %v1386
    %2122 = vmatpush.msra.mxu0 %v1384
    %2123 = vmatpush.msra.mxu0 %v1382
    %2124 = vmatmul.f32.gmra.mxu0 %v2078
    %v2125 = vpop.f32.mrf.mxu0
    %v2126 = vadd.f32 0.0, %v2125
    %2127 = vdwg.mxu0
    %v2129 = vrot.slane %v2126, 6
    %2130 = vrot.lane.b32.xlu0 %v2129, 32
    %v2131 = vpop.permute.xlu0 %2130
    %v2133 = vadd.f32 %v1350, %v2131
    %v2134 = vmul.f32 %v2133, 0.5
    %v2135 = vtanh.pop %v2134
    %v2136 = vmul.f32 %v2135, 0.5
    %v2137 = vadd.f32 %v2136, 0.5
    %2138 = vmatpush.msra.mxu0 0.0
    %2139 = vmatpush.msra.mxu0 0.0
    %2140 = vmatpush.msra.mxu0 0.0
    %2141 = vmatpush.msra.mxu0 0.0
    %2142 = vmatpush.msra.mxu0 0.0
    %2143 = vmatpush.msra.mxu0 0.0
    %2144 = vmatpush.msra.mxu0 0.0
    %2145 = vmatpush.msra.mxu0 0.0
    %2146 = vmatpush.msra.mxu0 0.0
    %2147 = vmatpush.msra.mxu0 0.0
    %2148 = vmatpush.msra.mxu0 0.0
    %2149 = vmatpush.msra.mxu0 0.0
    %2150 = vmatpush.msra.mxu0 %v1429
    %2151 = vmatpush.msra.mxu0 %v1427
    %2152 = vmatpush.msra.mxu0 %v1425
    %2153 = vmatpush.msra.mxu0 %v1423
    %2154 = vmatmul.f32.gmra.mxu0 %v2078
    %v2155 = vpop.f32.mrf.mxu0
    %v2156 = vadd.f32 0.0, %v2155
    %2157 = vdwg.mxu0
    %v2159 = vrot.slane %v2156, 6
    %2160 = vrot.lane.b32.xlu0 %v2159, 64
    %v2161 = vpop.permute.xlu0 %2160
    %v2163 = vadd.f32 %v1350, %v2161
    %v2164 = vtanh.pop %v2163
    %2165 = vmatpush.msra.mxu0 0.0
    %2166 = vmatpush.msra.mxu0 0.0
    %2167 = vmatpush.msra.mxu0 0.0
    %2168 = vmatpush.msra.mxu0 0.0
    %2169 = vmatpush.msra.mxu0 0.0
    %2170 = vmatpush.msra.mxu0 0.0
    %2171 = vmatpush.msra.mxu0 0.0
    %2172 = vmatpush.msra.mxu0 0.0
    %2173 = vmatpush.msra.mxu0 0.0
    %2174 = vmatpush.msra.mxu0 0.0
    %2175 = vmatpush.msra.mxu0 0.0
    %2176 = vmatpush.msra.mxu0 0.0
    %2177 = vmatpush.msra.mxu0 %v1467
    %2178 = vmatpush.msra.mxu0 %v1465
    %2179 = vmatpush.msra.mxu0 %v1463
    %2180 = vmatpush.msra.mxu0 %v1461
    %2181 = vmatmul.f32.gmra.mxu0 %v2078
    %v2182 = vpop.f32.mrf.mxu0
    %v2183 = vadd.f32 0.0, %v2182
    %2184 = vdwg.mxu0
    %v2186 = vrot.slane %v2183, 6
    %2187 = vrot.lane.b32.xlu0 %v2186, 96
    %v2188 = vpop.permute.xlu0 %2187
    %v2190 = vadd.f32 %v1350, %v2188
    %v2191 = vmul.f32 %v2190, 0.5
    %v2192 = vtanh.pop %v2191
    %v2193 = vmul.f32 %v2192, 0.5
    %v2194 = vadd.f32 %v2193, 0.5
    %v2196 = vrot.slane %v2068, 6
    %v2198 = vmul.f32 %v2137, %v2196
    %2200 = vrot.lane.b32.xlu0 %v2164, 64
    %v2201 = vpop.permute.xlu0 %2200
    %v2203 = vmul.f32 %v2107, %v2201
    %2205 = vrot.lane.b32.xlu0 %v2203, 32
    %v2206 = vpop.permute.xlu0 %2205
    %v2208 = vadd.f32 %v2198, %v2206
    %v2209 = vtanh.pop %v2208
    %2211 = vrot.lane.b32.xlu0 %v2209, 64
    %v2212 = vpop.permute.xlu0 %2211
    %v2214 = vmul.f32 %v2194, %v2212
    %v2216 = vrot.slane %v2214, 2
    %2217 = vrot.lane.b32.xlu0 %v2216, 32
    %v2218 = vpop.permute.xlu0 %2217
    %v2219 = vsel %vm149, %v2218, 0
    %2221 = vmatpush.msra.mxu0 0.0
    %2222 = vmatpush.msra.mxu0 0.0
    %2223 = vmatpush.msra.mxu0 0.0
    %2224 = vmatpush.msra.mxu0 0.0
    %2225 = vmatpush.msra.mxu0 0.0
    %2226 = vmatpush.msra.mxu0 0.0
    %2227 = vmatpush.msra.mxu0 0.0
    %2228 = vmatpush.msra.mxu0 0.0
    %2229 = vmatpush.msra.mxu0 0.0
    %2230 = vmatpush.msra.mxu0 0.0
    %2231 = vmatpush.msra.mxu0 0.0
    %2232 = vmatpush.msra.mxu0 0.0
    %2233 = vmatpush.msra.mxu0 %v1314
    %2234 = vmatpush.msra.mxu0 %v1313
    %2235 = vmatpush.msra.mxu0 %v1312
    %2236 = vmatpush.msra.mxu0 %v1311
    %2237 = vmatmul.f32.gmra.mxu0 %v2219
    %v2238 = vpop.f32.mrf.mxu0
    %v2239 = vadd.f32 0.0, %v2238
    %2240 = vdwg.mxu0
    %v2242 = vrot.slane %v2239, 4
    %v2244 = vadd.f32 %v1350, %v2242
    %v2245 = vmul.f32 %v2244, 0.5
    %v2246 = vtanh.pop %v2245
    %v2247 = vmul.f32 %v2246, 0.5
    %v2248 = vadd.f32 %v2247, 0.5
    %2249 = vmatpush.msra.mxu0 0.0
    %2250 = vmatpush.msra.mxu0 0.0
    %2251 = vmatpush.msra.mxu0 0.0
    %2252 = vmatpush.msra.mxu0 0.0
    %2253 = vmatpush.msra.mxu0 0.0
    %2254 = vmatpush.msra.mxu0 0.0
    %2255 = vmatpush.msra.mxu0 0.0
    %2256 = vmatpush.msra.mxu0 0.0
    %2257 = vmatpush.msra.mxu0 0.0
    %2258 = vmatpush.msra.mxu0 0.0
    %2259 = vmatpush.msra.mxu0 0.0
    %2260 = vmatpush.msra.mxu0 0.0
    %2261 = vmatpush.msra.mxu0 %v1388
    %2262 = vmatpush.msra.mxu0 %v1386
    %2263 = vmatpush.msra.mxu0 %v1384
    %2264 = vmatpush.msra.mxu0 %v1382
    %2265 = vmatmul.f32.gmra.mxu0 %v2219
    %v2266 = vpop.f32.mrf.mxu0
    %v2267 = vadd.f32 0.0, %v2266
    %2268 = vdwg.mxu0
    %v2270 = vrot.slane %v2267, 4
    %2271 = vrot.lane.b32.xlu0 %v2270, 32
    %v2272 = vpop.permute.xlu0 %2271
    %v2274 = vadd.f32 %v1350, %v2272
    %v2275 = vmul.f32 %v2274, 0.5
    %v2276 = vtanh.pop %v2275
    %v2277 = vmul.f32 %v2276, 0.5
    %v2278 = vadd.f32 %v2277, 0.5
    %2279 = vmatpush.msra.mxu0 0.0
    %2280 = vmatpush.msra.mxu0 0.0
    %2281 = vmatpush.msra.mxu0 0.0
    %2282 = vmatpush.msra.mxu0 0.0
    %2283 = vmatpush.msra.mxu0 0.0
    %2284 = vmatpush.msra.mxu0 0.0
    %2285 = vmatpush.msra.mxu0 0.0
    %2286 = vmatpush.msra.mxu0 0.0
    %2287 = vmatpush.msra.mxu0 0.0
    %2288 = vmatpush.msra.mxu0 0.0
    %2289 = vmatpush.msra.mxu0 0.0
    %2290 = vmatpush.msra.mxu0 0.0
    %2291 = vmatpush.msra.mxu0 %v1429
    %2292 = vmatpush.msra.mxu0 %v1427
    %2293 = vmatpush.msra.mxu0 %v1425
    %2294 = vmatpush.msra.mxu0 %v1423
    %2295 = vmatmul.f32.gmra.mxu0 %v2219
    %v2296 = vpop.f32.mrf.mxu0
    %v2297 = vadd.f32 0.0, %v2296
    %2298 = vdwg.mxu0
    %v2300 = vrot.slane %v2297, 4
    %2301 = vrot.lane.b32.xlu0 %v2300, 64
    %v2302 = vpop.permute.xlu0 %2301
    %v2304 = vadd.f32 %v1350, %v2302
    %v2305 = vtanh.pop %v2304
    %2306 = vmatpush.msra.mxu0 0.0
    %2307 = vmatpush.msra.mxu0 0.0
    %2308 = vmatpush.msra.mxu0 0.0
    %2309 = vmatpush.msra.mxu0 0.0
    %2310 = vmatpush.msra.mxu0 0.0
    %2311 = vmatpush.msra.mxu0 0.0
    %2312 = vmatpush.msra.mxu0 0.0
    %2313 = vmatpush.msra.mxu0 0.0
    %2314 = vmatpush.msra.mxu0 0.0
    %2315 = vmatpush.msra.mxu0 0.0
    %2316 = vmatpush.msra.mxu0 0.0
    %2317 = vmatpush.msra.mxu0 0.0
    %2318 = vmatpush.msra.mxu0 %v1467
    %2319 = vmatpush.msra.mxu0 %v1465
    %2320 = vmatpush.msra.mxu0 %v1463
    %2321 = vmatpush.msra.mxu0 %v1461
    %2322 = vmatmul.f32.gmra.mxu0 %v2219
    %v2323 = vpop.f32.mrf.mxu0
    %v2324 = vadd.f32 0.0, %v2323
    %2325 = vdwg.mxu0
    %v2327 = vrot.slane %v2324, 4
    %2328 = vrot.lane.b32.xlu0 %v2327, 96
    %v2329 = vpop.permute.xlu0 %2328
    %v2331 = vadd.f32 %v1350, %v2329
    %v2332 = vmul.f32 %v2331, 0.5
    %v2333 = vtanh.pop %v2332
    %v2334 = vmul.f32 %v2333, 0.5
    %v2335 = vadd.f32 %v2334, 0.5
    %v2337 = vrot.slane %v2208, 6
    %v2339 = vmul.f32 %v2278, %v2337
    %2341 = vrot.lane.b32.xlu0 %v2305, 64
    %v2342 = vpop.permute.xlu0 %2341
    %v2344 = vmul.f32 %v2248, %v2342
    %2346 = vrot.lane.b32.xlu0 %v2344, 32
    %v2347 = vpop.permute.xlu0 %2346
    %v2349 = vadd.f32 %v2339, %v2347
    %v2350 = vtanh.pop %v2349
    %2352 = vrot.lane.b32.xlu0 %v2350, 64
    %v2353 = vpop.permute.xlu0 %2352
    %v2355 = vmul.f32 %v2335, %v2353
    %v2357 = vrot.slane %v2355, 4
    %2358 = vrot.lane.b32.xlu0 %v2357, 32
    %v2359 = vpop.permute.xlu0 %2358
    %v2360 = vsel %vm149, %v2359, 0
    %2362 = vmatpush.msra.mxu0 0.0
    %2363 = vmatpush.msra.mxu0 0.0
    %2364 = vmatpush.msra.mxu0 0.0
    %2365 = vmatpush.msra.mxu0 0.0
    %2366 = vmatpush.msra.mxu0 0.0
    %2367 = vmatpush.msra.mxu0 0.0
    %2368 = vmatpush.msra.mxu0 0.0
    %2369 = vmatpush.msra.mxu0 0.0
    %2370 = vmatpush.msra.mxu0 0.0
    %2371 = vmatpush.msra.mxu0 0.0
    %2372 = vmatpush.msra.mxu0 0.0
    %2373 = vmatpush.msra.mxu0 0.0
    %2374 = vmatpush.msra.mxu0 %v1314
    %2375 = vmatpush.msra.mxu0 %v1313
    %2376 = vmatpush.msra.mxu0 %v1312
    %2377 = vmatpush.msra.mxu0 %v1311
    %2378 = vmatmul.f32.gmra.mxu0 %v2360
    %v2379 = vpop.f32.mrf.mxu0
    %v2380 = vadd.f32 0.0, %v2379
    %2381 = vdwg.mxu0
    %v2383 = vrot.slane %v2380, 2
    %v2385 = vadd.f32 %v1350, %v2383
    %v2386 = vmul.f32 %v2385, 0.5
    %v2387 = vtanh.pop %v2386
    %v2388 = vmul.f32 %v2387, 0.5
    %v2389 = vadd.f32 %v2388, 0.5
    %2390 = vmatpush.msra.mxu0 0.0
    %2391 = vmatpush.msra.mxu0 0.0
    %2392 = vmatpush.msra.mxu0 0.0
    %2393 = vmatpush.msra.mxu0 0.0
    %2394 = vmatpush.msra.mxu0 0.0
    %2395 = vmatpush.msra.mxu0 0.0
    %2396 = vmatpush.msra.mxu0 0.0
    %2397 = vmatpush.msra.mxu0 0.0
    %2398 = vmatpush.msra.mxu0 0.0
    %2399 = vmatpush.msra.mxu0 0.0
    %2400 = vmatpush.msra.mxu0 0.0
    %2401 = vmatpush.msra.mxu0 0.0
    %2402 = vmatpush.msra.mxu0 %v1388
    %2403 = vmatpush.msra.mxu0 %v1386
    %2404 = vmatpush.msra.mxu0 %v1384
    %2405 = vmatpush.msra.mxu0 %v1382
    %2406 = vmatmul.f32.gmra.mxu0 %v2360
    %v2407 = vpop.f32.mrf.mxu0
    %v2408 = vadd.f32 0.0, %v2407
    %2409 = vdwg.mxu0
    %v2411 = vrot.slane %v2408, 2
    %2412 = vrot.lane.b32.xlu0 %v2411, 32
    %v2413 = vpop.permute.xlu0 %2412
    %v2415 = vadd.f32 %v1350, %v2413
    %v2416 = vmul.f32 %v2415, 0.5
    %v2417 = vtanh.pop %v2416
    %v2418 = vmul.f32 %v2417, 0.5
    %v2419 = vadd.f32 %v2418, 0.5
    %2420 = vmatpush.msra.mxu0 0.0
    %2421 = vmatpush.msra.mxu0 0.0
    %2422 = vmatpush.msra.mxu0 0.0
    %2423 = vmatpush.msra.mxu0 0.0
    %2424 = vmatpush.msra.mxu0 0.0
    %2425 = vmatpush.msra.mxu0 0.0
    %2426 = vmatpush.msra.mxu0 0.0
    %2427 = vmatpush.msra.mxu0 0.0
    %2428 = vmatpush.msra.mxu0 0.0
    %2429 = vmatpush.msra.mxu0 0.0
    %2430 = vmatpush.msra.mxu0 0.0
    %2431 = vmatpush.msra.mxu0 0.0
    %2432 = vmatpush.msra.mxu0 %v1429
    %2433 = vmatpush.msra.mxu0 %v1427
    %2434 = vmatpush.msra.mxu0 %v1425
    %2435 = vmatpush.msra.mxu0 %v1423
    %2436 = vmatmul.f32.gmra.mxu0 %v2360
    %v2437 = vpop.f32.mrf.mxu0
    %v2438 = vadd.f32 0.0, %v2437
    %2439 = vdwg.mxu0
    %v2441 = vrot.slane %v2438, 2
    %2442 = vrot.lane.b32.xlu0 %v2441, 64
    %v2443 = vpop.permute.xlu0 %2442
    %v2445 = vadd.f32 %v1350, %v2443
    %v2446 = vtanh.pop %v2445
    %2447 = vmatpush.msra.mxu0 0.0
    %2448 = vmatpush.msra.mxu0 0.0
    %2449 = vmatpush.msra.mxu0 0.0
    %2450 = vmatpush.msra.mxu0 0.0
    %2451 = vmatpush.msra.mxu0 0.0
    %2452 = vmatpush.msra.mxu0 0.0
    %2453 = vmatpush.msra.mxu0 0.0
    %2454 = vmatpush.msra.mxu0 0.0
    %2455 = vmatpush.msra.mxu0 0.0
    %2456 = vmatpush.msra.mxu0 0.0
    %2457 = vmatpush.msra.mxu0 0.0
    %2458 = vmatpush.msra.mxu0 0.0
    %2459 = vmatpush.msra.mxu0 %v1467
    %2460 = vmatpush.msra.mxu0 %v1465
    %2461 = vmatpush.msra.mxu0 %v1463
    %2462 = vmatpush.msra.mxu0 %v1461
    %2463 = vmatmul.f32.gmra.mxu0 %v2360
    %v2464 = vpop.f32.mrf.mxu0
    %v2465 = vadd.f32 0.0, %v2464
    %2466 = vdwg.mxu0
    %v2468 = vrot.slane %v2465, 2
    %2469 = vrot.lane.b32.xlu0 %v2468, 96
    %v2470 = vpop.permute.xlu0 %2469
    %v2472 = vadd.f32 %v1350, %v2470
    %v2473 = vmul.f32 %v2472, 0.5
    %v2474 = vtanh.pop %v2473
    %v2475 = vmul.f32 %v2474, 0.5
    %v2476 = vadd.f32 %v2475, 0.5
    %v2478 = vrot.slane %v2349, 6
    %v2480 = vmul.f32 %v2419, %v2478
    %2482 = vrot.lane.b32.xlu0 %v2446, 64
    %v2483 = vpop.permute.xlu0 %2482
    %v2485 = vmul.f32 %v2389, %v2483
    %2487 = vrot.lane.b32.xlu0 %v2485, 32
    %v2488 = vpop.permute.xlu0 %2487
    %v2490 = vadd.f32 %v2480, %v2488
    %v2491 = vtanh.pop %v2490
    %2493 = vrot.lane.b32.xlu0 %v2491, 64
    %v2494 = vpop.permute.xlu0 %2493
    %v2496 = vmul.f32 %v2476, %v2494
    %v2497 = vsel %vm1298, %v1517, %v1657
    %v2498 = vsel %vm1300, %v2497, %v1798
    %v2499 = vsel %vm1302, %v2498, %v1939
    %v2500 = vsel %vm1298, %v2074, %v2214
    %v2501 = vsel %vm1300, %v2500, %v2355
    %v2502 = vsel %vm1302, %v2501, %v2496
    %v2503 = vld [vmem:[#allocation8] sm:$0xff]
    %v2504 = vld [vmem:[#allocation8 + $0x8] sm:$0xff]
    %v2505 = vld [vmem:[#allocation8 + $0x10] sm:$0xff]
    %v2506 = vld [vmem:[#allocation8 + $0x18] sm:$0xff]
    %v2507 = vld [vmem:[#allocation10] sm:$0xff]
    %v2508 = vld [vmem:[#allocation10 + $0x8] sm:$0xff]
    %v2509 = vld [vmem:[#allocation10 + $0x10] sm:$0xff]
    %v2510 = vld [vmem:[#allocation10 + $0x18] sm:$0xff]
    %v2511 = vld [vmem:[%s9] sm:$0x1]
    %v2513 = vperm.slane %v2511, 0
    %2517 = vrot.lane.b32.xlu0 %v2499, 32
    %v2518 = vpop.permute.xlu0 %2517
    %2519 = vrot.lane.b32.xlu0 %v2502, 32
    %v2520 = vpop.permute.xlu0 %2519
    %v2521 = vsel %vm149, %v2518, 0
    %v2523 = vsel %vm149, %v2520, 0
    %2525 = vmatpush.msra.mxu0 0.0
    %2526 = vmatpush.msra.mxu0 0.0
    %2527 = vmatpush.msra.mxu0 0.0
    %2528 = vmatpush.msra.mxu0 0.0
    %2529 = vmatpush.msra.mxu0 0.0
    %2530 = vmatpush.msra.mxu0 0.0
    %2531 = vmatpush.msra.mxu0 0.0
    %2532 = vmatpush.msra.mxu0 0.0
    %2533 = vmatpush.msra.mxu0 0.0
    %2534 = vmatpush.msra.mxu0 0.0
    %2535 = vmatpush.msra.mxu0 0.0
    %2536 = vmatpush.msra.mxu0 0.0
    %2537 = vmatpush.msra.mxu0 %v2506
    %2538 = vmatpush.msra.mxu0 %v2505
    %2539 = vmatpush.msra.mxu0 %v2504
    %2540 = vmatpush.msra.mxu0 %v2503
    %2541 = vmatmul.f32.gmra.mxu0 %v2521
    %v2542 = vpop.f32.mrf.mxu0
    %v2543 = vadd.f32 %v2513, %v2542
    %2544 = vmatmul.f32.gmra.mxu0 %v2523
    %v2545 = vpop.f32.mrf.mxu0
    %v2546 = vadd.f32 %v2513, %v2545
    %2547 = vdwg.mxu0
    %2548 = vmatpush.msra.mxu0 0.0
    %2549 = vmatpush.msra.mxu0 0.0
    %2550 = vmatpush.msra.mxu0 0.0
    %2551 = vmatpush.msra.mxu0 0.0
    %2552 = vmatpush.msra.mxu0 0.0
    %2553 = vmatpush.msra.mxu0 0.0
    %2554 = vmatpush.msra.mxu0 0.0
    %2555 = vmatpush.msra.mxu0 0.0
    %2556 = vmatpush.msra.mxu0 0.0
    %2557 = vmatpush.msra.mxu0 0.0
    %2558 = vmatpush.msra.mxu0 0.0
    %2559 = vmatpush.msra.mxu0 0.0
    %2560 = vmatpush.msra.mxu0 %v2510
    %2561 = vmatpush.msra.mxu0 %v2509
    %2562 = vmatpush.msra.mxu0 %v2508
    %2563 = vmatpush.msra.mxu0 %v2507
    %2564 = vmatmul.f32.gmra.mxu0 %v151
    %v2565 = vpop.f32.mrf.mxu0
    %v2566 = vadd.f32 0.0, %v2565
    %2567 = vdwg.mxu0
    %v2568 = vadd.f32 %v2543, %v2566
    %v2569 = vmul.f32 %v2568, 0.5
    %v2570 = vtanh.pop %v2569
    %v2571 = vmul.f32 %v2570, 0.5
    %v2572 = vadd.f32 %v2571, 0.5
    %2577 = vrot.lane.b32.xlu0 %v2507, 96
    %v2578 = vpop.permute.xlu0 %2577
    %2579 = vrot.lane.b32.xlu0 %v2508, 96
    %v2580 = vpop.permute.xlu0 %2579
    %2581 = vrot.lane.b32.xlu0 %v2509, 96
    %v2582 = vpop.permute.xlu0 %2581
    %2583 = vrot.lane.b32.xlu0 %v2510, 96
    %v2584 = vpop.permute.xlu0 %2583
    %2589 = vmatpush.msra.mxu0 0.0
    %2590 = vmatpush.msra.mxu0 0.0
    %2591 = vmatpush.msra.mxu0 0.0
    %2592 = vmatpush.msra.mxu0 0.0
    %2593 = vmatpush.msra.mxu0 0.0
    %2594 = vmatpush.msra.mxu0 0.0
    %2595 = vmatpush.msra.mxu0 0.0
    %2596 = vmatpush.msra.mxu0 0.0
    %2597 = vmatpush.msra.mxu0 0.0
    %2598 = vmatpush.msra.mxu0 0.0
    %2599 = vmatpush.msra.mxu0 0.0
    %2600 = vmatpush.msra.mxu0 0.0
    %2601 = vmatpush.msra.mxu0 %v2584
    %2602 = vmatpush.msra.mxu0 %v2582
    %2603 = vmatpush.msra.mxu0 %v2580
    %2604 = vmatpush.msra.mxu0 %v2578
    %2605 = vmatmul.f32.gmra.mxu0 %v151
    %v2606 = vpop.f32.mrf.mxu0
    %v2607 = vadd.f32 0.0, %v2606
    %2608 = vdwg.mxu0
    %2610 = vrot.lane.b32.xlu0 %v2607, 32
    %v2611 = vpop.permute.xlu0 %2610
    %v2613 = vadd.f32 %v2543, %v2611
    %v2614 = vmul.f32 %v2613, 0.5
    %v2615 = vtanh.pop %v2614
    %v2616 = vmul.f32 %v2615, 0.5
    %v2617 = vadd.f32 %v2616, 0.5
    %2618 = vrot.lane.b32.xlu0 %v2507, 64
    %v2619 = vpop.permute.xlu0 %2618
    %2620 = vrot.lane.b32.xlu0 %v2508, 64
    %v2621 = vpop.permute.xlu0 %2620
    %2622 = vrot.lane.b32.xlu0 %v2509, 64
    %v2623 = vpop.permute.xlu0 %2622
    %2624 = vrot.lane.b32.xlu0 %v2510, 64
    %v2625 = vpop.permute.xlu0 %2624
    %2630 = vmatpush.msra.mxu0 0.0
    %2631 = vmatpush.msra.mxu0 0.0
    %2632 = vmatpush.msra.mxu0 0.0
    %2633 = vmatpush.msra.mxu0 0.0
    %2634 = vmatpush.msra.mxu0 0.0
    %2635 = vmatpush.msra.mxu0 0.0
    %2636 = vmatpush.msra.mxu0 0.0
    %2637 = vmatpush.msra.mxu0 0.0
    %2638 = vmatpush.msra.mxu0 0.0
    %2639 = vmatpush.msra.mxu0 0.0
    %2640 = vmatpush.msra.mxu0 0.0
    %2641 = vmatpush.msra.mxu0 0.0
    %2642 = vmatpush.msra.mxu0 %v2625
    %2643 = vmatpush.msra.mxu0 %v2623
    %2644 = vmatpush.msra.mxu0 %v2621
    %2645 = vmatpush.msra.mxu0 %v2619
    %2646 = vmatmul.f32.gmra.mxu0 %v151
    %v2647 = vpop.f32.mrf.mxu0
    %v2648 = vadd.f32 0.0, %v2647
    %2649 = vdwg.mxu0
    %2651 = vrot.lane.b32.xlu0 %v2648, 64
    %v2652 = vpop.permute.xlu0 %2651
    %v2654 = vadd.f32 %v2543, %v2652
    %v2655 = vtanh.pop %v2654
    %2656 = vrot.lane.b32.xlu0 %v2507, 32
    %v2657 = vpop.permute.xlu0 %2656
    %2658 = vrot.lane.b32.xlu0 %v2508, 32
    %v2659 = vpop.permute.xlu0 %2658
    %2660 = vrot.lane.b32.xlu0 %v2509, 32
    %v2661 = vpop.permute.xlu0 %2660
    %2662 = vrot.lane.b32.xlu0 %v2510, 32
    %v2663 = vpop.permute.xlu0 %2662
    %2668 = vmatpush.msra.mxu0 0.0
    %2669 = vmatpush.msra.mxu0 0.0
    %2670 = vmatpush.msra.mxu0 0.0
    %2671 = vmatpush.msra.mxu0 0.0
    %2672 = vmatpush.msra.mxu0 0.0
    %2673 = vmatpush.msra.mxu0 0.0
    %2674 = vmatpush.msra.mxu0 0.0
    %2675 = vmatpush.msra.mxu0 0.0
    %2676 = vmatpush.msra.mxu0 0.0
    %2677 = vmatpush.msra.mxu0 0.0
    %2678 = vmatpush.msra.mxu0 0.0
    %2679 = vmatpush.msra.mxu0 0.0
    %2680 = vmatpush.msra.mxu0 %v2663
    %2681 = vmatpush.msra.mxu0 %v2661
    %2682 = vmatpush.msra.mxu0 %v2659
    %2683 = vmatpush.msra.mxu0 %v2657
    %2684 = vmatmul.f32.gmra.mxu0 %v151
    %v2685 = vpop.f32.mrf.mxu0
    %v2686 = vadd.f32 0.0, %v2685
    %2687 = vdwg.mxu0
    %2689 = vrot.lane.b32.xlu0 %v2686, 96
    %v2690 = vpop.permute.xlu0 %2689
    %v2692 = vadd.f32 %v2543, %v2690
    %v2693 = vmul.f32 %v2692, 0.5
    %v2694 = vtanh.pop %v2693
    %v2695 = vmul.f32 %v2694, 0.5
    %v2696 = vadd.f32 %v2695, 0.5
    %v2697 = vmul.f32 %v2617, 0.0
    %2699 = vrot.lane.b32.xlu0 %v2655, 64
    %v2700 = vpop.permute.xlu0 %2699
    %v2702 = vmul.f32 %v2572, %v2700
    %2704 = vrot.lane.b32.xlu0 %v2702, 32
    %v2705 = vpop.permute.xlu0 %2704
    %v2707 = vadd.f32 %v2697, %v2705
    %v2708 = vtanh.pop %v2707
    %2710 = vrot.lane.b32.xlu0 %v2708, 64
    %v2711 = vpop.permute.xlu0 %2710
    %v2713 = vmul.f32 %v2696, %v2711
    %2715 = vrot.lane.b32.xlu0 %v2713, 32
    %v2716 = vpop.permute.xlu0 %2715
    %v2717 = vsel %vm149, %v2716, 0
    %2719 = vmatpush.msra.mxu0 0.0
    %2720 = vmatpush.msra.mxu0 0.0
    %2721 = vmatpush.msra.mxu0 0.0
    %2722 = vmatpush.msra.mxu0 0.0
    %2723 = vmatpush.msra.mxu0 0.0
    %2724 = vmatpush.msra.mxu0 0.0
    %2725 = vmatpush.msra.mxu0 0.0
    %2726 = vmatpush.msra.mxu0 0.0
    %2727 = vmatpush.msra.mxu0 0.0
    %2728 = vmatpush.msra.mxu0 0.0
    %2729 = vmatpush.msra.mxu0 0.0
    %2730 = vmatpush.msra.mxu0 0.0
    %2731 = vmatpush.msra.mxu0 %v2510
    %2732 = vmatpush.msra.mxu0 %v2509
    %2733 = vmatpush.msra.mxu0 %v2508
    %2734 = vmatpush.msra.mxu0 %v2507
    %2735 = vmatmul.f32.gmra.mxu0 %v2717
    %v2736 = vpop.f32.mrf.mxu0
    %v2737 = vadd.f32 0.0, %v2736
    %2738 = vdwg.mxu0
    %v2740 = vrot.slane %v2737, 6
    %v2742 = vadd.f32 %v2543, %v2740
    %v2743 = vmul.f32 %v2742, 0.5
    %v2744 = vtanh.pop %v2743
    %v2745 = vmul.f32 %v2744, 0.5
    %v2746 = vadd.f32 %v2745, 0.5
    %2747 = vmatpush.msra.mxu0 0.0
    %2748 = vmatpush.msra.mxu0 0.0
    %2749 = vmatpush.msra.mxu0 0.0
    %2750 = vmatpush.msra.mxu0 0.0
    %2751 = vmatpush.msra.mxu0 0.0
    %2752 = vmatpush.msra.mxu0 0.0
    %2753 = vmatpush.msra.mxu0 0.0
    %2754 = vmatpush.msra.mxu0 0.0
    %2755 = vmatpush.msra.mxu0 0.0
    %2756 = vmatpush.msra.mxu0 0.0
    %2757 = vmatpush.msra.mxu0 0.0
    %2758 = vmatpush.msra.mxu0 0.0
    %2759 = vmatpush.msra.mxu0 %v2584
    %2760 = vmatpush.msra.mxu0 %v2582
    %2761 = vmatpush.msra.mxu0 %v2580
    %2762 = vmatpush.msra.mxu0 %v2578
    %2763 = vmatmul.f32.gmra.mxu0 %v2717
    %v2764 = vpop.f32.mrf.mxu0
    %v2765 = vadd.f32 0.0, %v2764
    %2766 = vdwg.mxu0
    %v2768 = vrot.slane %v2765, 6
    %2769 = vrot.lane.b32.xlu0 %v2768, 32
    %v2770 = vpop.permute.xlu0 %2769
    %v2772 = vadd.f32 %v2543, %v2770
    %v2773 = vmul.f32 %v2772, 0.5
    %v2774 = vtanh.pop %v2773
    %v2775 = vmul.f32 %v2774, 0.5
    %v2776 = vadd.f32 %v2775, 0.5
    %2777 = vmatpush.msra.mxu0 0.0
    %2778 = vmatpush.msra.mxu0 0.0
    %2779 = vmatpush.msra.mxu0 0.0
    %2780 = vmatpush.msra.mxu0 0.0
    %2781 = vmatpush.msra.mxu0 0.0
    %2782 = vmatpush.msra.mxu0 0.0
    %2783 = vmatpush.msra.mxu0 0.0
    %2784 = vmatpush.msra.mxu0 0.0
    %2785 = vmatpush.msra.mxu0 0.0
    %2786 = vmatpush.msra.mxu0 0.0
    %2787 = vmatpush.msra.mxu0 0.0
    %2788 = vmatpush.msra.mxu0 0.0
    %2789 = vmatpush.msra.mxu0 %v2625
    %2790 = vmatpush.msra.mxu0 %v2623
    %2791 = vmatpush.msra.mxu0 %v2621
    %2792 = vmatpush.msra.mxu0 %v2619
    %2793 = vmatmul.f32.gmra.mxu0 %v2717
    %v2794 = vpop.f32.mrf.mxu0
    %v2795 = vadd.f32 0.0, %v2794
    %2796 = vdwg.mxu0
    %v2798 = vrot.slane %v2795, 6
    %2799 = vrot.lane.b32.xlu0 %v2798, 64
    %v2800 = vpop.permute.xlu0 %2799
    %v2802 = vadd.f32 %v2543, %v2800
    %v2803 = vtanh.pop %v2802
    %2804 = vmatpush.msra.mxu0 0.0
    %2805 = vmatpush.msra.mxu0 0.0
    %2806 = vmatpush.msra.mxu0 0.0
    %2807 = vmatpush.msra.mxu0 0.0
    %2808 = vmatpush.msra.mxu0 0.0
    %2809 = vmatpush.msra.mxu0 0.0
    %2810 = vmatpush.msra.mxu0 0.0
    %2811 = vmatpush.msra.mxu0 0.0
    %2812 = vmatpush.msra.mxu0 0.0
    %2813 = vmatpush.msra.mxu0 0.0
    %2814 = vmatpush.msra.mxu0 0.0
    %2815 = vmatpush.msra.mxu0 0.0
    %2816 = vmatpush.msra.mxu0 %v2663
    %2817 = vmatpush.msra.mxu0 %v2661
    %2818 = vmatpush.msra.mxu0 %v2659
    %2819 = vmatpush.msra.mxu0 %v2657
    %2820 = vmatmul.f32.gmra.mxu0 %v2717
    %v2821 = vpop.f32.mrf.mxu0
    %v2822 = vadd.f32 0.0, %v2821
    %2823 = vdwg.mxu0
    %v2825 = vrot.slane %v2822, 6
    %2826 = vrot.lane.b32.xlu0 %v2825, 96
    %v2827 = vpop.permute.xlu0 %2826
    %v2829 = vadd.f32 %v2543, %v2827
    %v2830 = vmul.f32 %v2829, 0.5
    %v2831 = vtanh.pop %v2830
    %v2832 = vmul.f32 %v2831, 0.5
    %v2833 = vadd.f32 %v2832, 0.5
    %v2835 = vrot.slane %v2707, 6
    %v2837 = vmul.f32 %v2776, %v2835
    %2839 = vrot.lane.b32.xlu0 %v2803, 64
    %v2840 = vpop.permute.xlu0 %2839
    %v2842 = vmul.f32 %v2746, %v2840
    %2844 = vrot.lane.b32.xlu0 %v2842, 32
    %v2845 = vpop.permute.xlu0 %2844
    %v2847 = vadd.f32 %v2837, %v2845
    %v2848 = vtanh.pop %v2847
    %2850 = vrot.lane.b32.xlu0 %v2848, 64
    %v2851 = vpop.permute.xlu0 %2850
    %v2853 = vmul.f32 %v2833, %v2851
    %v2855 = vrot.slane %v2853, 2
    %2856 = vrot.lane.b32.xlu0 %v2855, 32
    %v2857 = vpop.permute.xlu0 %2856
    %v2858 = vsel %vm149, %v2857, 0
    %2860 = vmatpush.msra.mxu0 0.0
    %2861 = vmatpush.msra.mxu0 0.0
    %2862 = vmatpush.msra.mxu0 0.0
    %2863 = vmatpush.msra.mxu0 0.0
    %2864 = vmatpush.msra.mxu0 0.0
    %2865 = vmatpush.msra.mxu0 0.0
    %2866 = vmatpush.msra.mxu0 0.0
    %2867 = vmatpush.msra.mxu0 0.0
    %2868 = vmatpush.msra.mxu0 0.0
    %2869 = vmatpush.msra.mxu0 0.0
    %2870 = vmatpush.msra.mxu0 0.0
    %2871 = vmatpush.msra.mxu0 0.0
    %2872 = vmatpush.msra.mxu0 %v2510
    %2873 = vmatpush.msra.mxu0 %v2509
    %2874 = vmatpush.msra.mxu0 %v2508
    %2875 = vmatpush.msra.mxu0 %v2507
    %2876 = vmatmul.f32.gmra.mxu0 %v2858
    %v2877 = vpop.f32.mrf.mxu0
    %v2878 = vadd.f32 0.0, %v2877
    %2879 = vdwg.mxu0
    %v2881 = vrot.slane %v2878, 4
    %v2883 = vadd.f32 %v2543, %v2881
    %v2884 = vmul.f32 %v2883, 0.5
    %v2885 = vtanh.pop %v2884
    %v2886 = vmul.f32 %v2885, 0.5
    %v2887 = vadd.f32 %v2886, 0.5
    %2888 = vmatpush.msra.mxu0 0.0
    %2889 = vmatpush.msra.mxu0 0.0
    %2890 = vmatpush.msra.mxu0 0.0
    %2891 = vmatpush.msra.mxu0 0.0
    %2892 = vmatpush.msra.mxu0 0.0
    %2893 = vmatpush.msra.mxu0 0.0
    %2894 = vmatpush.msra.mxu0 0.0
    %2895 = vmatpush.msra.mxu0 0.0
    %2896 = vmatpush.msra.mxu0 0.0
    %2897 = vmatpush.msra.mxu0 0.0
    %2898 = vmatpush.msra.mxu0 0.0
    %2899 = vmatpush.msra.mxu0 0.0
    %2900 = vmatpush.msra.mxu0 %v2584
    %2901 = vmatpush.msra.mxu0 %v2582
    %2902 = vmatpush.msra.mxu0 %v2580
    %2903 = vmatpush.msra.mxu0 %v2578
    %2904 = vmatmul.f32.gmra.mxu0 %v2858
    %v2905 = vpop.f32.mrf.mxu0
    %v2906 = vadd.f32 0.0, %v2905
    %2907 = vdwg.mxu0
    %v2909 = vrot.slane %v2906, 4
    %2910 = vrot.lane.b32.xlu0 %v2909, 32
    %v2911 = vpop.permute.xlu0 %2910
    %v2913 = vadd.f32 %v2543, %v2911
    %v2914 = vmul.f32 %v2913, 0.5
    %v2915 = vtanh.pop %v2914
    %v2916 = vmul.f32 %v2915, 0.5
    %v2917 = vadd.f32 %v2916, 0.5
    %2918 = vmatpush.msra.mxu0 0.0
    %2919 = vmatpush.msra.mxu0 0.0
    %2920 = vmatpush.msra.mxu0 0.0
    %2921 = vmatpush.msra.mxu0 0.0
    %2922 = vmatpush.msra.mxu0 0.0
    %2923 = vmatpush.msra.mxu0 0.0
    %2924 = vmatpush.msra.mxu0 0.0
    %2925 = vmatpush.msra.mxu0 0.0
    %2926 = vmatpush.msra.mxu0 0.0
    %2927 = vmatpush.msra.mxu0 0.0
    %2928 = vmatpush.msra.mxu0 0.0
    %2929 = vmatpush.msra.mxu0 0.0
    %2930 = vmatpush.msra.mxu0 %v2625
    %2931 = vmatpush.msra.mxu0 %v2623
    %2932 = vmatpush.msra.mxu0 %v2621
    %2933 = vmatpush.msra.mxu0 %v2619
    %2934 = vmatmul.f32.gmra.mxu0 %v2858
    %v2935 = vpop.f32.mrf.mxu0
    %v2936 = vadd.f32 0.0, %v2935
    %2937 = vdwg.mxu0
    %v2939 = vrot.slane %v2936, 4
    %2940 = vrot.lane.b32.xlu0 %v2939, 64
    %v2941 = vpop.permute.xlu0 %2940
    %v2943 = vadd.f32 %v2543, %v2941
    %v2944 = vtanh.pop %v2943
    %2945 = vmatpush.msra.mxu0 0.0
    %2946 = vmatpush.msra.mxu0 0.0
    %2947 = vmatpush.msra.mxu0 0.0
    %2948 = vmatpush.msra.mxu0 0.0
    %2949 = vmatpush.msra.mxu0 0.0
    %2950 = vmatpush.msra.mxu0 0.0
    %2951 = vmatpush.msra.mxu0 0.0
    %2952 = vmatpush.msra.mxu0 0.0
    %2953 = vmatpush.msra.mxu0 0.0
    %2954 = vmatpush.msra.mxu0 0.0
    %2955 = vmatpush.msra.mxu0 0.0
    %2956 = vmatpush.msra.mxu0 0.0
    %2957 = vmatpush.msra.mxu0 %v2663
    %2958 = vmatpush.msra.mxu0 %v2661
    %2959 = vmatpush.msra.mxu0 %v2659
    %2960 = vmatpush.msra.mxu0 %v2657
    %2961 = vmatmul.f32.gmra.mxu0 %v2858
    %v2962 = vpop.f32.mrf.mxu0
    %v2963 = vadd.f32 0.0, %v2962
    %2964 = vdwg.mxu0
    %v2966 = vrot.slane %v2963, 4
    %2967 = vrot.lane.b32.xlu0 %v2966, 96
    %v2968 = vpop.permute.xlu0 %2967
    %v2970 = vadd.f32 %v2543, %v2968
    %v2971 = vmul.f32 %v2970, 0.5
    %v2972 = vtanh.pop %v2971
    %v2973 = vmul.f32 %v2972, 0.5
    %v2974 = vadd.f32 %v2973, 0.5
    %v2976 = vrot.slane %v2847, 6
    %v2978 = vmul.f32 %v2917, %v2976
    %2980 = vrot.lane.b32.xlu0 %v2944, 64
    %v2981 = vpop.permute.xlu0 %2980
    %v2983 = vmul.f32 %v2887, %v2981
    %2985 = vrot.lane.b32.xlu0 %v2983, 32
    %v2986 = vpop.permute.xlu0 %2985
    %v2988 = vadd.f32 %v2978, %v2986
    %v2989 = vtanh.pop %v2988
    %2991 = vrot.lane.b32.xlu0 %v2989, 64
    %v2992 = vpop.permute.xlu0 %2991
    %v2994 = vmul.f32 %v2974, %v2992
    %v2996 = vrot.slane %v2994, 4
    %2997 = vrot.lane.b32.xlu0 %v2996, 32
    %v2998 = vpop.permute.xlu0 %2997
    %v2999 = vsel %vm149, %v2998, 0
    %3001 = vmatpush.msra.mxu0 0.0
    %3002 = vmatpush.msra.mxu0 0.0
    %3003 = vmatpush.msra.mxu0 0.0
    %3004 = vmatpush.msra.mxu0 0.0
    %3005 = vmatpush.msra.mxu0 0.0
    %3006 = vmatpush.msra.mxu0 0.0
    %3007 = vmatpush.msra.mxu0 0.0
    %3008 = vmatpush.msra.mxu0 0.0
    %3009 = vmatpush.msra.mxu0 0.0
    %3010 = vmatpush.msra.mxu0 0.0
    %3011 = vmatpush.msra.mxu0 0.0
    %3012 = vmatpush.msra.mxu0 0.0
    %3013 = vmatpush.msra.mxu0 %v2510
    %3014 = vmatpush.msra.mxu0 %v2509
    %3015 = vmatpush.msra.mxu0 %v2508
    %3016 = vmatpush.msra.mxu0 %v2507
    %3017 = vmatmul.f32.gmra.mxu0 %v2999
    %v3018 = vpop.f32.mrf.mxu0
    %v3019 = vadd.f32 0.0, %v3018
    %3020 = vdwg.mxu0
    %v3022 = vrot.slane %v3019, 2
    %v3024 = vadd.f32 %v2543, %v3022
    %v3025 = vmul.f32 %v3024, 0.5
    %v3026 = vtanh.pop %v3025
    %v3027 = vmul.f32 %v3026, 0.5
    %v3028 = vadd.f32 %v3027, 0.5
    %3029 = vmatpush.msra.mxu0 0.0
    %3030 = vmatpush.msra.mxu0 0.0
    %3031 = vmatpush.msra.mxu0 0.0
    %3032 = vmatpush.msra.mxu0 0.0
    %3033 = vmatpush.msra.mxu0 0.0
    %3034 = vmatpush.msra.mxu0 0.0
    %3035 = vmatpush.msra.mxu0 0.0
    %3036 = vmatpush.msra.mxu0 0.0
    %3037 = vmatpush.msra.mxu0 0.0
    %3038 = vmatpush.msra.mxu0 0.0
    %3039 = vmatpush.msra.mxu0 0.0
    %3040 = vmatpush.msra.mxu0 0.0
    %3041 = vmatpush.msra.mxu0 %v2584
    %3042 = vmatpush.msra.mxu0 %v2582
    %3043 = vmatpush.msra.mxu0 %v2580
    %3044 = vmatpush.msra.mxu0 %v2578
    %3045 = vmatmul.f32.gmra.mxu0 %v2999
    %v3046 = vpop.f32.mrf.mxu0
    %v3047 = vadd.f32 0.0, %v3046
    %3048 = vdwg.mxu0
    %v3050 = vrot.slane %v3047, 2
    %3051 = vrot.lane.b32.xlu0 %v3050, 32
    %v3052 = vpop.permute.xlu0 %3051
    %v3054 = vadd.f32 %v2543, %v3052
    %v3055 = vmul.f32 %v3054, 0.5
    %v3056 = vtanh.pop %v3055
    %v3057 = vmul.f32 %v3056, 0.5
    %v3058 = vadd.f32 %v3057, 0.5
    %3059 = vmatpush.msra.mxu0 0.0
    %3060 = vmatpush.msra.mxu0 0.0
    %3061 = vmatpush.msra.mxu0 0.0
    %3062 = vmatpush.msra.mxu0 0.0
    %3063 = vmatpush.msra.mxu0 0.0
    %3064 = vmatpush.msra.mxu0 0.0
    %3065 = vmatpush.msra.mxu0 0.0
    %3066 = vmatpush.msra.mxu0 0.0
    %3067 = vmatpush.msra.mxu0 0.0
    %3068 = vmatpush.msra.mxu0 0.0
    %3069 = vmatpush.msra.mxu0 0.0
    %3070 = vmatpush.msra.mxu0 0.0
    %3071 = vmatpush.msra.mxu0 %v2625
    %3072 = vmatpush.msra.mxu0 %v2623
    %3073 = vmatpush.msra.mxu0 %v2621
    %3074 = vmatpush.msra.mxu0 %v2619
    %3075 = vmatmul.f32.gmra.mxu0 %v2999
    %v3076 = vpop.f32.mrf.mxu0
    %v3077 = vadd.f32 0.0, %v3076
    %3078 = vdwg.mxu0
    %v3080 = vrot.slane %v3077, 2
    %3081 = vrot.lane.b32.xlu0 %v3080, 64
    %v3082 = vpop.permute.xlu0 %3081
    %v3084 = vadd.f32 %v2543, %v3082
    %v3085 = vtanh.pop %v3084
    %3086 = vmatpush.msra.mxu0 0.0
    %3087 = vmatpush.msra.mxu0 0.0
    %3088 = vmatpush.msra.mxu0 0.0
    %3089 = vmatpush.msra.mxu0 0.0
    %3090 = vmatpush.msra.mxu0 0.0
    %3091 = vmatpush.msra.mxu0 0.0
    %3092 = vmatpush.msra.mxu0 0.0
    %3093 = vmatpush.msra.mxu0 0.0
    %3094 = vmatpush.msra.mxu0 0.0
    %3095 = vmatpush.msra.mxu0 0.0
    %3096 = vmatpush.msra.mxu0 0.0
    %3097 = vmatpush.msra.mxu0 0.0
    %3098 = vmatpush.msra.mxu0 %v2663
    %3099 = vmatpush.msra.mxu0 %v2661
    %3100 = vmatpush.msra.mxu0 %v2659
    %3101 = vmatpush.msra.mxu0 %v2657
    %3102 = vmatmul.f32.gmra.mxu0 %v2999
    %v3103 = vpop.f32.mrf.mxu0
    %v3104 = vadd.f32 0.0, %v3103
    %3105 = vdwg.mxu0
    %v3107 = vrot.slane %v3104, 2
    %3108 = vrot.lane.b32.xlu0 %v3107, 96
    %v3109 = vpop.permute.xlu0 %3108
    %v3111 = vadd.f32 %v2543, %v3109
    %v3112 = vmul.f32 %v3111, 0.5
    %v3113 = vtanh.pop %v3112
    %v3114 = vmul.f32 %v3113, 0.5
    %v3115 = vadd.f32 %v3114, 0.5
    %v3117 = vrot.slane %v2988, 6
    %v3119 = vmul.f32 %v3058, %v3117
    %3121 = vrot.lane.b32.xlu0 %v3085, 64
    %v3122 = vpop.permute.xlu0 %3121
    %v3124 = vmul.f32 %v3028, %v3122
    %3126 = vrot.lane.b32.xlu0 %v3124, 32
    %v3127 = vpop.permute.xlu0 %3126
    %v3129 = vadd.f32 %v3119, %v3127
    %v3130 = vtanh.pop %v3129
    %3132 = vrot.lane.b32.xlu0 %v3130, 64
    %v3133 = vpop.permute.xlu0 %3132
    %v3135 = vmul.f32 %v3115, %v3133
    %v3137 = vrot.slane %v3135, 6
    %3138 = vrot.lane.b32.xlu0 %v3137, 32
    %v3139 = vpop.permute.xlu0 %3138
    %v3140 = vsel %vm149, %v3139, 0
    %3142 = vmatpush.msra.mxu0 0.0
    %3143 = vmatpush.msra.mxu0 0.0
    %3144 = vmatpush.msra.mxu0 0.0
    %3145 = vmatpush.msra.mxu0 0.0
    %3146 = vmatpush.msra.mxu0 0.0
    %3147 = vmatpush.msra.mxu0 0.0
    %3148 = vmatpush.msra.mxu0 0.0
    %3149 = vmatpush.msra.mxu0 0.0
    %3150 = vmatpush.msra.mxu0 0.0
    %3151 = vmatpush.msra.mxu0 0.0
    %3152 = vmatpush.msra.mxu0 0.0
    %3153 = vmatpush.msra.mxu0 0.0
    %3154 = vmatpush.msra.mxu0 %v2510
    %3155 = vmatpush.msra.mxu0 %v2509
    %3156 = vmatpush.msra.mxu0 %v2508
    %3157 = vmatpush.msra.mxu0 %v2507
    %3158 = vmatmul.f32.gmra.mxu0 %v3140
    %v3159 = vpop.f32.mrf.mxu0
    %v3160 = vadd.f32 0.0, %v3159
    %3161 = vdwg.mxu0
    %v3162 = vadd.f32 %v2546, %v3160
    %v3163 = vmul.f32 %v3162, 0.5
    %v3164 = vtanh.pop %v3163
    %v3165 = vmul.f32 %v3164, 0.5
    %v3166 = vadd.f32 %v3165, 0.5
    %3167 = vmatpush.msra.mxu0 0.0
    %3168 = vmatpush.msra.mxu0 0.0
    %3169 = vmatpush.msra.mxu0 0.0
    %3170 = vmatpush.msra.mxu0 0.0
    %3171 = vmatpush.msra.mxu0 0.0
    %3172 = vmatpush.msra.mxu0 0.0
    %3173 = vmatpush.msra.mxu0 0.0
    %3174 = vmatpush.msra.mxu0 0.0
    %3175 = vmatpush.msra.mxu0 0.0
    %3176 = vmatpush.msra.mxu0 0.0
    %3177 = vmatpush.msra.mxu0 0.0
    %3178 = vmatpush.msra.mxu0 0.0
    %3179 = vmatpush.msra.mxu0 %v2584
    %3180 = vmatpush.msra.mxu0 %v2582
    %3181 = vmatpush.msra.mxu0 %v2580
    %3182 = vmatpush.msra.mxu0 %v2578
    %3183 = vmatmul.f32.gmra.mxu0 %v3140
    %v3184 = vpop.f32.mrf.mxu0
    %v3185 = vadd.f32 0.0, %v3184
    %3186 = vdwg.mxu0
    %3188 = vrot.lane.b32.xlu0 %v3185, 32
    %v3189 = vpop.permute.xlu0 %3188
    %v3191 = vadd.f32 %v2546, %v3189
    %v3192 = vmul.f32 %v3191, 0.5
    %v3193 = vtanh.pop %v3192
    %v3194 = vmul.f32 %v3193, 0.5
    %v3195 = vadd.f32 %v3194, 0.5
    %3196 = vmatpush.msra.mxu0 0.0
    %3197 = vmatpush.msra.mxu0 0.0
    %3198 = vmatpush.msra.mxu0 0.0
    %3199 = vmatpush.msra.mxu0 0.0
    %3200 = vmatpush.msra.mxu0 0.0
    %3201 = vmatpush.msra.mxu0 0.0
    %3202 = vmatpush.msra.mxu0 0.0
    %3203 = vmatpush.msra.mxu0 0.0
    %3204 = vmatpush.msra.mxu0 0.0
    %3205 = vmatpush.msra.mxu0 0.0
    %3206 = vmatpush.msra.mxu0 0.0
    %3207 = vmatpush.msra.mxu0 0.0
    %3208 = vmatpush.msra.mxu0 %v2625
    %3209 = vmatpush.msra.mxu0 %v2623
    %3210 = vmatpush.msra.mxu0 %v2621
    %3211 = vmatpush.msra.mxu0 %v2619
    %3212 = vmatmul.f32.gmra.mxu0 %v3140
    %v3213 = vpop.f32.mrf.mxu0
    %v3214 = vadd.f32 0.0, %v3213
    %3215 = vdwg.mxu0
    %3217 = vrot.lane.b32.xlu0 %v3214, 64
    %v3218 = vpop.permute.xlu0 %3217
    %v3220 = vadd.f32 %v2546, %v3218
    %v3221 = vtanh.pop %v3220
    %3222 = vmatpush.msra.mxu0 0.0
    %3223 = vmatpush.msra.mxu0 0.0
    %3224 = vmatpush.msra.mxu0 0.0
    %3225 = vmatpush.msra.mxu0 0.0
    %3226 = vmatpush.msra.mxu0 0.0
    %3227 = vmatpush.msra.mxu0 0.0
    %3228 = vmatpush.msra.mxu0 0.0
    %3229 = vmatpush.msra.mxu0 0.0
    %3230 = vmatpush.msra.mxu0 0.0
    %3231 = vmatpush.msra.mxu0 0.0
    %3232 = vmatpush.msra.mxu0 0.0
    %3233 = vmatpush.msra.mxu0 0.0
    %3234 = vmatpush.msra.mxu0 %v2663
    %3235 = vmatpush.msra.mxu0 %v2661
    %3236 = vmatpush.msra.mxu0 %v2659
    %3237 = vmatpush.msra.mxu0 %v2657
    %3238 = vmatmul.f32.gmra.mxu0 %v3140
    %v3239 = vpop.f32.mrf.mxu0
    %v3240 = vadd.f32 0.0, %v3239
    %3241 = vdwg.mxu0
    %3243 = vrot.lane.b32.xlu0 %v3240, 96
    %v3244 = vpop.permute.xlu0 %3243
    %v3246 = vadd.f32 %v2546, %v3244
    %v3247 = vmul.f32 %v3246, 0.5
    %v3248 = vtanh.pop %v3247
    %v3249 = vmul.f32 %v3248, 0.5
    %v3250 = vadd.f32 %v3249, 0.5
    %v3252 = vrot.slane %v3129, 6
    %v3254 = vmul.f32 %v3195, %v3252
    %3256 = vrot.lane.b32.xlu0 %v3221, 64
    %v3257 = vpop.permute.xlu0 %3256
    %v3259 = vmul.f32 %v3166, %v3257
    %3261 = vrot.lane.b32.xlu0 %v3259, 32
    %v3262 = vpop.permute.xlu0 %3261
    %v3264 = vadd.f32 %v3254, %v3262
    %v3265 = vtanh.pop %v3264
    %3267 = vrot.lane.b32.xlu0 %v3265, 64
    %v3268 = vpop.permute.xlu0 %3267
    %v3270 = vmul.f32 %v3250, %v3268
    %3272 = vrot.lane.b32.xlu0 %v3270, 32
    %v3273 = vpop.permute.xlu0 %3272
    %v3274 = vsel %vm149, %v3273, 0
    %3276 = vmatpush.msra.mxu0 0.0
    %3277 = vmatpush.msra.mxu0 0.0
    %3278 = vmatpush.msra.mxu0 0.0
    %3279 = vmatpush.msra.mxu0 0.0
    %3280 = vmatpush.msra.mxu0 0.0
    %3281 = vmatpush.msra.mxu0 0.0
    %3282 = vmatpush.msra.mxu0 0.0
    %3283 = vmatpush.msra.mxu0 0.0
    %3284 = vmatpush.msra.mxu0 0.0
    %3285 = vmatpush.msra.mxu0 0.0
    %3286 = vmatpush.msra.mxu0 0.0
    %3287 = vmatpush.msra.mxu0 0.0
    %3288 = vmatpush.msra.mxu0 %v2510
    %3289 = vmatpush.msra.mxu0 %v2509
    %3290 = vmatpush.msra.mxu0 %v2508
    %3291 = vmatpush.msra.mxu0 %v2507
    %3292 = vmatmul.f32.gmra.mxu0 %v3274
    %v3293 = vpop.f32.mrf.mxu0
    %v3294 = vadd.f32 0.0, %v3293
    %3295 = vdwg.mxu0
    %v3297 = vrot.slane %v3294, 6
    %v3299 = vadd.f32 %v2546, %v3297
    %v3300 = vmul.f32 %v3299, 0.5
    %v3301 = vtanh.pop %v3300
    %v3302 = vmul.f32 %v3301, 0.5
    %v3303 = vadd.f32 %v3302, 0.5
    %3304 = vmatpush.msra.mxu0 0.0
    %3305 = vmatpush.msra.mxu0 0.0
    %3306 = vmatpush.msra.mxu0 0.0
    %3307 = vmatpush.msra.mxu0 0.0
    %3308 = vmatpush.msra.mxu0 0.0
    %3309 = vmatpush.msra.mxu0 0.0
    %3310 = vmatpush.msra.mxu0 0.0
    %3311 = vmatpush.msra.mxu0 0.0
    %3312 = vmatpush.msra.mxu0 0.0
    %3313 = vmatpush.msra.mxu0 0.0
    %3314 = vmatpush.msra.mxu0 0.0
    %3315 = vmatpush.msra.mxu0 0.0
    %3316 = vmatpush.msra.mxu0 %v2584
    %3317 = vmatpush.msra.mxu0 %v2582
    %3318 = vmatpush.msra.mxu0 %v2580
    %3319 = vmatpush.msra.mxu0 %v2578
    %3320 = vmatmul.f32.gmra.mxu0 %v3274
    %v3321 = vpop.f32.mrf.mxu0
    %v3322 = vadd.f32 0.0, %v3321
    %3323 = vdwg.mxu0
    %v3325 = vrot.slane %v3322, 6
    %3326 = vrot.lane.b32.xlu0 %v3325, 32
    %v3327 = vpop.permute.xlu0 %3326
    %v3329 = vadd.f32 %v2546, %v3327
    %v3330 = vmul.f32 %v3329, 0.5
    %v3331 = vtanh.pop %v3330
    %v3332 = vmul.f32 %v3331, 0.5
    %v3333 = vadd.f32 %v3332, 0.5
    %3334 = vmatpush.msra.mxu0 0.0
    %3335 = vmatpush.msra.mxu0 0.0
    %3336 = vmatpush.msra.mxu0 0.0
    %3337 = vmatpush.msra.mxu0 0.0
    %3338 = vmatpush.msra.mxu0 0.0
    %3339 = vmatpush.msra.mxu0 0.0
    %3340 = vmatpush.msra.mxu0 0.0
    %3341 = vmatpush.msra.mxu0 0.0
    %3342 = vmatpush.msra.mxu0 0.0
    %3343 = vmatpush.msra.mxu0 0.0
    %3344 = vmatpush.msra.mxu0 0.0
    %3345 = vmatpush.msra.mxu0 0.0
    %3346 = vmatpush.msra.mxu0 %v2625
    %3347 = vmatpush.msra.mxu0 %v2623
    %3348 = vmatpush.msra.mxu0 %v2621
    %3349 = vmatpush.msra.mxu0 %v2619
    %3350 = vmatmul.f32.gmra.mxu0 %v3274
    %v3351 = vpop.f32.mrf.mxu0
    %v3352 = vadd.f32 0.0, %v3351
    %3353 = vdwg.mxu0
    %v3355 = vrot.slane %v3352, 6
    %3356 = vrot.lane.b32.xlu0 %v3355, 64
    %v3357 = vpop.permute.xlu0 %3356
    %v3359 = vadd.f32 %v2546, %v3357
    %v3360 = vtanh.pop %v3359
    %3361 = vmatpush.msra.mxu0 0.0
    %3362 = vmatpush.msra.mxu0 0.0
    %3363 = vmatpush.msra.mxu0 0.0
    %3364 = vmatpush.msra.mxu0 0.0
    %3365 = vmatpush.msra.mxu0 0.0
    %3366 = vmatpush.msra.mxu0 0.0
    %3367 = vmatpush.msra.mxu0 0.0
    %3368 = vmatpush.msra.mxu0 0.0
    %3369 = vmatpush.msra.mxu0 0.0
    %3370 = vmatpush.msra.mxu0 0.0
    %3371 = vmatpush.msra.mxu0 0.0
    %3372 = vmatpush.msra.mxu0 0.0
    %3373 = vmatpush.msra.mxu0 %v2663
    %3374 = vmatpush.msra.mxu0 %v2661
    %3375 = vmatpush.msra.mxu0 %v2659
    %3376 = vmatpush.msra.mxu0 %v2657
    %3377 = vmatmul.f32.gmra.mxu0 %v3274
    %v3378 = vpop.f32.mrf.mxu0
    %v3379 = vadd.f32 0.0, %v3378
    %3380 = vdwg.mxu0
    %v3382 = vrot.slane %v3379, 6
    %3383 = vrot.lane.b32.xlu0 %v3382, 96
    %v3384 = vpop.permute.xlu0 %3383
    %v3386 = vadd.f32 %v2546, %v3384
    %v3387 = vmul.f32 %v3386, 0.5
    %v3388 = vtanh.pop %v3387
    %v3389 = vmul.f32 %v3388, 0.5
    %v3390 = vadd.f32 %v3389, 0.5
    %v3392 = vrot.slane %v3264, 6
    %v3394 = vmul.f32 %v3333, %v3392
    %3396 = vrot.lane.b32.xlu0 %v3360, 64
    %v3397 = vpop.permute.xlu0 %3396
    %v3399 = vmul.f32 %v3303, %v3397
    %3401 = vrot.lane.b32.xlu0 %v3399, 32
    %v3402 = vpop.permute.xlu0 %3401
    %v3404 = vadd.f32 %v3394, %v3402
    %v3405 = vtanh.pop %v3404
    %3407 = vrot.lane.b32.xlu0 %v3405, 64
    %v3408 = vpop.permute.xlu0 %3407
    %v3410 = vmul.f32 %v3390, %v3408
    %v3412 = vrot.slane %v3410, 2
    %3413 = vrot.lane.b32.xlu0 %v3412, 32
    %v3414 = vpop.permute.xlu0 %3413
    %v3415 = vsel %vm149, %v3414, 0
    %3417 = vmatpush.msra.mxu0 0.0
    %3418 = vmatpush.msra.mxu0 0.0
    %3419 = vmatpush.msra.mxu0 0.0
    %3420 = vmatpush.msra.mxu0 0.0
    %3421 = vmatpush.msra.mxu0 0.0
    %3422 = vmatpush.msra.mxu0 0.0
    %3423 = vmatpush.msra.mxu0 0.0
    %3424 = vmatpush.msra.mxu0 0.0
    %3425 = vmatpush.msra.mxu0 0.0
    %3426 = vmatpush.msra.mxu0 0.0
    %3427 = vmatpush.msra.mxu0 0.0
    %3428 = vmatpush.msra.mxu0 0.0
    %3429 = vmatpush.msra.mxu0 %v2510
    %3430 = vmatpush.msra.mxu0 %v2509
    %3431 = vmatpush.msra.mxu0 %v2508
    %3432 = vmatpush.msra.mxu0 %v2507
    %3433 = vmatmul.f32.gmra.mxu0 %v3415
    %v3434 = vpop.f32.mrf.mxu0
    %v3435 = vadd.f32 0.0, %v3434
    %3436 = vdwg.mxu0
    %v3438 = vrot.slane %v3435, 4
    %v3440 = vadd.f32 %v2546, %v3438
    %v3441 = vmul.f32 %v3440, 0.5
    %v3442 = vtanh.pop %v3441
    %v3443 = vmul.f32 %v3442, 0.5
    %v3444 = vadd.f32 %v3443, 0.5
    %3445 = vmatpush.msra.mxu0 0.0
    %3446 = vmatpush.msra.mxu0 0.0
    %3447 = vmatpush.msra.mxu0 0.0
    %3448 = vmatpush.msra.mxu0 0.0
    %3449 = vmatpush.msra.mxu0 0.0
    %3450 = vmatpush.msra.mxu0 0.0
    %3451 = vmatpush.msra.mxu0 0.0
    %3452 = vmatpush.msra.mxu0 0.0
    %3453 = vmatpush.msra.mxu0 0.0
    %3454 = vmatpush.msra.mxu0 0.0
    %3455 = vmatpush.msra.mxu0 0.0
    %3456 = vmatpush.msra.mxu0 0.0
    %3457 = vmatpush.msra.mxu0 %v2584
    %3458 = vmatpush.msra.mxu0 %v2582
    %3459 = vmatpush.msra.mxu0 %v2580
    %3460 = vmatpush.msra.mxu0 %v2578
    %3461 = vmatmul.f32.gmra.mxu0 %v3415
    %v3462 = vpop.f32.mrf.mxu0
    %v3463 = vadd.f32 0.0, %v3462
    %3464 = vdwg.mxu0
    %v3466 = vrot.slane %v3463, 4
    %3467 = vrot.lane.b32.xlu0 %v3466, 32
    %v3468 = vpop.permute.xlu0 %3467
    %v3470 = vadd.f32 %v2546, %v3468
    %v3471 = vmul.f32 %v3470, 0.5
    %v3472 = vtanh.pop %v3471
    %v3473 = vmul.f32 %v3472, 0.5
    %v3474 = vadd.f32 %v3473, 0.5
    %3475 = vmatpush.msra.mxu0 0.0
    %3476 = vmatpush.msra.mxu0 0.0
    %3477 = vmatpush.msra.mxu0 0.0
    %3478 = vmatpush.msra.mxu0 0.0
    %3479 = vmatpush.msra.mxu0 0.0
    %3480 = vmatpush.msra.mxu0 0.0
    %3481 = vmatpush.msra.mxu0 0.0
    %3482 = vmatpush.msra.mxu0 0.0
    %3483 = vmatpush.msra.mxu0 0.0
    %3484 = vmatpush.msra.mxu0 0.0
    %3485 = vmatpush.msra.mxu0 0.0
    %3486 = vmatpush.msra.mxu0 0.0
    %3487 = vmatpush.msra.mxu0 %v2625
    %3488 = vmatpush.msra.mxu0 %v2623
    %3489 = vmatpush.msra.mxu0 %v2621
    %3490 = vmatpush.msra.mxu0 %v2619
    %3491 = vmatmul.f32.gmra.mxu0 %v3415
    %v3492 = vpop.f32.mrf.mxu0
    %v3493 = vadd.f32 0.0, %v3492
    %3494 = vdwg.mxu0
    %v3496 = vrot.slane %v3493, 4
    %3497 = vrot.lane.b32.xlu0 %v3496, 64
    %v3498 = vpop.permute.xlu0 %3497
    %v3500 = vadd.f32 %v2546, %v3498
    %v3501 = vtanh.pop %v3500
    %3502 = vmatpush.msra.mxu0 0.0
    %3503 = vmatpush.msra.mxu0 0.0
    %3504 = vmatpush.msra.mxu0 0.0
    %3505 = vmatpush.msra.mxu0 0.0
    %3506 = vmatpush.msra.mxu0 0.0
    %3507 = vmatpush.msra.mxu0 0.0
    %3508 = vmatpush.msra.mxu0 0.0
    %3509 = vmatpush.msra.mxu0 0.0
    %3510 = vmatpush.msra.mxu0 0.0
    %3511 = vmatpush.msra.mxu0 0.0
    %3512 = vmatpush.msra.mxu0 0.0
    %3513 = vmatpush.msra.mxu0 0.0
    %3514 = vmatpush.msra.mxu0 %v2663
    %3515 = vmatpush.msra.mxu0 %v2661
    %3516 = vmatpush.msra.mxu0 %v2659
    %3517 = vmatpush.msra.mxu0 %v2657
    %3518 = vmatmul.f32.gmra.mxu0 %v3415
    %v3519 = vpop.f32.mrf.mxu0
    %v3520 = vadd.f32 0.0, %v3519
    %3521 = vdwg.mxu0
    %v3523 = vrot.slane %v3520, 4
    %3524 = vrot.lane.b32.xlu0 %v3523, 96
    %v3525 = vpop.permute.xlu0 %3524
    %v3527 = vadd.f32 %v2546, %v3525
    %v3528 = vmul.f32 %v3527, 0.5
    %v3529 = vtanh.pop %v3528
    %v3530 = vmul.f32 %v3529, 0.5
    %v3531 = vadd.f32 %v3530, 0.5
    %v3533 = vrot.slane %v3404, 6
    %v3535 = vmul.f32 %v3474, %v3533
    %3537 = vrot.lane.b32.xlu0 %v3501, 64
    %v3538 = vpop.permute.xlu0 %3537
    %v3540 = vmul.f32 %v3444, %v3538
    %3542 = vrot.lane.b32.xlu0 %v3540, 32
    %v3543 = vpop.permute.xlu0 %3542
    %v3545 = vadd.f32 %v3535, %v3543
    %v3546 = vtanh.pop %v3545
    %3548 = vrot.lane.b32.xlu0 %v3546, 64
    %v3549 = vpop.permute.xlu0 %3548
    %v3551 = vmul.f32 %v3531, %v3549
    %v3553 = vrot.slane %v3551, 4
    %3554 = vrot.lane.b32.xlu0 %v3553, 32
    %v3555 = vpop.permute.xlu0 %3554
    %v3556 = vsel %vm149, %v3555, 0
    %3558 = vmatpush.msra.mxu0 0.0
    %3559 = vmatpush.msra.mxu0 0.0
    %3560 = vmatpush.msra.mxu0 0.0
    %3561 = vmatpush.msra.mxu0 0.0
    %3562 = vmatpush.msra.mxu0 0.0
    %3563 = vmatpush.msra.mxu0 0.0
    %3564 = vmatpush.msra.mxu0 0.0
    %3565 = vmatpush.msra.mxu0 0.0
    %3566 = vmatpush.msra.mxu0 0.0
    %3567 = vmatpush.msra.mxu0 0.0
    %3568 = vmatpush.msra.mxu0 0.0
    %3569 = vmatpush.msra.mxu0 0.0
    %3570 = vmatpush.msra.mxu0 %v2510
    %3571 = vmatpush.msra.mxu0 %v2509
    %3572 = vmatpush.msra.mxu0 %v2508
    %3573 = vmatpush.msra.mxu0 %v2507
    %3574 = vmatmul.f32.gmra.mxu0 %v3556
    %v3575 = vpop.f32.mrf.mxu0
    %v3576 = vadd.f32 0.0, %v3575
    %3577 = vdwg.mxu0
    %v3579 = vrot.slane %v3576, 2
    %v3581 = vadd.f32 %v2546, %v3579
    %v3582 = vmul.f32 %v3581, 0.5
    %v3583 = vtanh.pop %v3582
    %v3584 = vmul.f32 %v3583, 0.5
    %v3585 = vadd.f32 %v3584, 0.5
    %3586 = vmatpush.msra.mxu0 0.0
    %3587 = vmatpush.msra.mxu0 0.0
    %3588 = vmatpush.msra.mxu0 0.0
    %3589 = vmatpush.msra.mxu0 0.0
    %3590 = vmatpush.msra.mxu0 0.0
    %3591 = vmatpush.msra.mxu0 0.0
    %3592 = vmatpush.msra.mxu0 0.0
    %3593 = vmatpush.msra.mxu0 0.0
    %3594 = vmatpush.msra.mxu0 0.0
    %3595 = vmatpush.msra.mxu0 0.0
    %3596 = vmatpush.msra.mxu0 0.0
    %3597 = vmatpush.msra.mxu0 0.0
    %3598 = vmatpush.msra.mxu0 %v2584
    %3599 = vmatpush.msra.mxu0 %v2582
    %3600 = vmatpush.msra.mxu0 %v2580
    %3601 = vmatpush.msra.mxu0 %v2578
    %3602 = vmatmul.f32.gmra.mxu0 %v3556
    %v3603 = vpop.f32.mrf.mxu0
    %v3604 = vadd.f32 0.0, %v3603
    %3605 = vdwg.mxu0
    %v3607 = vrot.slane %v3604, 2
    %3608 = vrot.lane.b32.xlu0 %v3607, 32
    %v3609 = vpop.permute.xlu0 %3608
    %v3611 = vadd.f32 %v2546, %v3609
    %v3612 = vmul.f32 %v3611, 0.5
    %v3613 = vtanh.pop %v3612
    %v3614 = vmul.f32 %v3613, 0.5
    %v3615 = vadd.f32 %v3614, 0.5
    %3616 = vmatpush.msra.mxu0 0.0
    %3617 = vmatpush.msra.mxu0 0.0
    %3618 = vmatpush.msra.mxu0 0.0
    %3619 = vmatpush.msra.mxu0 0.0
    %3620 = vmatpush.msra.mxu0 0.0
    %3621 = vmatpush.msra.mxu0 0.0
    %3622 = vmatpush.msra.mxu0 0.0
    %3623 = vmatpush.msra.mxu0 0.0
    %3624 = vmatpush.msra.mxu0 0.0
    %3625 = vmatpush.msra.mxu0 0.0
    %3626 = vmatpush.msra.mxu0 0.0
    %3627 = vmatpush.msra.mxu0 0.0
    %3628 = vmatpush.msra.mxu0 %v2625
    %3629 = vmatpush.msra.mxu0 %v2623
    %3630 = vmatpush.msra.mxu0 %v2621
    %3631 = vmatpush.msra.mxu0 %v2619
    %3632 = vmatmul.f32.gmra.mxu0 %v3556
    %v3633 = vpop.f32.mrf.mxu0
    %v3634 = vadd.f32 0.0, %v3633
    %3635 = vdwg.mxu0
    %v3637 = vrot.slane %v3634, 2
    %3638 = vrot.lane.b32.xlu0 %v3637, 64
    %v3639 = vpop.permute.xlu0 %3638
    %v3641 = vadd.f32 %v2546, %v3639
    %v3642 = vtanh.pop %v3641
    %3643 = vmatpush.msra.mxu0 0.0
    %3644 = vmatpush.msra.mxu0 0.0
    %3645 = vmatpush.msra.mxu0 0.0
    %3646 = vmatpush.msra.mxu0 0.0
    %3647 = vmatpush.msra.mxu0 0.0
    %3648 = vmatpush.msra.mxu0 0.0
    %3649 = vmatpush.msra.mxu0 0.0
    %3650 = vmatpush.msra.mxu0 0.0
    %3651 = vmatpush.msra.mxu0 0.0
    %3652 = vmatpush.msra.mxu0 0.0
    %3653 = vmatpush.msra.mxu0 0.0
    %3654 = vmatpush.msra.mxu0 0.0
    %3655 = vmatpush.msra.mxu0 %v2663
    %3656 = vmatpush.msra.mxu0 %v2661
    %3657 = vmatpush.msra.mxu0 %v2659
    %3658 = vmatpush.msra.mxu0 %v2657
    %3659 = vmatmul.f32.gmra.mxu0 %v3556
    %v3660 = vpop.f32.mrf.mxu0
    %v3661 = vadd.f32 0.0, %v3660
    %3662 = vdwg.mxu0
    %v3664 = vrot.slane %v3661, 2
    %3665 = vrot.lane.b32.xlu0 %v3664, 96
    %v3666 = vpop.permute.xlu0 %3665
    %v3668 = vadd.f32 %v2546, %v3666
    %v3669 = vmul.f32 %v3668, 0.5
    %v3670 = vtanh.pop %v3669
    %v3671 = vmul.f32 %v3670, 0.5
    %v3672 = vadd.f32 %v3671, 0.5
    %v3674 = vrot.slane %v3545, 6
    %v3676 = vmul.f32 %v3615, %v3674
    %3678 = vrot.lane.b32.xlu0 %v3642, 64
    %v3679 = vpop.permute.xlu0 %3678
    %v3681 = vmul.f32 %v3585, %v3679
    %3683 = vrot.lane.b32.xlu0 %v3681, 32
    %v3684 = vpop.permute.xlu0 %3683
    %v3686 = vadd.f32 %v3676, %v3684
    %v3687 = vtanh.pop %v3686
    %3689 = vrot.lane.b32.xlu0 %v3687, 64
    %v3690 = vpop.permute.xlu0 %3689
    %v3692 = vmul.f32 %v3672, %v3690
    %v3693 = vld [vmem:[%s10] sm:$0xff]
    %v3694 = vld [vmem:[%s10 + $0x8] sm:$0xff]
    %v3695 = vld [vmem:[%s10 + $0x10] sm:$0xff]
    %v3696 = vld [vmem:[%s10 + $0x18] sm:$0xff]
    %v3697 = vld [vmem:[#allocation2] sm:$0x1]
    %v3699 = vperm.slane %v3697, 0
    %v3702 = vrot.slane %v3692, 6
    %3703 = vrot.lane.b32.xlu0 %v3702, 32
    %v3704 = vpop.permute.xlu0 %3703
    %v3705 = vsel %vm149, %v3704, 0
    %3707 = vmatpush.msra.mxu0 0.0
    %3708 = vmatpush.msra.mxu0 0.0
    %3709 = vmatpush.msra.mxu0 0.0
    %3710 = vmatpush.msra.mxu0 0.0
    %3711 = vmatpush.msra.mxu0 0.0
    %3712 = vmatpush.msra.mxu0 0.0
    %3713 = vmatpush.msra.mxu0 0.0
    %3714 = vmatpush.msra.mxu0 0.0
    %3715 = vmatpush.msra.mxu0 0.0
    %3716 = vmatpush.msra.mxu0 0.0
    %3717 = vmatpush.msra.mxu0 0.0
    %3718 = vmatpush.msra.mxu0 0.0
    %3719 = vmatpush.msra.mxu0 %v3696
    %3720 = vmatpush.msra.mxu0 %v3695
    %3721 = vmatpush.msra.mxu0 %v3694
    %3722 = vmatpush.msra.mxu0 %v3693
    %3723 = vmatmul.f32.gmra.mxu0 %v3705
    %v3724 = vpop.f32.mrf.mxu0
    %v3725 = vadd.f32 %v3699, %v3724
    %3726 = vdwg.mxu0
    %vm3727 = vcmask 1024
    %3728 = vst.msk [vmem:[%s12] sm:$0x3] %vm3727, %v3725
    // Predicated region
    $region70: #{stock_lstm_forward.1} parent=1 // pred_check
      _
    $region71: #{stock_lstm_forward.1} parent=1 // pred_check_branch
      %3730 = sbr.rel (0) target = $region73
    $region72: #{stock_lstm_forward.1} parent=1 // pred_region
      _
    $region73: #{stock_lstm_forward.1} parent=1 // pred_fallthru
      _
    // Predicated region
    $region74: #{stock_lstm_forward.1} parent=1 // pred_check
      _
    $region75: #{stock_lstm_forward.1} parent=1 // pred_check_branch
      %3732 = sbr.rel (0) target = $region77
    $region76: #{stock_lstm_forward.1} parent=1 // pred_region
      _
    $region77: #{stock_lstm_forward.1} parent=1 // pred_fallthru
      _
    %3733 = vsyncpa [#allocation4], 1
    %3734 = vsyncpa [#allocation6], 1
    %3735 = vsyncpa [#allocation9], 1

</llo_original>
